<compile_context>
chip_gen: v7x
topology: tpu7x:2x2x1
jax: 0.10.0
libtpu: 0.0.40
codegen_flags: <defaults>
</compile_context>

<pallas_src>
import jax
import jax.numpy as jnp
from jax.experimental import pallas as pl
from jax.experimental.pallas import tpu as pltpu

N_UNITS = 32
N_CLASSES = 4
D_FF = 2048                  # nn.TransformerEncoderLayer default dim_feedforward
SEQ_LEN = 310                # input length -> conv stack -> 64 * 76 = 4864 (Linear(4864,.))
CONV_T = 76                  # composed-conv output length: (310 - 10)//4 + 1
N_CH = 64
N_FLAT = N_CH * CONV_T       # 4864
K_TAPS = 10                  # composed kernel size
K_PAD = 16                   # taps padded to 16 (zero weight rows 10..15)
L_PAD = 320                  # input length zero-padded so every patch read is in-bounds
BATCH_BLOCK = 8              # batch rows per grid step
LN_EPS = 1e-5
BN_EPS = 1e-5
LEAKY_SLOPE = 0.01           # PyTorch nn.LeakyReLU() default


# ----------------------------------------------------------------------------
# Stage 1: composed Conv1d(1->64, k=10, s=4) + bias + LeakyReLU
#          (one (rows,16)@(16,64) matmul on im2col patches)
# ----------------------------------------------------------------------------
def conv_stage_kernel(p_ref, wc_ref, bc_ref, o_ref):
    y = jnp.dot(p_ref[...], wc_ref[...], preferred_element_type=jnp.float32)
    y = y + bc_ref[...]
    o_ref[...] = jnp.where(y >= 0.0, y, LEAKY_SLOPE * y)


# ----------------------------------------------------------------------------
# Stage 2: Flatten + Linear(4864,32) [BN folded] + TransformerEncoderLayer
#          (seq_len == 1) + final classifier Linear(32,4)
# ----------------------------------------------------------------------------
def _layer_norm(x, g, b):
    # single reduction pass: sum and sum-of-squares together
    inv_n = 1.0 / x.shape[-1]
    s = jnp.sum(x, axis=-1, keepdims=True)
    ss = jnp.sum(x * x, axis=-1, keepdims=True)
    mu = s * inv_n
    var = ss * inv_n - mu * mu
    return (x - mu) * jax.lax.rsqrt(var + LN_EPS) * g + b


def head_kernel(act_ref, fc1w_ref, fc1b_ref, watt_ref, batt_ref,
                ln1g_ref, ln1b_ref, ff1w_ref, ff1b_ref,
                ff2w_ref, ff2b_ref, ln2g_ref, ln2b_ref,
                fcw_ref, fcb_ref, o_ref):
    f32 = jnp.float32
    bf16 = jnp.bfloat16

    # Flatten + Linear(4864, 32); eval BatchNorm1d is pre-folded into fc1.
    act = act_ref[...].astype(bf16)                                    # (BB, 4864)
    h0 = jnp.dot(act, fc1w_ref[...], preferred_element_type=f32) + fc1b_ref[...]
    # TODO(synk): nn.Dropout(0.2) after BN is identity in eval mode; omitted.

    # TransformerEncoderLayer(d_model=32, nhead=2), post-norm, relu, eval mode.
    # seq_len == 1: softmax over a single key == 1 and the head concat == V, so
    # self-attention collapses to the precomputed 32x32 map Wv.T @ Wo.T + bias.
    sa = jnp.dot(h0, watt_ref[...], preferred_element_type=f32) + batt_ref[...]
    h = _layer_norm(h0 + sa, ln1g_ref[...], ln1b_ref[...])

    ff = jnp.dot(h.astype(bf16), ff1w_ref[...], preferred_element_type=f32) + ff1b_ref[...]
    ff = jnp.maximum(ff, 0.0)
    ff = jnp.dot(ff.astype(bf16), ff2w_ref[...], preferred_element_type=f32) + ff2b_ref[...]
    y = _layer_norm(h + ff, ln2g_ref[...], ln2b_ref[...])

    # final fc (args.lstm == False branch)
    o_ref[...] = jnp.dot(y, fcw_ref[...], preferred_element_type=f32) + fcb_ref[...]


# ----------------------------------------------------------------------------
# Wrapper: two pallas_calls with a batch-block grid; every weight uses a
# constant index_map so it is loaded once and stays VMEM-resident.
# ----------------------------------------------------------------------------
def ccmtl_forward(x, p):
    """x: (B, 1, 310) float32 -- PyTorch NCW layout, single input channel."""
    b = x.shape[0]
    bp = pl.cdiv(b, BATCH_BLOCK) * BATCH_BLOCK
    xs = x.reshape(b, -1)
    xs = jnp.pad(xs, ((0, bp - b), (0, L_PAD - xs.shape[1])))           # (bp, 320)

    # im2col for the composed conv (10 real taps padded to 16, stride 4).
    # Pure layout plumbing on ~19 KB, kept in the wrapper so both Pallas stages
    # see lane-dense 2-D operands (tap rows 10..15 hit zero weight rows).
    idx = 4 * jnp.arange(CONV_T)[:, None] + jnp.arange(K_PAD)[None, :]  # (76, 16)
    patches = xs[:, idx].reshape(bp * CONV_T, K_PAD)                    # (bp*76, 16)

    rows_blk = BATCH_BLOCK * CONV_T
    grid = (bp // BATCH_BLOCK,)
    parallel = pltpu.CompilerParams(dimension_semantics=("parallel",))

    act = pl.pallas_call(
        conv_stage_kernel,
        out_shape=jax.ShapeDtypeStruct((bp * CONV_T, N_CH), jnp.float32),
        grid=grid,
        in_specs=[
            pl.BlockSpec((rows_blk, K_PAD), lambda i: (i, 0)),          # patches
            pl.BlockSpec((K_PAD, N_CH), lambda i: (0, 0)),              # wc (resident)
            pl.BlockSpec((1, N_CH), lambda i: (0, 0)),                  # composed bias
        ],
        out_specs=pl.BlockSpec((rows_blk, N_CH), lambda i: (i, 0)),
        compiler_params=parallel,
    )(patches, p["wc"], p["conv_bias"])

    # Flatten: free row-major view change.  Row b becomes the t-major flatten
    # (t*64+c); fc1 rows were permuted to the same order at init.
    act_flat = act.reshape(bp, N_FLAT)

    out = pl.pallas_call(
        head_kernel,
        out_shape=jax.ShapeDtypeStruct((bp, N_CLASSES), jnp.float32),
        grid=grid,
        in_specs=[
            pl.BlockSpec((BATCH_BLOCK, N_FLAT), lambda i: (i, 0)),      # activations
            pl.BlockSpec((N_FLAT, N_UNITS), lambda i: (0, 0)),          # fc1_w (BN folded)
            pl.BlockSpec((1, N_UNITS), lambda i: (0, 0)),               # fc1_b
            pl.BlockSpec((N_UNITS, N_UNITS), lambda i: (0, 0)),         # w_att
            pl.BlockSpec((1, N_UNITS), lambda i: (0, 0)),               # b_att
            pl.BlockSpec((1, N_UNITS), lambda i: (0, 0)),               # ln1_g
            pl.BlockSpec((1, N_UNITS), lambda i: (0, 0)),               # ln1_b
            pl.BlockSpec((N_UNITS, D_FF), lambda i: (0, 0)),            # ff1_w
            pl.BlockSpec((1, D_FF), lambda i: (0, 0)),                  # ff1_b
            pl.BlockSpec((D_FF, N_UNITS), lambda i: (0, 0)),            # ff2_w
            pl.BlockSpec((1, N_UNITS), lambda i: (0, 0)),               # ff2_b
            pl.BlockSpec((1, N_UNITS), lambda i: (0, 0)),               # ln2_g
            pl.BlockSpec((1, N_UNITS), lambda i: (0, 0)),               # ln2_b
            pl.BlockSpec((N_UNITS, N_CLASSES), lambda i: (0, 0)),       # fc_w
            pl.BlockSpec((1, N_CLASSES), lambda i: (0, 0)),             # fc_b
        ],
        out_specs=pl.BlockSpec((BATCH_BLOCK, N_CLASSES), lambda i: (i, 0)),
        compiler_params=parallel,
    )(act_flat, p["fc1_w"], p["fc1_b"], p["w_att"], p["b_att"],
      p["ln1_g"], p["ln1_b"], p["ff1_w"], p["ff1_b"],
      p["ff2_w"], p["ff2_b"], p["ln2_g"], p["ln2_b"],
      p["fc_w"], p["fc_b"])
    return out[:b]


# ----------------------------------------------------------------------------
# Deterministic parameters in PyTorch shapes, then folded for the kernels:
# conv composition, fc1 row permutation, BN fold, seq_len==1 attention fold,
# bf16 cast of the large matmul weights.
# ----------------------------------------------------------------------------
def init_params(key):
    ks = jax.random.split(key, 20)
    s = 0.05
    f32 = jnp.float32
    bf16 = jnp.bfloat16

    conv1_w = (jax.random.normal(ks[0], (64, 1, 4)) * s).astype(f32)
    conv1_b = (jax.random.normal(ks[1], (64,)) * s).astype(f32)
    conv2_w = (jax.random.normal(ks[2], (64, 64, 4)) * s).astype(f32)
    conv2_b = (jax.random.normal(ks[3], (64,)) * s).astype(f32)
    bn_g = (1.0 + 0.1 * jax.random.normal(ks[4], (64,))).astype(f32)
    bn_b = (0.1 * jax.random.normal(ks[5], (64,))).astype(f32)
    bn_mean = (0.1 * jax.random.normal(ks[6], (64,))).astype(f32)
    bn_var = jax.random.uniform(ks[7], (64,), minval=0.5, maxval=1.5).astype(f32)
    fc1_w = (jax.random.normal(ks[8], (N_UNITS, N_FLAT)) * 0.01).astype(f32)
    fc1_b = (jax.random.normal(ks[9], (N_UNITS,)) * s).astype(f32)
    in_proj_w = (jax.random.normal(ks[10], (3 * N_UNITS, N_UNITS)) * s).astype(f32)
    in_proj_b = (jax.random.normal(ks[11], (3 * N_UNITS,)) * s).astype(f32)
    out_proj_w = (jax.random.normal(ks[12], (N_UNITS, N_UNITS)) * s).astype(f32)
    out_proj_b = (jax.random.normal(ks[13], (N_UNITS,)) * s).astype(f32)
    lin1_w = (jax.random.normal(ks[14], (D_FF, N_UNITS)) * s).astype(f32)
    lin1_b = (jax.random.normal(ks[15], (D_FF,)) * s).astype(f32)
    lin2_w = (jax.random.normal(ks[16], (N_UNITS, D_FF)) * s).astype(f32)
    lin2_b = (jax.random.normal(ks[17], (N_UNITS,)) * s).astype(f32)
    ln1_g = jnp.ones((N_UNITS,), f32)
    ln1_b = jnp.zeros((N_UNITS,), f32)
    ln2_g = jnp.ones((N_UNITS,), f32)
    ln2_b = jnp.zeros((N_UNITS,), f32)
    fc_w = (jax.random.normal(ks[18], (N_CLASSES, N_UNITS)) * s).astype(f32)
    fc_b = (jax.random.normal(ks[19], (N_CLASSES,)) * s).astype(f32)

    # --- compose conv1 (k4,s2) with conv2 (k4,s2) -> Conv1d(1->64, k=10, s=4) ---
    w1r = conv1_w[:, 0, :]                                   # (64a, 4)
    wc = jnp.zeros((K_PAD, N_CH), f32)                       # [tap, out_ch]; rows 10..15 stay 0
    for j2 in range(4):
        for j1 in range(4):
            wc = wc.at[2 * j2 + j1, :].add(conv2_w[:, :, j2] @ w1r[:, j1])
    bc = conv2_b + conv2_w.sum(axis=2) @ conv1_b             # (64,)

    # --- fc1: permute rows from torch channel-major flat order (c*76+t) to the
    #     t-major order (t*64+c) produced by the conv stage, then fold eval BN
    #     (module order is Conv -> LeakyReLU -> BN -> Dropout -> Flatten -> Linear,
    #      so BN folds legally into the Linear). ---------------------------------
    fc1_perm = fc1_w.reshape(N_UNITS, N_CH, CONV_T).transpose(2, 1, 0).reshape(N_FLAT, N_UNITS)
    a_ch = bn_g * jax.lax.rsqrt(bn_var + BN_EPS)             # per-channel scale
    b_ch = bn_b - bn_mean * a_ch                             # per-channel shift
    scale_flat = jnp.tile(a_ch, CONV_T)                      # index t*64+c -> a_ch[c]
    shift_flat = jnp.tile(b_ch, CONV_T)
    fc1_b_fold = fc1_b + shift_flat @ fc1_perm               # (32,)
    fc1_w_fold = (scale_flat[:, None] * fc1_perm).astype(bf16)

    # --- fold seq_len==1 self-attention: out = x @ (Wv.T Wo.T) + (bv Wo.T + bo) --
    wv = in_proj_w[2 * N_UNITS:3 * N_UNITS]                  # value projection
    bv = in_proj_b[2 * N_UNITS:3 * N_UNITS]
    w_att = (wv.T @ out_proj_w.T).astype(f32)                # (32, 32)
    b_att = bv @ out_proj_w.T + out_proj_b

    def row(v):
        return v.reshape(1, -1).astype(f32)

    return {
        "wc": wc, "conv_bias": row(bc),
        "fc1_w": fc1_w_fold, "fc1_b": row(fc1_b_fold),
        "w_att": w_att, "b_att": row(b_att),
        "ln1_g": row(ln1_g), "ln1_b": row(ln1_b),
        "ff1_w": lin1_w.T.astype(bf16), "ff1_b": row(lin1_b),
        "ff2_w": lin2_w.T.astype(bf16), "ff2_b": row(lin2_b),
        "ln2_g": row(ln2_g), "ln2_b": row(ln2_b),
        "fc_w": fc_w.T.astype(f32), "fc_b": row(fc_b),
    }
    # TODO(synk): Modulator (args.modulator=False) and the sLSTM branch
    # (args.lstm=False) are dead code in this forward and are not implemented.


if __name__ == "__main__":
    key = jax.random.PRNGKey(0)
    k_x, k_p = jax.random.split(key)
    x = jax.random.normal(k_x, (2, 1, SEQ_LEN), dtype=jnp.float32)   # (B, C_in=1, L=310)
    params = init_params(k_p)

    fwd = jax.jit(ccmtl_forward)
    out = jax.block_until_ready(fwd(x, params))
    assert out.shape == (2, N_CLASSES), out.shape
    assert bool(jnp.all(jnp.isfinite(out))), "non-finite output"
    print("KERNEL_OK")
</pallas_src>

<mosaic_0001>
module attributes {stable_mosaic.version = 11 : i64} {
  func.func @conv_stage_kernel(%arg0: i32, %arg1: memref<608x16xf32, #tpu.memory_space<vmem>>, %arg2: memref<16x64xf32, #tpu.memory_space<vmem>>, %arg3: memref<1x64xf32, #tpu.memory_space<vmem>>, %arg4: memref<608x64xf32, #tpu.memory_space<vmem>>) attributes {dimension_semantics = [#tpu.dimension_semantics<parallel>], iteration_bounds = array<i64: 1>, scalar_prefetch = 0 : i64, scratch_operands = 0 : i64, tpu.core_type = #tpu.core_type<tc>, window_params = [{transform_indices = @transform_0, window_bounds = array<i64: 608, 16>}, {pipeline_mode = #tpu.pipeline_mode<synchronous>, transform_indices = @transform_1, window_bounds = array<i64: 16, 64>}, {pipeline_mode = #tpu.pipeline_mode<synchronous>, transform_indices = @transform_2, window_bounds = array<i64: 1, 64>}, {transform_indices = @transform_3, window_bounds = array<i64: 608, 64>}]} {
    %c0 = arith.constant 0 : index
    %c0_0 = arith.constant 0 : index
    %0 = vector.load %arg1[%c0, %c0_0] : memref<608x16xf32, #tpu.memory_space<vmem>>, vector<608x16xf32>
    %c0_1 = arith.constant 0 : index
    %c0_2 = arith.constant 0 : index
    %1 = vector.load %arg2[%c0_1, %c0_2] : memref<16x64xf32, #tpu.memory_space<vmem>>, vector<16x64xf32>
    %cst = arith.constant dense<0.000000e+00> : vector<608x64xf32>
    %2 = tpu.matmul %0, %1, %cst {dimension_numbers = #tpu.dot_dimension_numbers<[1], [0], [0], [1], [0, 0, 1, 1], [], []>} : vector<608x16xf32>, vector<16x64xf32>, vector<608x64xf32> -> vector<608x64xf32>
    %c0_3 = arith.constant 0 : index
    %c0_4 = arith.constant 0 : index
    %3 = vector.load %arg3[%c0_3, %c0_4] : memref<1x64xf32, #tpu.memory_space<vmem>>, vector<1x64xf32>
    %4 = vector.broadcast %3 : vector<1x64xf32> to vector<608x64xf32>
    %5 = arith.addf %2, %4 : vector<608x64xf32>
    %cst_5 = arith.constant 0.000000e+00 : f32
    %6 = vector.broadcast %cst_5 : f32 to vector<608x64xf32>
    %7 = arith.cmpf oge, %5, %6 : vector<608x64xf32>
    %cst_6 = arith.constant 0.00999999977 : f32
    %8 = vector.broadcast %cst_6 : f32 to vector<608x64xf32>
    %9 = arith.mulf %8, %5 : vector<608x64xf32>
    %10 = arith.select %7, %5, %9 : vector<608x64xi1>, vector<608x64xf32>
    %c0_7 = arith.constant 0 : index
    %c0_8 = arith.constant 0 : index
    %11 = vector.load %arg4[%c0_7, %c0_8] : memref<608x64xf32, #tpu.memory_space<vmem>>, vector<608x64xf32>
    tpu.vector_store %arg4[%c0_7, %c0_8], %10 {strides = array<i32>} : memref<608x64xf32, #tpu.memory_space<vmem>>, vector<608x64xf32>,
    return
  }
  func.func @transform_0(%arg0: i32) -> (i32, i32) {
    %c0_i32 = arith.constant 0 : i32
    %c0_i32_0 = arith.constant 0 : i32
    return %arg0, %c0_i32 : i32, i32
  }
  func.func @transform_1(%arg0: i32) -> (i32, i32) {
    %c0_i32 = arith.constant 0 : i32
    %c0_i32_0 = arith.constant 0 : i32
    %c0_i32_1 = arith.constant 0 : i32
    return %c0_i32, %c0_i32_0 : i32, i32
  }
  func.func @transform_2(%arg0: i32) -> (i32, i32) {
    %c0_i32 = arith.constant 0 : i32
    %c0_i32_0 = arith.constant 0 : i32
    %c0_i32_1 = arith.constant 0 : i32
    return %c0_i32, %c0_i32_0 : i32, i32
  }
  func.func @transform_3(%arg0: i32) -> (i32, i32) {
    %c0_i32 = arith.constant 0 : i32
    %c0_i32_0 = arith.constant 0 : i32
    return %arg0, %c0_i32 : i32, i32
  }
}

module attributes {stable_mosaic.version = 11 : i64} {
  func.func @head_kernel(%arg0: i32, %arg1: memref<8x4864xf32, #tpu.memory_space<vmem>>, %arg2: memref<4864x32xbf16, #tpu.memory_space<vmem>>, %arg3: memref<1x32xf32, #tpu.memory_space<vmem>>, %arg4: memref<32x32xf32, #tpu.memory_space<vmem>>, %arg5: memref<1x32xf32, #tpu.memory_space<vmem>>, %arg6: memref<1x32xf32, #tpu.memory_space<vmem>>, %arg7: memref<1x32xf32, #tpu.memory_space<vmem>>, %arg8: memref<32x2048xbf16, #tpu.memory_space<vmem>>, %arg9: memref<1x2048xf32, #tpu.memory_space<vmem>>, %arg10: memref<2048x32xbf16, #tpu.memory_space<vmem>>, %arg11: memref<1x32xf32, #tpu.memory_space<vmem>>, %arg12: memref<1x32xf32, #tpu.memory_space<vmem>>, %arg13: memref<1x32xf32, #tpu.memory_space<vmem>>, %arg14: memref<32x4xf32, #tpu.memory_space<vmem>>, %arg15: memref<1x4xf32, #tpu.memory_space<vmem>>, %arg16: memref<8x4xf32, #tpu.memory_space<vmem>>) attributes {dimension_semantics = [#tpu.dimension_semantics<parallel>], iteration_bounds = array<i64: 1>, scalar_prefetch = 0 : i64, scratch_operands = 0 : i64, tpu.core_type = #tpu.core_type<tc>, window_params = [{transform_indices = @transform_0, window_bounds = array<i64: 8, 4864>}, {pipeline_mode = #tpu.pipeline_mode<synchronous>, transform_indices = @transform_1, window_bounds = array<i64: 4864, 32>}, {pipeline_mode = #tpu.pipeline_mode<synchronous>, transform_indices = @transform_2, window_bounds = array<i64: 1, 32>}, {pipeline_mode = #tpu.pipeline_mode<synchronous>, transform_indices = @transform_3, window_bounds = array<i64: 32, 32>}, {pipeline_mode = #tpu.pipeline_mode<synchronous>, transform_indices = @transform_4, window_bounds = array<i64: 1, 32>}, {pipeline_mode = #tpu.pipeline_mode<synchronous>, transform_indices = @transform_5, window_bounds = array<i64: 1, 32>}, {pipeline_mode = #tpu.pipeline_mode<synchronous>, transform_indices = @transform_6, window_bounds = array<i64: 1, 32>}, {pipeline_mode = #tpu.pipeline_mode<synchronous>, transform_indices = @transform_7, window_bounds = array<i64: 32, 2048>}, {pipeline_mode = #tpu.pipeline_mode<synchronous>, transform_indices = @transform_8, window_bounds = array<i64: 1, 2048>}, {pipeline_mode = #tpu.pipeline_mode<synchronous>, transform_indices = @transform_9, window_bounds = array<i64: 2048, 32>}, {pipeline_mode = #tpu.pipeline_mode<synchronous>, transform_indices = @transform_10, window_bounds = array<i64: 1, 32>}, {pipeline_mode = #tpu.pipeline_mode<synchronous>, transform_indices = @transform_11, window_bounds = array<i64: 1, 32>}, {pipeline_mode = #tpu.pipeline_mode<synchronous>, transform_indices = @transform_12, window_bounds = array<i64: 1, 32>}, {pipeline_mode = #tpu.pipeline_mode<synchronous>, transform_indices = @transform_13, window_bounds = array<i64: 32, 4>}, {pipeline_mode = #tpu.pipeline_mode<synchronous>, transform_indices = @transform_14, window_bounds = array<i64: 1, 4>}, {transform_indices = @transform_15, window_bounds = array<i64: 8, 4>}]} {
    %c0 = arith.constant 0 : index
    %c0_0 = arith.constant 0 : index
    %0 = vector.load %arg1[%c0, %c0_0] : memref<8x4864xf32, #tpu.memory_space<vmem>>, vector<8x4864xf32>
    %1 = arith.truncf %0 : vector<8x4864xf32> to vector<8x4864xbf16>
    %c0_1 = arith.constant 0 : index
    %c0_2 = arith.constant 0 : index
    %2 = vector.load %arg2[%c0_1, %c0_2] : memref<4864x32xbf16, #tpu.memory_space<vmem>>, vector<4864x32xbf16>
    %cst = arith.constant dense<0.000000e+00> : vector<8x32xf32>
    %3 = tpu.matmul %1, %2, %cst {dimension_numbers = #tpu.dot_dimension_numbers<[1], [0], [0], [1], [0, 0, 1, 1], [], []>} : vector<8x4864xbf16>, vector<4864x32xbf16>, vector<8x32xf32> -> vector<8x32xf32>
    %c0_3 = arith.constant 0 : index
    %c0_4 = arith.constant 0 : index
    %4 = vector.load %arg3[%c0_3, %c0_4] : memref<1x32xf32, #tpu.memory_space<vmem>>, vector<1x32xf32>
    %5 = vector.broadcast %4 : vector<1x32xf32> to vector<8x32xf32>
    %6 = arith.addf %3, %5 : vector<8x32xf32>
    %c0_5 = arith.constant 0 : index
    %c0_6 = arith.constant 0 : index
    %7 = vector.load %arg4[%c0_5, %c0_6] : memref<32x32xf32, #tpu.memory_space<vmem>>, vector<32x32xf32>
    %cst_7 = arith.constant dense<0.000000e+00> : vector<8x32xf32>
    %8 = tpu.matmul %6, %7, %cst_7 {dimension_numbers = #tpu.dot_dimension_numbers<[1], [0], [0], [1], [0, 0, 1, 1], [], []>} : vector<8x32xf32>, vector<32x32xf32>, vector<8x32xf32> -> vector<8x32xf32>
    %c0_8 = arith.constant 0 : index
    %c0_9 = arith.constant 0 : index
    %9 = vector.load %arg5[%c0_8, %c0_9] : memref<1x32xf32, #tpu.memory_space<vmem>>, vector<1x32xf32>
    %10 = vector.broadcast %9 : vector<1x32xf32> to vector<8x32xf32>
    %11 = arith.addf %8, %10 : vector<8x32xf32>
    %12 = arith.addf %6, %11 : vector<8x32xf32>
    %c0_10 = arith.constant 0 : index
    %c0_11 = arith.constant 0 : index
    %13 = vector.load %arg6[%c0_10, %c0_11] : memref<1x32xf32, #tpu.memory_space<vmem>>, vector<1x32xf32>
    %c0_12 = arith.constant 0 : index
    %c0_13 = arith.constant 0 : index
    %14 = vector.load %arg7[%c0_12, %c0_13] : memref<1x32xf32, #tpu.memory_space<vmem>>, vector<1x32xf32>
    %cst_14 = arith.constant dense<0.000000e+00> : vector<8xf32>
    %15 = vector.multi_reduction <add>, %12, %cst_14 [1] : vector<8x32xf32> to vector<8xf32>
    %16 = vector.shape_cast %15 : vector<8xf32> to vector<8x1xf32>
    %17 = arith.mulf %12, %12 : vector<8x32xf32>
    %cst_15 = arith.constant dense<0.000000e+00> : vector<8xf32>
    %18 = vector.multi_reduction <add>, %17, %cst_15 [1] : vector<8x32xf32> to vector<8xf32>
    %19 = vector.shape_cast %18 : vector<8xf32> to vector<8x1xf32>
    %cst_16 = arith.constant 3.125000e-02 : f32
    %20 = vector.broadcast %cst_16 : f32 to vector<8x1xf32>
    %21 = arith.mulf %16, %20 : vector<8x1xf32>
    %cst_17 = arith.constant 3.125000e-02 : f32
    %22 = vector.broadcast %cst_17 : f32 to vector<8x1xf32>
    %23 = arith.mulf %19, %22 : vector<8x1xf32>
    %24 = arith.mulf %21, %21 : vector<8x1xf32>
    %25 = arith.subf %23, %24 : vector<8x1xf32>
    %26 = vector.broadcast %21 : vector<8x1xf32> to vector<8x32xf32>
    %27 = arith.subf %12, %26 : vector<8x32xf32>
    %cst_18 = arith.constant 9.99999974E-6 : f32
    %28 = vector.broadcast %cst_18 : f32 to vector<8x1xf32>
    %29 = arith.addf %25, %28 : vector<8x1xf32>
    %30 = math.rsqrt %29 : vector<8x1xf32>
    %31 = vector.broadcast %30 : vector<8x1xf32> to vector<8x32xf32>
    %32 = arith.mulf %27, %31 : vector<8x32xf32>
    %33 = vector.broadcast %13 : vector<1x32xf32> to vector<8x32xf32>
    %34 = arith.mulf %32, %33 : vector<8x32xf32>
    %35 = vector.broadcast %14 : vector<1x32xf32> to vector<8x32xf32>
    %36 = arith.addf %34, %35 : vector<8x32xf32>
    %37 = arith.truncf %36 : vector<8x32xf32> to vector<8x32xbf16>
    %c0_19 = arith.constant 0 : index
    %c0_20 = arith.constant 0 : index
    %38 = vector.load %arg8[%c0_19, %c0_20] : memref<32x2048xbf16, #tpu.memory_space<vmem>>, vector<32x2048xbf16>
    %cst_21 = arith.constant dense<0.000000e+00> : vector<8x2048xf32>
    %39 = tpu.matmul %37, %38, %cst_21 {dimension_numbers = #tpu.dot_dimension_numbers<[1], [0], [0], [1], [0, 0, 1, 1], [], []>} : vector<8x32xbf16>, vector<32x2048xbf16>, vector<8x2048xf32> -> vector<8x2048xf32>
    %c0_22 = arith.constant 0 : index
    %c0_23 = arith.constant 0 : index
    %40 = vector.load %arg9[%c0_22, %c0_23] : memref<1x2048xf32, #tpu.memory_space<vmem>>, vector<1x2048xf32>
    %41 = vector.broadcast %40 : vector<1x2048xf32> to vector<8x2048xf32>
    %42 = arith.addf %39, %41 : vector<8x2048xf32>
    %cst_24 = arith.constant 0.000000e+00 : f32
    %43 = vector.broadcast %cst_24 : f32 to vector<8x2048xf32>
    %44 = arith.maximumf %42, %43 : vector<8x2048xf32>
    %45 = arith.truncf %44 : vector<8x2048xf32> to vector<8x2048xbf16>
    %c0_25 = arith.constant 0 : index
    %c0_26 = arith.constant 0 : index
    %46 = vector.load %arg10[%c0_25, %c0_26] : memref<2048x32xbf16, #tpu.memory_space<vmem>>, vector<2048x32xbf16>
    %cst_27 = arith.constant dense<0.000000e+00> : vector<8x32xf32>
    %47 = tpu.matmul %45, %46, %cst_27 {dimension_numbers = #tpu.dot_dimension_numbers<[1], [0], [0], [1], [0, 0, 1, 1], [], []>} : vector<8x2048xbf16>, vector<2048x32xbf16>, vector<8x32xf32> -> vector<8x32xf32>
    %c0_28 = arith.constant 0 : index
    %c0_29 = arith.constant 0 : index
    %48 = vector.load %arg11[%c0_28, %c0_29] : memref<1x32xf32, #tpu.memory_space<vmem>>, vector<1x32xf32>
    %49 = vector.broadcast %48 : vector<1x32xf32> to vector<8x32xf32>
    %50 = arith.addf %47, %49 : vector<8x32xf32>
    %51 = arith.addf %36, %50 : vector<8x32xf32>
    %c0_30 = arith.constant 0 : index
    %c0_31 = arith.constant 0 : index
    %52 = vector.load %arg12[%c0_30, %c0_31] : memref<1x32xf32, #tpu.memory_space<vmem>>, vector<1x32xf32>
    %c0_32 = arith.constant 0 : index
    %c0_33 = arith.constant 0 : index
    %53 = vector.load %arg13[%c0_32, %c0_33] : memref<1x32xf32, #tpu.memory_space<vmem>>, vector<1x32xf32>
    %cst_34 = arith.constant dense<0.000000e+00> : vector<8xf32>
    %54 = vector.multi_reduction <add>, %51, %cst_34 [1] : vector<8x32xf32> to vector<8xf32>
    %55 = vector.shape_cast %54 : vector<8xf32> to vector<8x1xf32>
    %56 = arith.mulf %51, %51 : vector<8x32xf32>
    %cst_35 = arith.constant dense<0.000000e+00> : vector<8xf32>
    %57 = vector.multi_reduction <add>, %56, %cst_35 [1] : vector<8x32xf32> to vector<8xf32>
    %58 = vector.shape_cast %57 : vector<8xf32> to vector<8x1xf32>
    %cst_36 = arith.constant 3.125000e-02 : f32
    %59 = vector.broadcast %cst_36 : f32 to vector<8x1xf32>
    %60 = arith.mulf %55, %59 : vector<8x1xf32>
    %cst_37 = arith.constant 3.125000e-02 : f32
    %61 = vector.broadcast %cst_37 : f32 to vector<8x1xf32>
    %62 = arith.mulf %58, %61 : vector<8x1xf32>
    %63 = arith.mulf %60, %60 : vector<8x1xf32>
    %64 = arith.subf %62, %63 : vector<8x1xf32>
    %65 = vector.broadcast %60 : vector<8x1xf32> to vector<8x32xf32>
    %66 = arith.subf %51, %65 : vector<8x32xf32>
    %cst_38 = arith.constant 9.99999974E-6 : f32
    %67 = vector.broadcast %cst_38 : f32 to vector<8x1xf32>
    %68 = arith.addf %64, %67 : vector<8x1xf32>
    %69 = math.rsqrt %68 : vector<8x1xf32>
    %70 = vector.broadcast %69 : vector<8x1xf32> to vector<8x32xf32>
    %71 = arith.mulf %66, %70 : vector<8x32xf32>
    %72 = vector.broadcast %52 : vector<1x32xf32> to vector<8x32xf32>
    %73 = arith.mulf %71, %72 : vector<8x32xf32>
    %74 = vector.broadcast %53 : vector<1x32xf32> to vector<8x32xf32>
    %75 = arith.addf %73, %74 : vector<8x32xf32>
    %c0_39 = arith.constant 0 : index
    %c0_40 = arith.constant 0 : index
    %76 = vector.load %arg14[%c0_39, %c0_40] : memref<32x4xf32, #tpu.memory_space<vmem>>, vector<32x4xf32>
    %cst_41 = arith.constant dense<0.000000e+00> : vector<8x4xf32>
    %77 = tpu.matmul %75, %76, %cst_41 {dimension_numbers = #tpu.dot_dimension_numbers<[1], [0], [0], [1], [0, 0, 1, 1], [], []>} : vector<8x32xf32>, vector<32x4xf32>, vector<8x4xf32> -> vector<8x4xf32>
    %c0_42 = arith.constant 0 : index
    %c0_43 = arith.constant 0 : index
    %78 = vector.load %arg15[%c0_42, %c0_43] : memref<1x4xf32, #tpu.memory_space<vmem>>, vector<1x4xf32>
    %79 = vector.broadcast %78 : vector<1x4xf32> to vector<8x4xf32>
    %80 = arith.addf %77, %79 : vector<8x4xf32>
    %c0_44 = arith.constant 0 : index
    %c0_45 = arith.constant 0 : index
    %81 = vector.load %arg16[%c0_44, %c0_45] : memref<8x4xf32, #tpu.memory_space<vmem>>, vector<8x4xf32>
    tpu.vector_store %arg16[%c0_44, %c0_45], %80 {strides = array<i32>} : memref<8x4xf32, #tpu.memory_space<vmem>>, vector<8x4xf32>,
    return
  }
  func.func @transform_0(%arg0: i32) -> (i32, i32) {
    %c0_i32 = arith.constant 0 : i32
    %c0_i32_0 = arith.constant 0 : i32
    return %arg0, %c0_i32 : i32, i32
  }
  func.func @transform_1(%arg0: i32) -> (i32, i32) {
    %c0_i32 = arith.constant 0 : i32
    %c0_i32_0 = arith.constant 0 : i32
    %c0_i32_1 = arith.constant 0 : i32
    return %c0_i32, %c0_i32_0 : i32, i32
  }
  func.func @transform_2(%arg0: i32) -> (i32, i32) {
    %c0_i32 = arith.constant 0 : i32
    %c0_i32_0 = arith.constant 0 : i32
    %c0_i32_1 = arith.constant 0 : i32
    return %c0_i32, %c0_i32_0 : i32, i32
  }
  func.func @transform_3(%arg0: i32) -> (i32, i32) {
    %c0_i32 = arith.constant 0 : i32
    %c0_i32_0 = arith.constant 0 : i32
    %c0_i32_1 = arith.constant 0 : i32
    return %c0_i32, %c0_i32_0 : i32, i32
  }
  func.func @transform_4(%arg0: i32) -> (i32, i32) {
    %c0_i32 = arith.constant 0 : i32
    %c0_i32_0 = arith.constant 0 : i32
    %c0_i32_1 = arith.constant 0 : i32
    return %c0_i32, %c0_i32_0 : i32, i32
  }
  func.func @transform_5(%arg0: i32) -> (i32, i32) {
    %c0_i32 = arith.constant 0 : i32
    %c0_i32_0 = arith.constant 0 : i32
    %c0_i32_1 = arith.constant 0 : i32
    return %c0_i32, %c0_i32_0 : i32, i32
  }
  func.func @transform_6(%arg0: i32) -> (i32, i32) {
    %c0_i32 = arith.constant 0 : i32
    %c0_i32_0 = arith.constant 0 : i32
    %c0_i32_1 = arith.constant 0 : i32
    return %c0_i32, %c0_i32_0 : i32, i32
  }
  func.func @transform_7(%arg0: i32) -> (i32, i32) {
    %c0_i32 = arith.constant 0 : i32
    %c0_i32_0 = arith.constant 0 : i32
    %c0_i32_1 = arith.constant 0 : i32
    return %c0_i32, %c0_i32_0 : i32, i32
  }
  func.func @transform_8(%arg0: i32) -> (i32, i32) {
    %c0_i32 = arith.constant 0 : i32
    %c0_i32_0 = arith.constant 0 : i32
    %c0_i32_1 = arith.constant 0 : i32
    return %c0_i32, %c0_i32_0 : i32, i32
  }
  func.func @transform_9(%arg0: i32) -> (i32, i32) {
    %c0_i32 = arith.constant 0 : i32
    %c0_i32_0 = arith.constant 0 : i32
    %c0_i32_1 = arith.constant 0 : i32
    return %c0_i32, %c0_i32_0 : i32, i32
  }
  func.func @transform_10(%arg0: i32) -> (i32, i32) {
    %c0_i32 = arith.constant 0 : i32
    %c0_i32_0 = arith.constant 0 : i32
    %c0_i32_1 = arith.constant 0 : i32
    return %c0_i32, %c0_i32_0 : i32, i32
  }
  func.func @transform_11(%arg0: i32) -> (i32, i32) {
    %c0_i32 = arith.constant 0 : i32
    %c0_i32_0 = arith.constant 0 : i32
    %c0_i32_1 = arith.constant 0 : i32
    return %c0_i32, %c0_i32_0 : i32, i32
  }
  func.func @transform_12(%arg0: i32) -> (i32, i32) {
    %c0_i32 = arith.constant 0 : i32
    %c0_i32_0 = arith.constant 0 : i32
    %c0_i32_1 = arith.constant 0 : i32
    return %c0_i32, %c0_i32_0 : i32, i32
  }
  func.func @transform_13(%arg0: i32) -> (i32, i32) {
    %c0_i32 = arith.constant 0 : i32
    %c0_i32_0 = arith.constant 0 : i32
    %c0_i32_1 = arith.constant 0 : i32
    return %c0_i32, %c0_i32_0 : i32, i32
  }
  func.func @transform_14(%arg0: i32) -> (i32, i32) {
    %c0_i32 = arith.constant 0 : i32
    %c0_i32_0 = arith.constant 0 : i32
    %c0_i32_1 = arith.constant 0 : i32
    return %c0_i32, %c0_i32_0 : i32, i32
  }
  func.func @transform_15(%arg0: i32) -> (i32, i32) {
    %c0_i32 = arith.constant 0 : i32
    %c0_i32_0 = arith.constant 0 : i32
    return %arg0, %c0_i32 : i32, i32
  }
}

</mosaic_0001>

<llo_original>
// kernel: ccmtl_forward.2
$region0: #{ccmtl_forward.2}
  #allocation0 [shape = 'u32[]', space=smem, size = 0x4, offset = 0x4, fixed_abs, tag = 'smem constant byte address 0x4 - core index']
  #allocation1 [shape = 'u32[144,128]{1,0:T(1,128)}', space=vmem, size = 0x12000, scoped, tag = 'internal scratch']
  %s0 = inlined_call_operand.vmem [shape: f32[608,16], index: 0, kind: input, shape index: {}]
  %s1 = inlined_call_operand.vmem [shape: f32[16,64], index: 1, kind: input, shape index: {}]
  %s2 = inlined_call_operand.vmem [shape: f32[1,64], index: 2, kind: input, shape index: {}]
  %s3 = inlined_call_operand.vmem [shape: f32[608,64], index: 3, kind: output, shape index: {}]
  %s4 = sld [smem:[#allocation0]]
  $region22: #{ccmtl_forward.2} parent=0
    _
  %s6 = ssub.s32 1, %s4
  %s7 = scalar_select 0, %s6, %s4
  // Predicated region
  $region2: #{ccmtl_forward.2} parent=0 // pred_check
    _
  $region3: #{ccmtl_forward.2} parent=0 // pred_check_branch
    %9 = sbr.rel (0) target = $region5
  $region4: #{ccmtl_forward.2} parent=0 // pred_region
    _
  $region5: #{ccmtl_forward.2} parent=0 // pred_fallthru
    _
  // Predicated region
  $region6: #{ccmtl_forward.2} parent=0 // pred_check
    _
  $region7: #{ccmtl_forward.2} parent=0 // pred_check_branch
    %11 = sbr.rel (0) target = $region9
  $region8: #{ccmtl_forward.2} parent=0 // pred_region
    _
  $region9: #{ccmtl_forward.2} parent=0 // pred_fallthru
    _
  // Predicated region
  $region10: #{ccmtl_forward.2} parent=0 // pred_check
    _
  $region11: #{ccmtl_forward.2} parent=0 // pred_check_branch
    %13 = sbr.rel (0) target = $region13
  $region12: #{ccmtl_forward.2} parent=0 // pred_region
    _
  $region13: #{ccmtl_forward.2} parent=0 // pred_fallthru
    _
  %v14 = vld [vmem:[%s0] sm:$0xff]
  %v15 = vld [vmem:[%s0 + $0x8] sm:$0xff]
  %v16 = vld [vmem:[%s0 + $0x10] sm:$0xff]
  %v17 = vld [vmem:[%s0 + $0x18] sm:$0xff]
  %v18 = vld [vmem:[%s0 + $0x20] sm:$0xff]
  %v19 = vld [vmem:[%s0 + $0x28] sm:$0xff]
  %v20 = vld [vmem:[%s0 + $0x30] sm:$0xff]
  %v21 = vld [vmem:[%s0 + $0x38] sm:$0xff]
  %v22 = vld [vmem:[%s0 + $0x40] sm:$0xff]
  %v23 = vld [vmem:[%s0 + $0x48] sm:$0xff]
  %v24 = vld [vmem:[%s0 + $0x50] sm:$0xff]
  %v25 = vld [vmem:[%s0 + $0x58] sm:$0xff]
  %v26 = vld [vmem:[%s0 + $0x60] sm:$0xff]
  %v27 = vld [vmem:[%s0 + $0x68] sm:$0xff]
  %v28 = vld [vmem:[%s0 + $0x70] sm:$0xff]
  %v29 = vld [vmem:[%s0 + $0x78] sm:$0xff]
  %v30 = vld [vmem:[%s0 + $0x80] sm:$0xff]
  %v31 = vld [vmem:[%s0 + $0x88] sm:$0xff]
  %v32 = vld [vmem:[%s0 + $0x90] sm:$0xff]
  %v33 = vld [vmem:[%s0 + $0x98] sm:$0xff]
  %v34 = vld [vmem:[%s0 + $0xa0] sm:$0xff]
  %v35 = vld [vmem:[%s0 + $0xa8] sm:$0xff]
  %v36 = vld [vmem:[%s0 + $0xb0] sm:$0xff]
  %v37 = vld [vmem:[%s0 + $0xb8] sm:$0xff]
  %v38 = vld [vmem:[%s0 + $0xc0] sm:$0xff]
  %v39 = vld [vmem:[%s0 + $0xc8] sm:$0xff]
  %v40 = vld [vmem:[%s0 + $0xd0] sm:$0xff]
  %v41 = vld [vmem:[%s0 + $0xd8] sm:$0xff]
  %v42 = vld [vmem:[%s0 + $0xe0] sm:$0xff]
  %v43 = vld [vmem:[%s0 + $0xe8] sm:$0xff]
  %v44 = vld [vmem:[%s0 + $0xf0] sm:$0xff]
  %v45 = vld [vmem:[%s0 + $0xf8] sm:$0xff]
  %v46 = vld [vmem:[%s0 + $0x100] sm:$0xff]
  %v47 = vld [vmem:[%s0 + $0x108] sm:$0xff]
  %v48 = vld [vmem:[%s0 + $0x110] sm:$0xff]
  %v49 = vld [vmem:[%s0 + $0x118] sm:$0xff]
  %v50 = vld [vmem:[%s0 + $0x120] sm:$0xff]
  %v51 = vld [vmem:[%s0 + $0x128] sm:$0xff]
  %v52 = vld [vmem:[%s0 + $0x130] sm:$0xff]
  %v53 = vld [vmem:[%s0 + $0x138] sm:$0xff]
  %v54 = vld [vmem:[%s0 + $0x140] sm:$0xff]
  %v55 = vld [vmem:[%s0 + $0x148] sm:$0xff]
  %v56 = vld [vmem:[%s0 + $0x150] sm:$0xff]
  %v57 = vld [vmem:[%s0 + $0x158] sm:$0xff]
  %v58 = vld [vmem:[%s0 + $0x160] sm:$0xff]
  %v59 = vld [vmem:[%s0 + $0x168] sm:$0xff]
  %v60 = vld [vmem:[%s0 + $0x170] sm:$0xff]
  %v61 = vld [vmem:[%s0 + $0x178] sm:$0xff]
  %v62 = vld [vmem:[%s0 + $0x180] sm:$0xff]
  %v63 = vld [vmem:[%s0 + $0x188] sm:$0xff]
  %v64 = vld [vmem:[%s0 + $0x190] sm:$0xff]
  %v65 = vld [vmem:[%s0 + $0x198] sm:$0xff]
  %v66 = vld [vmem:[%s0 + $0x1a0] sm:$0xff]
  %v67 = vld [vmem:[%s0 + $0x1a8] sm:$0xff]
  %v68 = vld [vmem:[%s0 + $0x1b0] sm:$0xff]
  %v69 = vld [vmem:[%s0 + $0x1b8] sm:$0xff]
  %v70 = vld [vmem:[%s0 + $0x1c0] sm:$0xff]
  %v71 = vld [vmem:[%s0 + $0x1c8] sm:$0xff]
  %v72 = vld [vmem:[%s0 + $0x1d0] sm:$0xff]
  %v73 = vld [vmem:[%s0 + $0x1d8] sm:$0xff]
  %v74 = vld [vmem:[%s0 + $0x1e0] sm:$0xff]
  %v75 = vld [vmem:[%s0 + $0x1e8] sm:$0xff]
  %v76 = vld [vmem:[%s0 + $0x1f0] sm:$0xff]
  %v77 = vld [vmem:[%s0 + $0x1f8] sm:$0xff]
  %v78 = vld [vmem:[%s0 + $0x200] sm:$0xff]
  %v79 = vld [vmem:[%s0 + $0x208] sm:$0xff]
  %v80 = vld [vmem:[%s0 + $0x210] sm:$0xff]
  %v81 = vld [vmem:[%s0 + $0x218] sm:$0xff]
  %v82 = vld [vmem:[%s0 + $0x220] sm:$0xff]
  %v83 = vld [vmem:[%s0 + $0x228] sm:$0xff]
  %v84 = vld [vmem:[%s0 + $0x230] sm:$0xff]
  %v85 = vld [vmem:[%s0 + $0x238] sm:$0xff]
  %v86 = vld [vmem:[%s0 + $0x240] sm:$0xff]
  %v87 = vld [vmem:[%s0 + $0x248] sm:$0xff]
  %v88 = vld [vmem:[%s0 + $0x250] sm:$0xff]
  %v89 = vld [vmem:[%s0 + $0x258] sm:$0xff]
  %v90 = vld [vmem:[%s1] sm:$0xff]
  %v91 = vld [vmem:[%s1 + $0x8] sm:$0xff]
  %v92 = vld [vmem:[%s2] sm:$0x1]
  %v94 = vlaneseq
  %v95 = vshrl.u32 %v94, 7
  %v96 = vsub.s32 0, %v95
  %v97 = vrot.slane %v92, %v96
  %vm99 = vcmask 130048
  %v101 = vsel %vm99, %v14, 0
  %v104 = vsel %vm99, %v15, 0
  %v107 = vsel %vm99, %v16, 0
  %v110 = vsel %vm99, %v17, 0
  %v113 = vsel %vm99, %v18, 0
  %v116 = vsel %vm99, %v19, 0
  %v119 = vsel %vm99, %v20, 0
  %v122 = vsel %vm99, %v21, 0
  %v125 = vsel %vm99, %v22, 0
  %v128 = vsel %vm99, %v23, 0
  %v131 = vsel %vm99, %v24, 0
  %v134 = vsel %vm99, %v25, 0
  %v137 = vsel %vm99, %v26, 0
  %v140 = vsel %vm99, %v27, 0
  %v143 = vsel %vm99, %v28, 0
  %v146 = vsel %vm99, %v29, 0
  %v149 = vsel %vm99, %v30, 0
  %v152 = vsel %vm99, %v31, 0
  %v155 = vsel %vm99, %v32, 0
  %v158 = vsel %vm99, %v33, 0
  %v161 = vsel %vm99, %v34, 0
  %v164 = vsel %vm99, %v35, 0
  %v167 = vsel %vm99, %v36, 0
  %v170 = vsel %vm99, %v37, 0
  %v173 = vsel %vm99, %v38, 0
  %v176 = vsel %vm99, %v39, 0
  %v179 = vsel %vm99, %v40, 0
  %v182 = vsel %vm99, %v41, 0
  %v185 = vsel %vm99, %v42, 0
  %v188 = vsel %vm99, %v43, 0
  %v191 = vsel %vm99, %v44, 0
  %v194 = vsel %vm99, %v45, 0
  %v197 = vsel %vm99, %v46, 0
  %v200 = vsel %vm99, %v47, 0
  %v203 = vsel %vm99, %v48, 0
  %v206 = vsel %vm99, %v49, 0
  %v209 = vsel %vm99, %v50, 0
  %v212 = vsel %vm99, %v51, 0
  %v215 = vsel %vm99, %v52, 0
  %v218 = vsel %vm99, %v53, 0
  %v221 = vsel %vm99, %v54, 0
  %v224 = vsel %vm99, %v55, 0
  %v227 = vsel %vm99, %v56, 0
  %v230 = vsel %vm99, %v57, 0
  %v233 = vsel %vm99, %v58, 0
  %v236 = vsel %vm99, %v59, 0
  %v239 = vsel %vm99, %v60, 0
  %v242 = vsel %vm99, %v61, 0
  %v245 = vsel %vm99, %v62, 0
  %v248 = vsel %vm99, %v63, 0
  %v251 = vsel %vm99, %v64, 0
  %v254 = vsel %vm99, %v65, 0
  %v257 = vsel %vm99, %v66, 0
  %v260 = vsel %vm99, %v67, 0
  %v263 = vsel %vm99, %v68, 0
  %v266 = vsel %vm99, %v69, 0
  %v269 = vsel %vm99, %v70, 0
  %v272 = vsel %vm99, %v71, 0
  %v275 = vsel %vm99, %v72, 0
  %v278 = vsel %vm99, %v73, 0
  %v281 = vsel %vm99, %v74, 0
  %v284 = vsel %vm99, %v75, 0
  %v287 = vsel %vm99, %v76, 0
  %v290 = vsel %vm99, %v77, 0
  %v293 = vsel %vm99, %v78, 0
  %v296 = vsel %vm99, %v79, 0
  %v299 = vsel %vm99, %v80, 0
  %v302 = vsel %vm99, %v81, 0
  %v305 = vsel %vm99, %v82, 0
  %v308 = vsel %vm99, %v83, 0
  %v311 = vsel %vm99, %v84, 0
  %v314 = vsel %vm99, %v85, 0
  %v317 = vsel %vm99, %v86, 0
  %v320 = vsel %vm99, %v87, 0
  %v323 = vsel %vm99, %v88, 0
  %v326 = vsel %vm99, %v89, 0
  %328 = vmatprep.subr.mxu0 0.0
  %329 = vmatpush1.msra.mxu0 %v90
  %330 = vmatprep.subr.mxu0 0.0
  %331 = vmatpush1.msra.mxu0 %v91
  %332 = vmatprep.subr.mxu0 0.0
  %333 = vmatpush1.msra.mxu0 0.0
  %334 = vmatprep.subr.mxu0 0.0
  %335 = vmatpush1.msra.mxu0 0.0
  %336 = vmatprep.subr.mxu0 0.0
  %337 = vmatpush1.msra.mxu0 0.0
  %338 = vmatprep.subr.mxu0 0.0
  %339 = vmatpush1.msra.mxu0 0.0
  %340 = vmatprep.subr.mxu0 0.0
  %341 = vmatpush1.msra.mxu0 0.0
  %342 = vmatprep.subr.mxu0 0.0
  %343 = vmatpush1.msra.mxu0 0.0
  %344 = vmatprep.subr.mxu0 0.0
  %345 = vmatpush1.msra.mxu0 0.0
  %346 = vmatprep.subr.mxu0 0.0
  %347 = vmatpush1.msra.mxu0 0.0
  %348 = vmatprep.subr.mxu0 0.0
  %349 = vmatpush1.msra.mxu0 0.0
  %350 = vmatprep.subr.mxu0 0.0
  %351 = vmatpush1.msra.mxu0 0.0
  %352 = vmatprep.subr.mxu0 0.0
  %353 = vmatpush1.msra.mxu0 0.0
  %354 = vmatprep.subr.mxu0 0.0
  %355 = vmatpush1.msra.mxu0 0.0
  %356 = vmatprep.subr.mxu0 0.0
  %357 = vmatpush1.msra.mxu0 0.0
  %358 = vmatprep.subr.mxu0 0.0
  %359 = vmatpush1.msra.mxu0 0.0
  %360 = vmatprep.subr.mxu0 0.0
  %361 = vmatpush1.msra.mxu0 0.0
  %362 = vmatprep.subr.mxu0 0.0
  %363 = vmatpush1.msra.mxu0 0.0
  %364 = vmatprep.subr.mxu0 0.0
  %365 = vmatpush1.msra.mxu0 0.0
  %366 = vmatprep.subr.mxu0 0.0
  %367 = vmatpush1.msra.mxu0 0.0
  %368 = vmatprep.subr.mxu0 0.0
  %369 = vmatpush1.msra.mxu0 0.0
  %370 = vmatprep.subr.mxu0 0.0
  %371 = vmatpush1.msra.mxu0 0.0
  %372 = vmatprep.subr.mxu0 0.0
  %373 = vmatpush1.msra.mxu0 0.0
  %374 = vmatprep.subr.mxu0 0.0
  %375 = vmatpush1.msra.mxu0 0.0
  %376 = vmatprep.subr.mxu0 0.0
  %377 = vmatpush1.msra.mxu0 0.0
  %378 = vmatprep.subr.mxu0 0.0
  %379 = vmatpush1.msra.mxu0 0.0
  %380 = vmatprep.subr.mxu0 0.0
  %381 = vmatpush1.msra.mxu0 0.0
  %382 = vmatprep.subr.mxu0 0.0
  %383 = vmatpush1.msra.mxu0 0.0
  %384 = vmatprep.subr.mxu0 0.0
  %385 = vmatpush1.msra.mxu0 0.0
  %386 = vmatprep.subr.mxu0 0.0
  %387 = vmatpush1.msra.mxu0 0.0
  %388 = vmatprep.subr.mxu0 0.0
  %389 = vmatpush1.msra.mxu0 0.0
  %390 = vmatprep.subr.mxu0 0.0
  %391 = vmatpush1.msra.mxu0 0.0
  %392 = vmatprep.mubr.f32.mxu0 0.0
  %393 = vmatmul.mubr.f32.gmra.mrb[0].mxu0 %v101
  %v394 = vpop.f32.mrb[0].mxu0
  %v395 = vadd.f32 %v97, %v394
  %v396 = vpop.f32.mrb[0].mxu0
  %397 = vmatprep.mubr.f32.mxu0 0.0
  %398 = vmatmul.mubr.f32.gmra.mrb[0].mxu0 %v104
  %v399 = vpop.f32.mrb[0].mxu0
  %v400 = vadd.f32 %v97, %v399
  %v401 = vpop.f32.mrb[0].mxu0
  %402 = vmatprep.mubr.f32.mxu0 0.0
  %403 = vmatmul.mubr.f32.gmra.mrb[0].mxu0 %v107
  %v404 = vpop.f32.mrb[0].mxu0
  %v405 = vadd.f32 %v97, %v404
  %v406 = vpop.f32.mrb[0].mxu0
  %407 = vmatprep.mubr.f32.mxu0 0.0
  %408 = vmatmul.mubr.f32.gmra.mrb[0].mxu0 %v110
  %v409 = vpop.f32.mrb[0].mxu0
  %v410 = vadd.f32 %v97, %v409
  %v411 = vpop.f32.mrb[0].mxu0
  %412 = vmatprep.mubr.f32.mxu0 0.0
  %413 = vmatmul.mubr.f32.gmra.mrb[0].mxu0 %v113
  %v414 = vpop.f32.mrb[0].mxu0
  %v415 = vadd.f32 %v97, %v414
  %v416 = vpop.f32.mrb[0].mxu0
  %417 = vmatprep.mubr.f32.mxu0 0.0
  %418 = vmatmul.mubr.f32.gmra.mrb[0].mxu0 %v116
  %v419 = vpop.f32.mrb[0].mxu0
  %v420 = vadd.f32 %v97, %v419
  %v421 = vpop.f32.mrb[0].mxu0
  %422 = vmatprep.mubr.f32.mxu0 0.0
  %423 = vmatmul.mubr.f32.gmra.mrb[0].mxu0 %v119
  %v424 = vpop.f32.mrb[0].mxu0
  %v425 = vadd.f32 %v97, %v424
  %v426 = vpop.f32.mrb[0].mxu0
  %427 = vmatprep.mubr.f32.mxu0 0.0
  %428 = vmatmul.mubr.f32.gmra.mrb[0].mxu0 %v122
  %v429 = vpop.f32.mrb[0].mxu0
  %v430 = vadd.f32 %v97, %v429
  %v431 = vpop.f32.mrb[0].mxu0
  %432 = vmatprep.mubr.f32.mxu0 0.0
  %433 = vmatmul.mubr.f32.gmra.mrb[0].mxu0 %v125
  %v434 = vpop.f32.mrb[0].mxu0
  %v435 = vadd.f32 %v97, %v434
  %v436 = vpop.f32.mrb[0].mxu0
  %437 = vmatprep.mubr.f32.mxu0 0.0
  %438 = vmatmul.mubr.f32.gmra.mrb[0].mxu0 %v128
  %v439 = vpop.f32.mrb[0].mxu0
  %v440 = vadd.f32 %v97, %v439
  %v441 = vpop.f32.mrb[0].mxu0
  %442 = vmatprep.mubr.f32.mxu0 0.0
  %443 = vmatmul.mubr.f32.gmra.mrb[0].mxu0 %v131
  %v444 = vpop.f32.mrb[0].mxu0
  %v445 = vadd.f32 %v97, %v444
  %v446 = vpop.f32.mrb[0].mxu0
  %447 = vmatprep.mubr.f32.mxu0 0.0
  %448 = vmatmul.mubr.f32.gmra.mrb[0].mxu0 %v134
  %v449 = vpop.f32.mrb[0].mxu0
  %v450 = vadd.f32 %v97, %v449
  %v451 = vpop.f32.mrb[0].mxu0
  %452 = vmatprep.mubr.f32.mxu0 0.0
  %453 = vmatmul.mubr.f32.gmra.mrb[0].mxu0 %v137
  %v454 = vpop.f32.mrb[0].mxu0
  %v455 = vadd.f32 %v97, %v454
  %v456 = vpop.f32.mrb[0].mxu0
  %457 = vmatprep.mubr.f32.mxu0 0.0
  %458 = vmatmul.mubr.f32.gmra.mrb[0].mxu0 %v140
  %v459 = vpop.f32.mrb[0].mxu0
  %v460 = vadd.f32 %v97, %v459
  %v461 = vpop.f32.mrb[0].mxu0
  %462 = vmatprep.mubr.f32.mxu0 0.0
  %463 = vmatmul.mubr.f32.gmra.mrb[0].mxu0 %v143
  %v464 = vpop.f32.mrb[0].mxu0
  %v465 = vadd.f32 %v97, %v464
  %v466 = vpop.f32.mrb[0].mxu0
  %467 = vmatprep.mubr.f32.mxu0 0.0
  %468 = vmatmul.mubr.f32.gmra.mrb[0].mxu0 %v146
  %v469 = vpop.f32.mrb[0].mxu0
  %v470 = vadd.f32 %v97, %v469
  %v471 = vpop.f32.mrb[0].mxu0
  %472 = vmatprep.mubr.f32.mxu0 0.0
  %473 = vmatmul.mubr.f32.gmra.mrb[0].mxu0 %v149
  %v474 = vpop.f32.mrb[0].mxu0
  %v475 = vadd.f32 %v97, %v474
  %v476 = vpop.f32.mrb[0].mxu0
  %477 = vmatprep.mubr.f32.mxu0 0.0
  %478 = vmatmul.mubr.f32.gmra.mrb[0].mxu0 %v152
  %v479 = vpop.f32.mrb[0].mxu0
  %v480 = vadd.f32 %v97, %v479
  %v481 = vpop.f32.mrb[0].mxu0
  %482 = vmatprep.mubr.f32.mxu0 0.0
  %483 = vmatmul.mubr.f32.gmra.mrb[0].mxu0 %v155
  %v484 = vpop.f32.mrb[0].mxu0
  %v485 = vadd.f32 %v97, %v484
  %v486 = vpop.f32.mrb[0].mxu0
  %487 = vmatprep.mubr.f32.mxu0 0.0
  %488 = vmatmul.mubr.f32.gmra.mrb[0].mxu0 %v158
  %v489 = vpop.f32.mrb[0].mxu0
  %v490 = vadd.f32 %v97, %v489
  %v491 = vpop.f32.mrb[0].mxu0
  %492 = vmatprep.mubr.f32.mxu0 0.0
  %493 = vmatmul.mubr.f32.gmra.mrb[0].mxu0 %v161
  %v494 = vpop.f32.mrb[0].mxu0
  %v495 = vadd.f32 %v97, %v494
  %v496 = vpop.f32.mrb[0].mxu0
  %497 = vmatprep.mubr.f32.mxu0 0.0
  %498 = vmatmul.mubr.f32.gmra.mrb[0].mxu0 %v164
  %v499 = vpop.f32.mrb[0].mxu0
  %v500 = vadd.f32 %v97, %v499
  %v501 = vpop.f32.mrb[0].mxu0
  %502 = vmatprep.mubr.f32.mxu0 0.0
  %503 = vmatmul.mubr.f32.gmra.mrb[0].mxu0 %v167
  %v504 = vpop.f32.mrb[0].mxu0
  %v505 = vadd.f32 %v97, %v504
  %v506 = vpop.f32.mrb[0].mxu0
  %507 = vmatprep.mubr.f32.mxu0 0.0
  %508 = vmatmul.mubr.f32.gmra.mrb[0].mxu0 %v170
  %v509 = vpop.f32.mrb[0].mxu0
  %v510 = vadd.f32 %v97, %v509
  %v511 = vpop.f32.mrb[0].mxu0
  %512 = vmatprep.mubr.f32.mxu0 0.0
  %513 = vmatmul.mubr.f32.gmra.mrb[0].mxu0 %v173
  %v514 = vpop.f32.mrb[0].mxu0
  %v515 = vadd.f32 %v97, %v514
  %v516 = vpop.f32.mrb[0].mxu0
  %517 = vmatprep.mubr.f32.mxu0 0.0
  %518 = vmatmul.mubr.f32.gmra.mrb[0].mxu0 %v176
  %v519 = vpop.f32.mrb[0].mxu0
  %v520 = vadd.f32 %v97, %v519
  %v521 = vpop.f32.mrb[0].mxu0
  %522 = vmatprep.mubr.f32.mxu0 0.0
  %523 = vmatmul.mubr.f32.gmra.mrb[0].mxu0 %v179
  %v524 = vpop.f32.mrb[0].mxu0
  %v525 = vadd.f32 %v97, %v524
  %v526 = vpop.f32.mrb[0].mxu0
  %527 = vmatprep.mubr.f32.mxu0 0.0
  %528 = vmatmul.mubr.f32.gmra.mrb[0].mxu0 %v182
  %v529 = vpop.f32.mrb[0].mxu0
  %v530 = vadd.f32 %v97, %v529
  %v531 = vpop.f32.mrb[0].mxu0
  %532 = vmatprep.mubr.f32.mxu0 0.0
  %533 = vmatmul.mubr.f32.gmra.mrb[0].mxu0 %v185
  %v534 = vpop.f32.mrb[0].mxu0
  %v535 = vadd.f32 %v97, %v534
  %v536 = vpop.f32.mrb[0].mxu0
  %537 = vmatprep.mubr.f32.mxu0 0.0
  %538 = vmatmul.mubr.f32.gmra.mrb[0].mxu0 %v188
  %v539 = vpop.f32.mrb[0].mxu0
  %v540 = vadd.f32 %v97, %v539
  %v541 = vpop.f32.mrb[0].mxu0
  %542 = vmatprep.mubr.f32.mxu0 0.0
  %543 = vmatmul.mubr.f32.gmra.mrb[0].mxu0 %v191
  %v544 = vpop.f32.mrb[0].mxu0
  %v545 = vadd.f32 %v97, %v544
  %v546 = vpop.f32.mrb[0].mxu0
  %547 = vmatprep.mubr.f32.mxu0 0.0
  %548 = vmatmul.mubr.f32.gmra.mrb[0].mxu0 %v194
  %v549 = vpop.f32.mrb[0].mxu0
  %v550 = vadd.f32 %v97, %v549
  %v551 = vpop.f32.mrb[0].mxu0
  %552 = vmatprep.mubr.f32.mxu0 0.0
  %553 = vmatmul.mubr.f32.gmra.mrb[0].mxu0 %v197
  %v554 = vpop.f32.mrb[0].mxu0
  %v555 = vadd.f32 %v97, %v554
  %v556 = vpop.f32.mrb[0].mxu0
  %557 = vmatprep.mubr.f32.mxu0 0.0
  %558 = vmatmul.mubr.f32.gmra.mrb[0].mxu0 %v200
  %v559 = vpop.f32.mrb[0].mxu0
  %v560 = vadd.f32 %v97, %v559
  %v561 = vpop.f32.mrb[0].mxu0
  %562 = vmatprep.mubr.f32.mxu0 0.0
  %563 = vmatmul.mubr.f32.gmra.mrb[0].mxu0 %v203
  %v564 = vpop.f32.mrb[0].mxu0
  %v565 = vadd.f32 %v97, %v564
  %v566 = vpop.f32.mrb[0].mxu0
  %567 = vmatprep.mubr.f32.mxu0 0.0
  %568 = vmatmul.mubr.f32.gmra.mrb[0].mxu0 %v206
  %v569 = vpop.f32.mrb[0].mxu0
  %v570 = vadd.f32 %v97, %v569
  %v571 = vpop.f32.mrb[0].mxu0
  %572 = vmatprep.mubr.f32.mxu0 0.0
  %573 = vmatmul.mubr.f32.gmra.mrb[0].mxu0 %v209
  %v574 = vpop.f32.mrb[0].mxu0
  %v575 = vadd.f32 %v97, %v574
  %v576 = vpop.f32.mrb[0].mxu0
  %577 = vmatprep.mubr.f32.mxu0 0.0
  %578 = vmatmul.mubr.f32.gmra.mrb[0].mxu0 %v212
  %v579 = vpop.f32.mrb[0].mxu0
  %v580 = vadd.f32 %v97, %v579
  %v581 = vpop.f32.mrb[0].mxu0
  %582 = vmatprep.mubr.f32.mxu0 0.0
  %583 = vmatmul.mubr.f32.gmra.mrb[0].mxu0 %v215
  %v584 = vpop.f32.mrb[0].mxu0
  %v585 = vadd.f32 %v97, %v584
  %v586 = vpop.f32.mrb[0].mxu0
  %587 = vmatprep.mubr.f32.mxu0 0.0
  %588 = vmatmul.mubr.f32.gmra.mrb[0].mxu0 %v218
  %v589 = vpop.f32.mrb[0].mxu0
  %v590 = vadd.f32 %v97, %v589
  %v591 = vpop.f32.mrb[0].mxu0
  %592 = vmatprep.mubr.f32.mxu0 0.0
  %593 = vmatmul.mubr.f32.gmra.mrb[0].mxu0 %v221
  %v594 = vpop.f32.mrb[0].mxu0
  %v595 = vadd.f32 %v97, %v594
  %v596 = vpop.f32.mrb[0].mxu0
  %597 = vmatprep.mubr.f32.mxu0 0.0
  %598 = vmatmul.mubr.f32.gmra.mrb[0].mxu0 %v224
  %v599 = vpop.f32.mrb[0].mxu0
  %v600 = vadd.f32 %v97, %v599
  %v601 = vpop.f32.mrb[0].mxu0
  %602 = vmatprep.mubr.f32.mxu0 0.0
  %603 = vmatmul.mubr.f32.gmra.mrb[0].mxu0 %v227
  %v604 = vpop.f32.mrb[0].mxu0
  %v605 = vadd.f32 %v97, %v604
  %v606 = vpop.f32.mrb[0].mxu0
  %607 = vmatprep.mubr.f32.mxu0 0.0
  %608 = vmatmul.mubr.f32.gmra.mrb[0].mxu0 %v230
  %v609 = vpop.f32.mrb[0].mxu0
  %v610 = vadd.f32 %v97, %v609
  %v611 = vpop.f32.mrb[0].mxu0
  %612 = vmatprep.mubr.f32.mxu0 0.0
  %613 = vmatmul.mubr.f32.gmra.mrb[0].mxu0 %v233
  %v614 = vpop.f32.mrb[0].mxu0
  %v615 = vadd.f32 %v97, %v614
  %v616 = vpop.f32.mrb[0].mxu0
  %617 = vmatprep.mubr.f32.mxu0 0.0
  %618 = vmatmul.mubr.f32.gmra.mrb[0].mxu0 %v236
  %v619 = vpop.f32.mrb[0].mxu0
  %v620 = vadd.f32 %v97, %v619
  %v621 = vpop.f32.mrb[0].mxu0
  %622 = vmatprep.mubr.f32.mxu0 0.0
  %623 = vmatmul.mubr.f32.gmra.mrb[0].mxu0 %v239
  %v624 = vpop.f32.mrb[0].mxu0
  %v625 = vadd.f32 %v97, %v624
  %v626 = vpop.f32.mrb[0].mxu0
  %627 = vmatprep.mubr.f32.mxu0 0.0
  %628 = vmatmul.mubr.f32.gmra.mrb[0].mxu0 %v242
  %v629 = vpop.f32.mrb[0].mxu0
  %v630 = vadd.f32 %v97, %v629
  %v631 = vpop.f32.mrb[0].mxu0
  %632 = vmatprep.mubr.f32.mxu0 0.0
  %633 = vmatmul.mubr.f32.gmra.mrb[0].mxu0 %v245
  %v634 = vpop.f32.mrb[0].mxu0
  %v635 = vadd.f32 %v97, %v634
  %v636 = vpop.f32.mrb[0].mxu0
  %637 = vmatprep.mubr.f32.mxu0 0.0
  %638 = vmatmul.mubr.f32.gmra.mrb[0].mxu0 %v248
  %v639 = vpop.f32.mrb[0].mxu0
  %v640 = vadd.f32 %v97, %v639
  %v641 = vpop.f32.mrb[0].mxu0
  %642 = vmatprep.mubr.f32.mxu0 0.0
  %643 = vmatmul.mubr.f32.gmra.mrb[0].mxu0 %v251
  %v644 = vpop.f32.mrb[0].mxu0
  %v645 = vadd.f32 %v97, %v644
  %v646 = vpop.f32.mrb[0].mxu0
  %647 = vmatprep.mubr.f32.mxu0 0.0
  %648 = vmatmul.mubr.f32.gmra.mrb[0].mxu0 %v254
  %v649 = vpop.f32.mrb[0].mxu0
  %v650 = vadd.f32 %v97, %v649
  %v651 = vpop.f32.mrb[0].mxu0
  %652 = vmatprep.mubr.f32.mxu0 0.0
  %653 = vmatmul.mubr.f32.gmra.mrb[0].mxu0 %v257
  %v654 = vpop.f32.mrb[0].mxu0
  %v655 = vadd.f32 %v97, %v654
  %v656 = vpop.f32.mrb[0].mxu0
  %657 = vmatprep.mubr.f32.mxu0 0.0
  %658 = vmatmul.mubr.f32.gmra.mrb[0].mxu0 %v260
  %v659 = vpop.f32.mrb[0].mxu0
  %v660 = vadd.f32 %v97, %v659
  %v661 = vpop.f32.mrb[0].mxu0
  %662 = vmatprep.mubr.f32.mxu0 0.0
  %663 = vmatmul.mubr.f32.gmra.mrb[0].mxu0 %v263
  %v664 = vpop.f32.mrb[0].mxu0
  %v665 = vadd.f32 %v97, %v664
  %v666 = vpop.f32.mrb[0].mxu0
  %667 = vmatprep.mubr.f32.mxu0 0.0
  %668 = vmatmul.mubr.f32.gmra.mrb[0].mxu0 %v266
  %v669 = vpop.f32.mrb[0].mxu0
  %v670 = vadd.f32 %v97, %v669
  %v671 = vpop.f32.mrb[0].mxu0
  %672 = vmatprep.mubr.f32.mxu0 0.0
  %673 = vmatmul.mubr.f32.gmra.mrb[0].mxu0 %v269
  %v674 = vpop.f32.mrb[0].mxu0
  %v675 = vadd.f32 %v97, %v674
  %v676 = vpop.f32.mrb[0].mxu0
  %677 = vmatprep.mubr.f32.mxu0 0.0
  %678 = vmatmul.mubr.f32.gmra.mrb[0].mxu0 %v272
  %v679 = vpop.f32.mrb[0].mxu0
  %v680 = vadd.f32 %v97, %v679
  %v681 = vpop.f32.mrb[0].mxu0
  %682 = vmatprep.mubr.f32.mxu0 0.0
  %683 = vmatmul.mubr.f32.gmra.mrb[0].mxu0 %v275
  %v684 = vpop.f32.mrb[0].mxu0
  %v685 = vadd.f32 %v97, %v684
  %v686 = vpop.f32.mrb[0].mxu0
  %687 = vmatprep.mubr.f32.mxu0 0.0
  %688 = vmatmul.mubr.f32.gmra.mrb[0].mxu0 %v278
  %v689 = vpop.f32.mrb[0].mxu0
  %v690 = vadd.f32 %v97, %v689
  %v691 = vpop.f32.mrb[0].mxu0
  %692 = vmatprep.mubr.f32.mxu0 0.0
  %693 = vmatmul.mubr.f32.gmra.mrb[0].mxu0 %v281
  %v694 = vpop.f32.mrb[0].mxu0
  %v695 = vadd.f32 %v97, %v694
  %v696 = vpop.f32.mrb[0].mxu0
  %697 = vmatprep.mubr.f32.mxu0 0.0
  %698 = vmatmul.mubr.f32.gmra.mrb[0].mxu0 %v284
  %v699 = vpop.f32.mrb[0].mxu0
  %v700 = vadd.f32 %v97, %v699
  %v701 = vpop.f32.mrb[0].mxu0
  %702 = vmatprep.mubr.f32.mxu0 0.0
  %703 = vmatmul.mubr.f32.gmra.mrb[0].mxu0 %v287
  %v704 = vpop.f32.mrb[0].mxu0
  %v705 = vadd.f32 %v97, %v704
  %v706 = vpop.f32.mrb[0].mxu0
  %707 = vmatprep.mubr.f32.mxu0 0.0
  %708 = vmatmul.mubr.f32.gmra.mrb[0].mxu0 %v290
  %v709 = vpop.f32.mrb[0].mxu0
  %v710 = vadd.f32 %v97, %v709
  %v711 = vpop.f32.mrb[0].mxu0
  %712 = vmatprep.mubr.f32.mxu0 0.0
  %713 = vmatmul.mubr.f32.gmra.mrb[0].mxu0 %v293
  %v714 = vpop.f32.mrb[0].mxu0
  %v715 = vadd.f32 %v97, %v714
  %v716 = vpop.f32.mrb[0].mxu0
  %717 = vmatprep.mubr.f32.mxu0 0.0
  %718 = vmatmul.mubr.f32.gmra.mrb[0].mxu0 %v296
  %v719 = vpop.f32.mrb[0].mxu0
  %v720 = vadd.f32 %v97, %v719
  %v721 = vpop.f32.mrb[0].mxu0
  %722 = vmatprep.mubr.f32.mxu0 0.0
  %723 = vmatmul.mubr.f32.gmra.mrb[0].mxu0 %v299
  %v724 = vpop.f32.mrb[0].mxu0
  %v725 = vadd.f32 %v97, %v724
  %v726 = vpop.f32.mrb[0].mxu0
  %727 = vmatprep.mubr.f32.mxu0 0.0
  %728 = vmatmul.mubr.f32.gmra.mrb[0].mxu0 %v302
  %v729 = vpop.f32.mrb[0].mxu0
  %v730 = vadd.f32 %v97, %v729
  %v731 = vpop.f32.mrb[0].mxu0
  %732 = vmatprep.mubr.f32.mxu0 0.0
  %733 = vmatmul.mubr.f32.gmra.mrb[0].mxu0 %v305
  %v734 = vpop.f32.mrb[0].mxu0
  %v735 = vadd.f32 %v97, %v734
  %v736 = vpop.f32.mrb[0].mxu0
  %737 = vmatprep.mubr.f32.mxu0 0.0
  %738 = vmatmul.mubr.f32.gmra.mrb[0].mxu0 %v308
  %v739 = vpop.f32.mrb[0].mxu0
  %v740 = vadd.f32 %v97, %v739
  %v741 = vpop.f32.mrb[0].mxu0
  %742 = vmatprep.mubr.f32.mxu0 0.0
  %743 = vmatmul.mubr.f32.gmra.mrb[0].mxu0 %v311
  %v744 = vpop.f32.mrb[0].mxu0
  %v745 = vadd.f32 %v97, %v744
  %v746 = vpop.f32.mrb[0].mxu0
  %747 = vmatprep.mubr.f32.mxu0 0.0
  %748 = vmatmul.mubr.f32.gmra.mrb[0].mxu0 %v314
  %v749 = vpop.f32.mrb[0].mxu0
  %v750 = vadd.f32 %v97, %v749
  %v751 = vpop.f32.mrb[0].mxu0
  %752 = vmatprep.mubr.f32.mxu0 0.0
  %753 = vmatmul.mubr.f32.gmra.mrb[0].mxu0 %v317
  %v754 = vpop.f32.mrb[0].mxu0
  %v755 = vadd.f32 %v97, %v754
  %v756 = vpop.f32.mrb[0].mxu0
  %757 = vmatprep.mubr.f32.mxu0 0.0
  %758 = vmatmul.mubr.f32.gmra.mrb[0].mxu0 %v320
  %v759 = vpop.f32.mrb[0].mxu0
  %v760 = vadd.f32 %v97, %v759
  %v761 = vpop.f32.mrb[0].mxu0
  %762 = vmatprep.mubr.f32.mxu0 0.0
  %763 = vmatmul.mubr.f32.gmra.mrb[0].mxu0 %v323
  %v764 = vpop.f32.mrb[0].mxu0
  %v765 = vadd.f32 %v97, %v764
  %v766 = vpop.f32.mrb[0].mxu0
  %767 = vmatprep.mubr.f32.mxu0 0.0
  %768 = vmatmul.mubr.f32.gmra.mrb[0].mxu0 %v326
  %v769 = vpop.f32.mrb[0].mxu0
  %v770 = vadd.f32 %v97, %v769
  %v771 = vpop.f32.mrb[0].mxu0
  %772 = vdwg.mxu0
  %vm773 = vcmp.ge.f32.partialorder %v395, 0.0
  %vm774 = vcmp.ge.f32.partialorder %v400, 0.0
  %vm775 = vcmp.ge.f32.partialorder %v405, 0.0
  %vm776 = vcmp.ge.f32.partialorder %v410, 0.0
  %vm777 = vcmp.ge.f32.partialorder %v415, 0.0
  %vm778 = vcmp.ge.f32.partialorder %v420, 0.0
  %vm779 = vcmp.ge.f32.partialorder %v425, 0.0
  %vm780 = vcmp.ge.f32.partialorder %v430, 0.0
  %vm781 = vcmp.ge.f32.partialorder %v435, 0.0
  %vm782 = vcmp.ge.f32.partialorder %v440, 0.0
  %vm783 = vcmp.ge.f32.partialorder %v445, 0.0
  %vm784 = vcmp.ge.f32.partialorder %v450, 0.0
  %vm785 = vcmp.ge.f32.partialorder %v455, 0.0
  %vm786 = vcmp.ge.f32.partialorder %v460, 0.0
  %vm787 = vcmp.ge.f32.partialorder %v465, 0.0
  %vm788 = vcmp.ge.f32.partialorder %v470, 0.0
  %vm789 = vcmp.ge.f32.partialorder %v475, 0.0
  %vm790 = vcmp.ge.f32.partialorder %v480, 0.0
  %vm791 = vcmp.ge.f32.partialorder %v485, 0.0
  %vm792 = vcmp.ge.f32.partialorder %v490, 0.0
  %vm793 = vcmp.ge.f32.partialorder %v495, 0.0
  %vm794 = vcmp.ge.f32.partialorder %v500, 0.0
  %vm795 = vcmp.ge.f32.partialorder %v505, 0.0
  %vm796 = vcmp.ge.f32.partialorder %v510, 0.0
  %vm797 = vcmp.ge.f32.partialorder %v515, 0.0
  %vm798 = vcmp.ge.f32.partialorder %v520, 0.0
  %vm799 = vcmp.ge.f32.partialorder %v525, 0.0
  %vm800 = vcmp.ge.f32.partialorder %v530, 0.0
  %vm801 = vcmp.ge.f32.partialorder %v535, 0.0
  %vm802 = vcmp.ge.f32.partialorder %v540, 0.0
  %vm803 = vcmp.ge.f32.partialorder %v545, 0.0
  %vm804 = vcmp.ge.f32.partialorder %v550, 0.0
  %vm805 = vcmp.ge.f32.partialorder %v555, 0.0
  %vm806 = vcmp.ge.f32.partialorder %v560, 0.0
  %vm807 = vcmp.ge.f32.partialorder %v565, 0.0
  %vm808 = vcmp.ge.f32.partialorder %v570, 0.0
  %vm809 = vcmp.ge.f32.partialorder %v575, 0.0
  %vm810 = vcmp.ge.f32.partialorder %v580, 0.0
  %vm811 = vcmp.ge.f32.partialorder %v585, 0.0
  %vm812 = vcmp.ge.f32.partialorder %v590, 0.0
  %vm813 = vcmp.ge.f32.partialorder %v595, 0.0
  %vm814 = vcmp.ge.f32.partialorder %v600, 0.0
  %vm815 = vcmp.ge.f32.partialorder %v605, 0.0
  %vm816 = vcmp.ge.f32.partialorder %v610, 0.0
  %vm817 = vcmp.ge.f32.partialorder %v615, 0.0
  %vm818 = vcmp.ge.f32.partialorder %v620, 0.0
  %vm819 = vcmp.ge.f32.partialorder %v625, 0.0
  %vm820 = vcmp.ge.f32.partialorder %v630, 0.0
  %vm821 = vcmp.ge.f32.partialorder %v635, 0.0
  %vm822 = vcmp.ge.f32.partialorder %v640, 0.0
  %vm823 = vcmp.ge.f32.partialorder %v645, 0.0
  %vm824 = vcmp.ge.f32.partialorder %v650, 0.0
  %vm825 = vcmp.ge.f32.partialorder %v655, 0.0
  %vm826 = vcmp.ge.f32.partialorder %v660, 0.0
  %vm827 = vcmp.ge.f32.partialorder %v665, 0.0
  %vm828 = vcmp.ge.f32.partialorder %v670, 0.0
  %vm829 = vcmp.ge.f32.partialorder %v675, 0.0
  %vm830 = vcmp.ge.f32.partialorder %v680, 0.0
  %vm831 = vcmp.ge.f32.partialorder %v685, 0.0
  %vm832 = vcmp.ge.f32.partialorder %v690, 0.0
  %vm833 = vcmp.ge.f32.partialorder %v695, 0.0
  %vm834 = vcmp.ge.f32.partialorder %v700, 0.0
  %vm835 = vcmp.ge.f32.partialorder %v705, 0.0
  %vm836 = vcmp.ge.f32.partialorder %v710, 0.0
  %vm837 = vcmp.ge.f32.partialorder %v715, 0.0
  %vm838 = vcmp.ge.f32.partialorder %v720, 0.0
  %vm839 = vcmp.ge.f32.partialorder %v725, 0.0
  %vm840 = vcmp.ge.f32.partialorder %v730, 0.0
  %vm841 = vcmp.ge.f32.partialorder %v735, 0.0
  %vm842 = vcmp.ge.f32.partialorder %v740, 0.0
  %vm843 = vcmp.ge.f32.partialorder %v745, 0.0
  %vm844 = vcmp.ge.f32.partialorder %v750, 0.0
  %vm845 = vcmp.ge.f32.partialorder %v755, 0.0
  %vm846 = vcmp.ge.f32.partialorder %v760, 0.0
  %vm847 = vcmp.ge.f32.partialorder %v765, 0.0
  %vm848 = vcmp.ge.f32.partialorder %v770, 0.0
  %v849 = vmul.f32 %v395, 0.01
  %v850 = vmul.f32 %v400, 0.01
  %v851 = vmul.f32 %v405, 0.01
  %v852 = vmul.f32 %v410, 0.01
  %v853 = vmul.f32 %v415, 0.01
  %v854 = vmul.f32 %v420, 0.01
  %v855 = vmul.f32 %v425, 0.01
  %v856 = vmul.f32 %v430, 0.01
  %v857 = vmul.f32 %v435, 0.01
  %v858 = vmul.f32 %v440, 0.01
  %v859 = vmul.f32 %v445, 0.01
  %v860 = vmul.f32 %v450, 0.01
  %v861 = vmul.f32 %v455, 0.01
  %v862 = vmul.f32 %v460, 0.01
  %v863 = vmul.f32 %v465, 0.01
  %v864 = vmul.f32 %v470, 0.01
  %v865 = vmul.f32 %v475, 0.01
  %v866 = vmul.f32 %v480, 0.01
  %v867 = vmul.f32 %v485, 0.01
  %v868 = vmul.f32 %v490, 0.01
  %v869 = vmul.f32 %v495, 0.01
  %v870 = vmul.f32 %v500, 0.01
  %v871 = vmul.f32 %v505, 0.01
  %v872 = vmul.f32 %v510, 0.01
  %v873 = vmul.f32 %v515, 0.01
  %v874 = vmul.f32 %v520, 0.01
  %v875 = vmul.f32 %v525, 0.01
  %v876 = vmul.f32 %v530, 0.01
  %v877 = vmul.f32 %v535, 0.01
  %v878 = vmul.f32 %v540, 0.01
  %v879 = vmul.f32 %v545, 0.01
  %v880 = vmul.f32 %v550, 0.01
  %v881 = vmul.f32 %v555, 0.01
  %v882 = vmul.f32 %v560, 0.01
  %v883 = vmul.f32 %v565, 0.01
  %v884 = vmul.f32 %v570, 0.01
  %v885 = vmul.f32 %v575, 0.01
  %v886 = vmul.f32 %v580, 0.01
  %v887 = vmul.f32 %v585, 0.01
  %v888 = vmul.f32 %v590, 0.01
  %v889 = vmul.f32 %v595, 0.01
  %v890 = vmul.f32 %v600, 0.01
  %v891 = vmul.f32 %v605, 0.01
  %v892 = vmul.f32 %v610, 0.01
  %v893 = vmul.f32 %v615, 0.01
  %v894 = vmul.f32 %v620, 0.01
  %v895 = vmul.f32 %v625, 0.01
  %v896 = vmul.f32 %v630, 0.01
  %v897 = vmul.f32 %v635, 0.01
  %v898 = vmul.f32 %v640, 0.01
  %v899 = vmul.f32 %v645, 0.01
  %v900 = vmul.f32 %v650, 0.01
  %v901 = vmul.f32 %v655, 0.01
  %v902 = vmul.f32 %v660, 0.01
  %v903 = vmul.f32 %v665, 0.01
  %v904 = vmul.f32 %v670, 0.01
  %v905 = vmul.f32 %v675, 0.01
  %v906 = vmul.f32 %v680, 0.01
  %v907 = vmul.f32 %v685, 0.01
  %v908 = vmul.f32 %v690, 0.01
  %v909 = vmul.f32 %v695, 0.01
  %v910 = vmul.f32 %v700, 0.01
  %v911 = vmul.f32 %v705, 0.01
  %v912 = vmul.f32 %v710, 0.01
  %v913 = vmul.f32 %v715, 0.01
  %v914 = vmul.f32 %v720, 0.01
  %v915 = vmul.f32 %v725, 0.01
  %v916 = vmul.f32 %v730, 0.01
  %v917 = vmul.f32 %v735, 0.01
  %v918 = vmul.f32 %v740, 0.01
  %v919 = vmul.f32 %v745, 0.01
  %v920 = vmul.f32 %v750, 0.01
  %v921 = vmul.f32 %v755, 0.01
  %v922 = vmul.f32 %v760, 0.01
  %v923 = vmul.f32 %v765, 0.01
  %v924 = vmul.f32 %v770, 0.01
  %v925 = vsel %vm773, %v395, %v849
  %v926 = vsel %vm774, %v400, %v850
  %v927 = vsel %vm775, %v405, %v851
  %v928 = vsel %vm776, %v410, %v852
  %v929 = vsel %vm777, %v415, %v853
  %v930 = vsel %vm778, %v420, %v854
  %v931 = vsel %vm779, %v425, %v855
  %v932 = vsel %vm780, %v430, %v856
  %v933 = vsel %vm781, %v435, %v857
  %v934 = vsel %vm782, %v440, %v858
  %v935 = vsel %vm783, %v445, %v859
  %v936 = vsel %vm784, %v450, %v860
  %v937 = vsel %vm785, %v455, %v861
  %v938 = vsel %vm786, %v460, %v862
  %v939 = vsel %vm787, %v465, %v863
  %v940 = vsel %vm788, %v470, %v864
  %v941 = vsel %vm789, %v475, %v865
  %v942 = vsel %vm790, %v480, %v866
  %v943 = vsel %vm791, %v485, %v867
  %v944 = vsel %vm792, %v490, %v868
  %v945 = vsel %vm793, %v495, %v869
  %v946 = vsel %vm794, %v500, %v870
  %v947 = vsel %vm795, %v505, %v871
  %v948 = vsel %vm796, %v510, %v872
  %v949 = vsel %vm797, %v515, %v873
  %v950 = vsel %vm798, %v520, %v874
  %v951 = vsel %vm799, %v525, %v875
  %v952 = vsel %vm800, %v530, %v876
  %v953 = vsel %vm801, %v535, %v877
  %v954 = vsel %vm802, %v540, %v878
  %v955 = vsel %vm803, %v545, %v879
  %v956 = vsel %vm804, %v550, %v880
  %v957 = vsel %vm805, %v555, %v881
  %v958 = vsel %vm806, %v560, %v882
  %v959 = vsel %vm807, %v565, %v883
  %v960 = vsel %vm808, %v570, %v884
  %v961 = vsel %vm809, %v575, %v885
  %v962 = vsel %vm810, %v580, %v886
  %v963 = vsel %vm811, %v585, %v887
  %v964 = vsel %vm812, %v590, %v888
  %v965 = vsel %vm813, %v595, %v889
  %v966 = vsel %vm814, %v600, %v890
  %v967 = vsel %vm815, %v605, %v891
  %v968 = vsel %vm816, %v610, %v892
  %v969 = vsel %vm817, %v615, %v893
  %v970 = vsel %vm818, %v620, %v894
  %v971 = vsel %vm819, %v625, %v895
  %v972 = vsel %vm820, %v630, %v896
  %v973 = vsel %vm821, %v635, %v897
  %v974 = vsel %vm822, %v640, %v898
  %v975 = vsel %vm823, %v645, %v899
  %v976 = vsel %vm824, %v650, %v900
  %v977 = vsel %vm825, %v655, %v901
  %v978 = vsel %vm826, %v660, %v902
  %v979 = vsel %vm827, %v665, %v903
  %v980 = vsel %vm828, %v670, %v904
  %v981 = vsel %vm829, %v675, %v905
  %v982 = vsel %vm830, %v680, %v906
  %v983 = vsel %vm831, %v685, %v907
  %v984 = vsel %vm832, %v690, %v908
  %v985 = vsel %vm833, %v695, %v909
  %v986 = vsel %vm834, %v700, %v910
  %v987 = vsel %vm835, %v705, %v911
  %v988 = vsel %vm836, %v710, %v912
  %v989 = vsel %vm837, %v715, %v913
  %v990 = vsel %vm838, %v720, %v914
  %v991 = vsel %vm839, %v725, %v915
  %v992 = vsel %vm840, %v730, %v916
  %v993 = vsel %vm841, %v735, %v917
  %v994 = vsel %vm842, %v740, %v918
  %v995 = vsel %vm843, %v745, %v919
  %v996 = vsel %vm844, %v750, %v920
  %v997 = vsel %vm845, %v755, %v921
  %v998 = vsel %vm846, %v760, %v922
  %v999 = vsel %vm847, %v765, %v923
  %v1000 = vsel %vm848, %v770, %v924
  %vm1001 = vcmask 523264
  %1002 = vst.msk [vmem:[%s3] sm:$0xff] %vm1001, %v925
  %1003 = vst.msk [vmem:[%s3 + $0x8] sm:$0xff] %vm1001, %v926
  %1004 = vst.msk [vmem:[%s3 + $0x10] sm:$0xff] %vm1001, %v927
  %1005 = vst.msk [vmem:[%s3 + $0x18] sm:$0xff] %vm1001, %v928
  %1006 = vst.msk [vmem:[%s3 + $0x20] sm:$0xff] %vm1001, %v929
  %1007 = vst.msk [vmem:[%s3 + $0x28] sm:$0xff] %vm1001, %v930
  %1008 = vst.msk [vmem:[%s3 + $0x30] sm:$0xff] %vm1001, %v931
  %1009 = vst.msk [vmem:[%s3 + $0x38] sm:$0xff] %vm1001, %v932
  %1010 = vst.msk [vmem:[%s3 + $0x40] sm:$0xff] %vm1001, %v933
  %1011 = vst.msk [vmem:[%s3 + $0x48] sm:$0xff] %vm1001, %v934
  %1012 = vst.msk [vmem:[%s3 + $0x50] sm:$0xff] %vm1001, %v935
  %1013 = vst.msk [vmem:[%s3 + $0x58] sm:$0xff] %vm1001, %v936
  %1014 = vst.msk [vmem:[%s3 + $0x60] sm:$0xff] %vm1001, %v937
  %1015 = vst.msk [vmem:[%s3 + $0x68] sm:$0xff] %vm1001, %v938
  %1016 = vst.msk [vmem:[%s3 + $0x70] sm:$0xff] %vm1001, %v939
  %1017 = vst.msk [vmem:[%s3 + $0x78] sm:$0xff] %vm1001, %v940
  %1018 = vst.msk [vmem:[%s3 + $0x80] sm:$0xff] %vm1001, %v941
  %1019 = vst.msk [vmem:[%s3 + $0x88] sm:$0xff] %vm1001, %v942
  %1020 = vst.msk [vmem:[%s3 + $0x90] sm:$0xff] %vm1001, %v943
  %1021 = vst.msk [vmem:[%s3 + $0x98] sm:$0xff] %vm1001, %v944
  %1022 = vst.msk [vmem:[%s3 + $0xa0] sm:$0xff] %vm1001, %v945
  %1023 = vst.msk [vmem:[%s3 + $0xa8] sm:$0xff] %vm1001, %v946
  %1024 = vst.msk [vmem:[%s3 + $0xb0] sm:$0xff] %vm1001, %v947
  %1025 = vst.msk [vmem:[%s3 + $0xb8] sm:$0xff] %vm1001, %v948
  %1026 = vst.msk [vmem:[%s3 + $0xc0] sm:$0xff] %vm1001, %v949
  %1027 = vst.msk [vmem:[%s3 + $0xc8] sm:$0xff] %vm1001, %v950
  %1028 = vst.msk [vmem:[%s3 + $0xd0] sm:$0xff] %vm1001, %v951
  %1029 = vst.msk [vmem:[%s3 + $0xd8] sm:$0xff] %vm1001, %v952
  %1030 = vst.msk [vmem:[%s3 + $0xe0] sm:$0xff] %vm1001, %v953
  %1031 = vst.msk [vmem:[%s3 + $0xe8] sm:$0xff] %vm1001, %v954
  %1032 = vst.msk [vmem:[%s3 + $0xf0] sm:$0xff] %vm1001, %v955
  %1033 = vst.msk [vmem:[%s3 + $0xf8] sm:$0xff] %vm1001, %v956
  %1034 = vst.msk [vmem:[%s3 + $0x100] sm:$0xff] %vm1001, %v957
  %1035 = vst.msk [vmem:[%s3 + $0x108] sm:$0xff] %vm1001, %v958
  %1036 = vst.msk [vmem:[%s3 + $0x110] sm:$0xff] %vm1001, %v959
  %1037 = vst.msk [vmem:[%s3 + $0x118] sm:$0xff] %vm1001, %v960
  %1038 = vst.msk [vmem:[%s3 + $0x120] sm:$0xff] %vm1001, %v961
  %1039 = vst.msk [vmem:[%s3 + $0x128] sm:$0xff] %vm1001, %v962
  %1040 = vst.msk [vmem:[%s3 + $0x130] sm:$0xff] %vm1001, %v963
  %1041 = vst.msk [vmem:[%s3 + $0x138] sm:$0xff] %vm1001, %v964
  %1042 = vst.msk [vmem:[%s3 + $0x140] sm:$0xff] %vm1001, %v965
  %1043 = vst.msk [vmem:[%s3 + $0x148] sm:$0xff] %vm1001, %v966
  %1044 = vst.msk [vmem:[%s3 + $0x150] sm:$0xff] %vm1001, %v967
  %1045 = vst.msk [vmem:[%s3 + $0x158] sm:$0xff] %vm1001, %v968
  %1046 = vst.msk [vmem:[%s3 + $0x160] sm:$0xff] %vm1001, %v969
  %1047 = vst.msk [vmem:[%s3 + $0x168] sm:$0xff] %vm1001, %v970
  %1048 = vst.msk [vmem:[%s3 + $0x170] sm:$0xff] %vm1001, %v971
  %1049 = vst.msk [vmem:[%s3 + $0x178] sm:$0xff] %vm1001, %v972
  %1050 = vst.msk [vmem:[%s3 + $0x180] sm:$0xff] %vm1001, %v973
  %1051 = vst.msk [vmem:[%s3 + $0x188] sm:$0xff] %vm1001, %v974
  %1052 = vst.msk [vmem:[%s3 + $0x190] sm:$0xff] %vm1001, %v975
  %1053 = vst.msk [vmem:[%s3 + $0x198] sm:$0xff] %vm1001, %v976
  %1054 = vst.msk [vmem:[%s3 + $0x1a0] sm:$0xff] %vm1001, %v977
  %1055 = vst.msk [vmem:[%s3 + $0x1a8] sm:$0xff] %vm1001, %v978
  %1056 = vst.msk [vmem:[%s3 + $0x1b0] sm:$0xff] %vm1001, %v979
  %1057 = vst.msk [vmem:[%s3 + $0x1b8] sm:$0xff] %vm1001, %v980
  %1058 = vst.msk [vmem:[%s3 + $0x1c0] sm:$0xff] %vm1001, %v981
  %1059 = vst.msk [vmem:[%s3 + $0x1c8] sm:$0xff] %vm1001, %v982
  %1060 = vst.msk [vmem:[%s3 + $0x1d0] sm:$0xff] %vm1001, %v983
  %1061 = vst.msk [vmem:[%s3 + $0x1d8] sm:$0xff] %vm1001, %v984
  %1062 = vst.msk [vmem:[%s3 + $0x1e0] sm:$0xff] %vm1001, %v985
  %1063 = vst.msk [vmem:[%s3 + $0x1e8] sm:$0xff] %vm1001, %v986
  %1064 = vst.msk [vmem:[%s3 + $0x1f0] sm:$0xff] %vm1001, %v987
  %1065 = vst.msk [vmem:[%s3 + $0x1f8] sm:$0xff] %vm1001, %v988
  %1066 = vst.msk [vmem:[%s3 + $0x200] sm:$0xff] %vm1001, %v989
  %1067 = vst.msk [vmem:[%s3 + $0x208] sm:$0xff] %vm1001, %v990
  %1068 = vst.msk [vmem:[%s3 + $0x210] sm:$0xff] %vm1001, %v991
  %1069 = vst.msk [vmem:[%s3 + $0x218] sm:$0xff] %vm1001, %v992
  %1070 = vst.msk [vmem:[%s3 + $0x220] sm:$0xff] %vm1001, %v993
  %1071 = vst.msk [vmem:[%s3 + $0x228] sm:$0xff] %vm1001, %v994
  %1072 = vst.msk [vmem:[%s3 + $0x230] sm:$0xff] %vm1001, %v995
  %1073 = vst.msk [vmem:[%s3 + $0x238] sm:$0xff] %vm1001, %v996
  %1074 = vst.msk [vmem:[%s3 + $0x240] sm:$0xff] %vm1001, %v997
  %1075 = vst.msk [vmem:[%s3 + $0x248] sm:$0xff] %vm1001, %v998
  %1076 = vst.msk [vmem:[%s3 + $0x250] sm:$0xff] %vm1001, %v999
  %1077 = vst.msk [vmem:[%s3 + $0x258] sm:$0xff] %vm1001, %v1000
  // Predicated region
  $region14: #{ccmtl_forward.2} parent=0 // pred_check
    _
  $region15: #{ccmtl_forward.2} parent=0 // pred_check_branch
    %1079 = sbr.rel (0) target = $region17
  $region16: #{ccmtl_forward.2} parent=0 // pred_region
    _
  $region17: #{ccmtl_forward.2} parent=0 // pred_fallthru
    _
  // Predicated region
  $region18: #{ccmtl_forward.2} parent=0 // pred_check
    _
  $region19: #{ccmtl_forward.2} parent=0 // pred_check_branch
    %1081 = sbr.rel (0) target = $region21
  $region20: #{ccmtl_forward.2} parent=0 // pred_region
    _
  $region21: #{ccmtl_forward.2} parent=0 // pred_fallthru
    _

// kernel: ccmtl_forward.3
$region0: #{ccmtl_forward.3}
  #allocation0 [shape = 'u32[]', space=smem, size = 0x4, offset = 0x4, fixed_abs, tag = 'smem constant byte address 0x4 - core index']
  #allocation1 [shape = 'u32[144,128]{1,0:T(1,128)}', space=vmem, size = 0x12000, scoped, tag = 'internal scratch']
  %s0 = inlined_call_operand.vmem [shape: f32[8,4864], index: 0, kind: input, shape index: {}]
  %s1 = inlined_call_operand.vmem [shape: bf16[4864,32], index: 1, kind: input, shape index: {}]
  %s2 = inlined_call_operand.vmem [shape: f32[1,32], index: 2, kind: input, shape index: {}]
  %s3 = inlined_call_operand.vmem [shape: f32[32,32], index: 3, kind: input, shape index: {}]
  %s4 = inlined_call_operand.vmem [shape: f32[1,32], index: 4, kind: input, shape index: {}]
  %s5 = inlined_call_operand.vmem [shape: f32[1,32], index: 5, kind: input, shape index: {}]
  %s6 = inlined_call_operand.vmem [shape: f32[1,32], index: 6, kind: input, shape index: {}]
  %s7 = inlined_call_operand.vmem [shape: bf16[32,2048], index: 7, kind: input, shape index: {}]
  %s8 = inlined_call_operand.vmem [shape: f32[1,2048], index: 8, kind: input, shape index: {}]
  %s9 = inlined_call_operand.vmem [shape: bf16[2048,32], index: 9, kind: input, shape index: {}]
  %s10 = inlined_call_operand.vmem [shape: f32[1,32], index: 10, kind: input, shape index: {}]
  %s11 = inlined_call_operand.vmem [shape: f32[1,32], index: 11, kind: input, shape index: {}]
  %s12 = inlined_call_operand.vmem [shape: f32[1,32], index: 12, kind: input, shape index: {}]
  %s13 = inlined_call_operand.vmem [shape: f32[32,4], index: 13, kind: input, shape index: {}]
  %s14 = inlined_call_operand.vmem [shape: f32[1,4], index: 14, kind: input, shape index: {}]
  %s15 = inlined_call_operand.vmem [shape: f32[8,4], index: 15, kind: output, shape index: {}]
  %s16 = sld [smem:[#allocation0]]
  $region70: #{ccmtl_forward.3} parent=0
    _
  %s18 = ssub.s32 1, %s16
  %s19 = scalar_select 0, %s18, %s16
  // Predicated region
  $region2: #{ccmtl_forward.3} parent=0 // pred_check
    _
  $region3: #{ccmtl_forward.3} parent=0 // pred_check_branch
    %21 = sbr.rel (0) target = $region5
  $region4: #{ccmtl_forward.3} parent=0 // pred_region
    _
  $region5: #{ccmtl_forward.3} parent=0 // pred_fallthru
    _
  // Predicated region
  $region6: #{ccmtl_forward.3} parent=0 // pred_check
    _
  $region7: #{ccmtl_forward.3} parent=0 // pred_check_branch
    %23 = sbr.rel (0) target = $region9
  $region8: #{ccmtl_forward.3} parent=0 // pred_region
    _
  $region9: #{ccmtl_forward.3} parent=0 // pred_fallthru
    _
  // Predicated region
  $region10: #{ccmtl_forward.3} parent=0 // pred_check
    _
  $region11: #{ccmtl_forward.3} parent=0 // pred_check_branch
    %25 = sbr.rel (0) target = $region13
  $region12: #{ccmtl_forward.3} parent=0 // pred_region
    _
  $region13: #{ccmtl_forward.3} parent=0 // pred_fallthru
    _
  // Predicated region
  $region14: #{ccmtl_forward.3} parent=0 // pred_check
    _
  $region15: #{ccmtl_forward.3} parent=0 // pred_check_branch
    %27 = sbr.rel (0) target = $region17
  $region16: #{ccmtl_forward.3} parent=0 // pred_region
    _
  $region17: #{ccmtl_forward.3} parent=0 // pred_fallthru
    _
  // Predicated region
  $region18: #{ccmtl_forward.3} parent=0 // pred_check
    _
  $region19: #{ccmtl_forward.3} parent=0 // pred_check_branch
    %29 = sbr.rel (0) target = $region21
  $region20: #{ccmtl_forward.3} parent=0 // pred_region
    _
  $region21: #{ccmtl_forward.3} parent=0 // pred_fallthru
    _
  // Predicated region
  $region22: #{ccmtl_forward.3} parent=0 // pred_check
    _
  $region23: #{ccmtl_forward.3} parent=0 // pred_check_branch
    %31 = sbr.rel (0) target = $region25
  $region24: #{ccmtl_forward.3} parent=0 // pred_region
    _
  $region25: #{ccmtl_forward.3} parent=0 // pred_fallthru
    _
  // Predicated region
  $region26: #{ccmtl_forward.3} parent=0 // pred_check
    _
  $region27: #{ccmtl_forward.3} parent=0 // pred_check_branch
    %33 = sbr.rel (0) target = $region29
  $region28: #{ccmtl_forward.3} parent=0 // pred_region
    _
  $region29: #{ccmtl_forward.3} parent=0 // pred_fallthru
    _
  // Predicated region
  $region30: #{ccmtl_forward.3} parent=0 // pred_check
    _
  $region31: #{ccmtl_forward.3} parent=0 // pred_check_branch
    %35 = sbr.rel (0) target = $region33
  $region32: #{ccmtl_forward.3} parent=0 // pred_region
    _
  $region33: #{ccmtl_forward.3} parent=0 // pred_fallthru
    _
  // Predicated region
  $region34: #{ccmtl_forward.3} parent=0 // pred_check
    _
  $region35: #{ccmtl_forward.3} parent=0 // pred_check_branch
    %37 = sbr.rel (0) target = $region37
  $region36: #{ccmtl_forward.3} parent=0 // pred_region
    _
  $region37: #{ccmtl_forward.3} parent=0 // pred_fallthru
    _
  // Predicated region
  $region38: #{ccmtl_forward.3} parent=0 // pred_check
    _
  $region39: #{ccmtl_forward.3} parent=0 // pred_check_branch
    %39 = sbr.rel (0) target = $region41
  $region40: #{ccmtl_forward.3} parent=0 // pred_region
    _
  $region41: #{ccmtl_forward.3} parent=0 // pred_fallthru
    _
  // Predicated region
  $region42: #{ccmtl_forward.3} parent=0 // pred_check
    _
  $region43: #{ccmtl_forward.3} parent=0 // pred_check_branch
    %41 = sbr.rel (0) target = $region45
  $region44: #{ccmtl_forward.3} parent=0 // pred_region
    _
  $region45: #{ccmtl_forward.3} parent=0 // pred_fallthru
    _
  // Predicated region
  $region46: #{ccmtl_forward.3} parent=0 // pred_check
    _
  $region47: #{ccmtl_forward.3} parent=0 // pred_check_branch
    %43 = sbr.rel (0) target = $region49
  $region48: #{ccmtl_forward.3} parent=0 // pred_region
    _
  $region49: #{ccmtl_forward.3} parent=0 // pred_fallthru
    _
  // Predicated region
  $region50: #{ccmtl_forward.3} parent=0 // pred_check
    _
  $region51: #{ccmtl_forward.3} parent=0 // pred_check_branch
    %45 = sbr.rel (0) target = $region53
  $region52: #{ccmtl_forward.3} parent=0 // pred_region
    _
  $region53: #{ccmtl_forward.3} parent=0 // pred_fallthru
    _
  // Predicated region
  $region54: #{ccmtl_forward.3} parent=0 // pred_check
    _
  $region55: #{ccmtl_forward.3} parent=0 // pred_check_branch
    %47 = sbr.rel (0) target = $region57
  $region56: #{ccmtl_forward.3} parent=0 // pred_region
    _
  $region57: #{ccmtl_forward.3} parent=0 // pred_fallthru
    _
  // Predicated region
  $region58: #{ccmtl_forward.3} parent=0 // pred_check
    _
  $region59: #{ccmtl_forward.3} parent=0 // pred_check_branch
    %49 = sbr.rel (0) target = $region61
  $region60: #{ccmtl_forward.3} parent=0 // pred_region
    _
  $region61: #{ccmtl_forward.3} parent=0 // pred_fallthru
    _
  %v51 = vld [vmem:[%s0] sm:$0xff]
  %v52 = vld [vmem:[%s0 + $0x8] sm:$0xff]
  %v53 = vld [vmem:[%s0 + $0x10] sm:$0xff]
  %v54 = vld [vmem:[%s0 + $0x18] sm:$0xff]
  %v55 = vld [vmem:[%s0 + $0x20] sm:$0xff]
  %v56 = vld [vmem:[%s0 + $0x28] sm:$0xff]
  %v57 = vld [vmem:[%s0 + $0x30] sm:$0xff]
  %v58 = vld [vmem:[%s0 + $0x38] sm:$0xff]
  %v59 = vld [vmem:[%s0 + $0x40] sm:$0xff]
  %v60 = vld [vmem:[%s0 + $0x48] sm:$0xff]
  %v61 = vld [vmem:[%s0 + $0x50] sm:$0xff]
  %v62 = vld [vmem:[%s0 + $0x58] sm:$0xff]
  %v63 = vld [vmem:[%s0 + $0x60] sm:$0xff]
  %v64 = vld [vmem:[%s0 + $0x68] sm:$0xff]
  %v65 = vld [vmem:[%s0 + $0x70] sm:$0xff]
  %v66 = vld [vmem:[%s0 + $0x78] sm:$0xff]
  %v67 = vld [vmem:[%s0 + $0x80] sm:$0xff]
  %v68 = vld [vmem:[%s0 + $0x88] sm:$0xff]
  %v69 = vld [vmem:[%s0 + $0x90] sm:$0xff]
  %v70 = vld [vmem:[%s0 + $0x98] sm:$0xff]
  %v71 = vld [vmem:[%s0 + $0xa0] sm:$0xff]
  %v72 = vld [vmem:[%s0 + $0xa8] sm:$0xff]
  %v73 = vld [vmem:[%s0 + $0xb0] sm:$0xff]
  %v74 = vld [vmem:[%s0 + $0xb8] sm:$0xff]
  %v75 = vld [vmem:[%s0 + $0xc0] sm:$0xff]
  %v76 = vld [vmem:[%s0 + $0xc8] sm:$0xff]
  %v77 = vld [vmem:[%s0 + $0xd0] sm:$0xff]
  %v78 = vld [vmem:[%s0 + $0xd8] sm:$0xff]
  %v79 = vld [vmem:[%s0 + $0xe0] sm:$0xff]
  %v80 = vld [vmem:[%s0 + $0xe8] sm:$0xff]
  %v81 = vld [vmem:[%s0 + $0xf0] sm:$0xff]
  %v82 = vld [vmem:[%s0 + $0xf8] sm:$0xff]
  %v83 = vld [vmem:[%s0 + $0x100] sm:$0xff]
  %v84 = vld [vmem:[%s0 + $0x108] sm:$0xff]
  %v85 = vld [vmem:[%s0 + $0x110] sm:$0xff]
  %v86 = vld [vmem:[%s0 + $0x118] sm:$0xff]
  %v87 = vld [vmem:[%s0 + $0x120] sm:$0xff]
  %v88 = vld [vmem:[%s0 + $0x128] sm:$0xff]
  %v89 = vpack.c.bf16 %v51, %v51
  %v90 = vpack.c.bf16 %v52, %v52
  %v91 = vpack.c.bf16 %v53, %v53
  %v92 = vpack.c.bf16 %v54, %v54
  %v93 = vpack.c.bf16 %v55, %v55
  %v94 = vpack.c.bf16 %v56, %v56
  %v95 = vpack.c.bf16 %v57, %v57
  %v96 = vpack.c.bf16 %v58, %v58
  %v97 = vpack.c.bf16 %v59, %v59
  %v98 = vpack.c.bf16 %v60, %v60
  %v99 = vpack.c.bf16 %v61, %v61
  %v100 = vpack.c.bf16 %v62, %v62
  %v101 = vpack.c.bf16 %v63, %v63
  %v102 = vpack.c.bf16 %v64, %v64
  %v103 = vpack.c.bf16 %v65, %v65
  %v104 = vpack.c.bf16 %v66, %v66
  %v105 = vpack.c.bf16 %v67, %v67
  %v106 = vpack.c.bf16 %v68, %v68
  %v107 = vpack.c.bf16 %v69, %v69
  %v108 = vpack.c.bf16 %v70, %v70
  %v109 = vpack.c.bf16 %v71, %v71
  %v110 = vpack.c.bf16 %v72, %v72
  %v111 = vpack.c.bf16 %v73, %v73
  %v112 = vpack.c.bf16 %v74, %v74
  %v113 = vpack.c.bf16 %v75, %v75
  %v114 = vpack.c.bf16 %v76, %v76
  %v115 = vpack.c.bf16 %v77, %v77
  %v116 = vpack.c.bf16 %v78, %v78
  %v117 = vpack.c.bf16 %v79, %v79
  %v118 = vpack.c.bf16 %v80, %v80
  %v119 = vpack.c.bf16 %v81, %v81
  %v120 = vpack.c.bf16 %v82, %v82
  %v121 = vpack.c.bf16 %v83, %v83
  %v122 = vpack.c.bf16 %v84, %v84
  %v123 = vpack.c.bf16 %v85, %v85
  %v124 = vpack.c.bf16 %v86, %v86
  %v125 = vpack.c.bf16 %v87, %v87
  %v126 = vpack.c.bf16 %v88, %v88
  %v127 = vld [vmem:[%s1] sm:$0xf]
  %v128 = vld [vmem:[%s1 + $0x4] sm:$0xf]
  %v129 = vld [vmem:[%s1 + $0x8] sm:$0xf]
  %v130 = vld [vmem:[%s1 + $0xc] sm:$0xf]
  %v131 = vld [vmem:[%s1 + $0x10] sm:$0xf]
  %v132 = vld [vmem:[%s1 + $0x14] sm:$0xf]
  %v133 = vld [vmem:[%s1 + $0x18] sm:$0xf]
  %v134 = vld [vmem:[%s1 + $0x1c] sm:$0xf]
  %v135 = vld [vmem:[%s1 + $0x20] sm:$0xf]
  %v136 = vld [vmem:[%s1 + $0x24] sm:$0xf]
  %v137 = vld [vmem:[%s1 + $0x28] sm:$0xf]
  %v138 = vld [vmem:[%s1 + $0x2c] sm:$0xf]
  %v139 = vld [vmem:[%s1 + $0x30] sm:$0xf]
  %v140 = vld [vmem:[%s1 + $0x34] sm:$0xf]
  %v141 = vld [vmem:[%s1 + $0x38] sm:$0xf]
  %v142 = vld [vmem:[%s1 + $0x3c] sm:$0xf]
  %v143 = vld [vmem:[%s1 + $0x40] sm:$0xf]
  %v144 = vld [vmem:[%s1 + $0x44] sm:$0xf]
  %v145 = vld [vmem:[%s1 + $0x48] sm:$0xf]
  %v146 = vld [vmem:[%s1 + $0x4c] sm:$0xf]
  %v147 = vld [vmem:[%s1 + $0x50] sm:$0xf]
  %v148 = vld [vmem:[%s1 + $0x54] sm:$0xf]
  %v149 = vld [vmem:[%s1 + $0x58] sm:$0xf]
  %v150 = vld [vmem:[%s1 + $0x5c] sm:$0xf]
  %v151 = vld [vmem:[%s1 + $0x60] sm:$0xf]
  %v152 = vld [vmem:[%s1 + $0x64] sm:$0xf]
  %v153 = vld [vmem:[%s1 + $0x68] sm:$0xf]
  %v154 = vld [vmem:[%s1 + $0x6c] sm:$0xf]
  %v155 = vld [vmem:[%s1 + $0x70] sm:$0xf]
  %v156 = vld [vmem:[%s1 + $0x74] sm:$0xf]
  %v157 = vld [vmem:[%s1 + $0x78] sm:$0xf]
  %v158 = vld [vmem:[%s1 + $0x7c] sm:$0xf]
  %v159 = vld [vmem:[%s1 + $0x80] sm:$0xf]
  %v160 = vld [vmem:[%s1 + $0x84] sm:$0xf]
  %v161 = vld [vmem:[%s1 + $0x88] sm:$0xf]
  %v162 = vld [vmem:[%s1 + $0x8c] sm:$0xf]
  %v163 = vld [vmem:[%s1 + $0x90] sm:$0xf]
  %v164 = vld [vmem:[%s1 + $0x94] sm:$0xf]
  %v165 = vld [vmem:[%s1 + $0x98] sm:$0xf]
  %v166 = vld [vmem:[%s1 + $0x9c] sm:$0xf]
  %v167 = vld [vmem:[%s1 + $0xa0] sm:$0xf]
  %v168 = vld [vmem:[%s1 + $0xa4] sm:$0xf]
  %v169 = vld [vmem:[%s1 + $0xa8] sm:$0xf]
  %v170 = vld [vmem:[%s1 + $0xac] sm:$0xf]
  %v171 = vld [vmem:[%s1 + $0xb0] sm:$0xf]
  %v172 = vld [vmem:[%s1 + $0xb4] sm:$0xf]
  %v173 = vld [vmem:[%s1 + $0xb8] sm:$0xf]
  %v174 = vld [vmem:[%s1 + $0xbc] sm:$0xf]
  %v175 = vld [vmem:[%s1 + $0xc0] sm:$0xf]
  %v176 = vld [vmem:[%s1 + $0xc4] sm:$0xf]
  %v177 = vld [vmem:[%s1 + $0xc8] sm:$0xf]
  %v178 = vld [vmem:[%s1 + $0xcc] sm:$0xf]
  %v179 = vld [vmem:[%s1 + $0xd0] sm:$0xf]
  %v180 = vld [vmem:[%s1 + $0xd4] sm:$0xf]
  %v181 = vld [vmem:[%s1 + $0xd8] sm:$0xf]
  %v182 = vld [vmem:[%s1 + $0xdc] sm:$0xf]
  %v183 = vld [vmem:[%s1 + $0xe0] sm:$0xf]
  %v184 = vld [vmem:[%s1 + $0xe4] sm:$0xf]
  %v185 = vld [vmem:[%s1 + $0xe8] sm:$0xf]
  %v186 = vld [vmem:[%s1 + $0xec] sm:$0xf]
  %v187 = vld [vmem:[%s1 + $0xf0] sm:$0xf]
  %v188 = vld [vmem:[%s1 + $0xf4] sm:$0xf]
  %v189 = vld [vmem:[%s1 + $0xf8] sm:$0xf]
  %v190 = vld [vmem:[%s1 + $0xfc] sm:$0xf]
  %v191 = vld [vmem:[%s1 + $0x100] sm:$0xf]
  %v192 = vld [vmem:[%s1 + $0x104] sm:$0xf]
  %v193 = vld [vmem:[%s1 + $0x108] sm:$0xf]
  %v194 = vld [vmem:[%s1 + $0x10c] sm:$0xf]
  %v195 = vld [vmem:[%s1 + $0x110] sm:$0xf]
  %v196 = vld [vmem:[%s1 + $0x114] sm:$0xf]
  %v197 = vld [vmem:[%s1 + $0x118] sm:$0xf]
  %v198 = vld [vmem:[%s1 + $0x11c] sm:$0xf]
  %v199 = vld [vmem:[%s1 + $0x120] sm:$0xf]
  %v200 = vld [vmem:[%s1 + $0x124] sm:$0xf]
  %v201 = vld [vmem:[%s1 + $0x128] sm:$0xf]
  %v202 = vld [vmem:[%s1 + $0x12c] sm:$0xf]
  %v203 = vld [vmem:[%s1 + $0x130] sm:$0xf]
  %v204 = vld [vmem:[%s1 + $0x134] sm:$0xf]
  %v205 = vld [vmem:[%s1 + $0x138] sm:$0xf]
  %v206 = vld [vmem:[%s1 + $0x13c] sm:$0xf]
  %v207 = vld [vmem:[%s1 + $0x140] sm:$0xf]
  %v208 = vld [vmem:[%s1 + $0x144] sm:$0xf]
  %v209 = vld [vmem:[%s1 + $0x148] sm:$0xf]
  %v210 = vld [vmem:[%s1 + $0x14c] sm:$0xf]
  %v211 = vld [vmem:[%s1 + $0x150] sm:$0xf]
  %v212 = vld [vmem:[%s1 + $0x154] sm:$0xf]
  %v213 = vld [vmem:[%s1 + $0x158] sm:$0xf]
  %v214 = vld [vmem:[%s1 + $0x15c] sm:$0xf]
  %v215 = vld [vmem:[%s1 + $0x160] sm:$0xf]
  %v216 = vld [vmem:[%s1 + $0x164] sm:$0xf]
  %v217 = vld [vmem:[%s1 + $0x168] sm:$0xf]
  %v218 = vld [vmem:[%s1 + $0x16c] sm:$0xf]
  %v219 = vld [vmem:[%s1 + $0x170] sm:$0xf]
  %v220 = vld [vmem:[%s1 + $0x174] sm:$0xf]
  %v221 = vld [vmem:[%s1 + $0x178] sm:$0xf]
  %v222 = vld [vmem:[%s1 + $0x17c] sm:$0xf]
  %v223 = vld [vmem:[%s1 + $0x180] sm:$0xf]
  %v224 = vld [vmem:[%s1 + $0x184] sm:$0xf]
  %v225 = vld [vmem:[%s1 + $0x188] sm:$0xf]
  %v226 = vld [vmem:[%s1 + $0x18c] sm:$0xf]
  %v227 = vld [vmem:[%s1 + $0x190] sm:$0xf]
  %v228 = vld [vmem:[%s1 + $0x194] sm:$0xf]
  %v229 = vld [vmem:[%s1 + $0x198] sm:$0xf]
  %v230 = vld [vmem:[%s1 + $0x19c] sm:$0xf]
  %v231 = vld [vmem:[%s1 + $0x1a0] sm:$0xf]
  %v232 = vld [vmem:[%s1 + $0x1a4] sm:$0xf]
  %v233 = vld [vmem:[%s1 + $0x1a8] sm:$0xf]
  %v234 = vld [vmem:[%s1 + $0x1ac] sm:$0xf]
  %v235 = vld [vmem:[%s1 + $0x1b0] sm:$0xf]
  %v236 = vld [vmem:[%s1 + $0x1b4] sm:$0xf]
  %v237 = vld [vmem:[%s1 + $0x1b8] sm:$0xf]
  %v238 = vld [vmem:[%s1 + $0x1bc] sm:$0xf]
  %v239 = vld [vmem:[%s1 + $0x1c0] sm:$0xf]
  %v240 = vld [vmem:[%s1 + $0x1c4] sm:$0xf]
  %v241 = vld [vmem:[%s1 + $0x1c8] sm:$0xf]
  %v242 = vld [vmem:[%s1 + $0x1cc] sm:$0xf]
  %v243 = vld [vmem:[%s1 + $0x1d0] sm:$0xf]
  %v244 = vld [vmem:[%s1 + $0x1d4] sm:$0xf]
  %v245 = vld [vmem:[%s1 + $0x1d8] sm:$0xf]
  %v246 = vld [vmem:[%s1 + $0x1dc] sm:$0xf]
  %v247 = vld [vmem:[%s1 + $0x1e0] sm:$0xf]
  %v248 = vld [vmem:[%s1 + $0x1e4] sm:$0xf]
  %v249 = vld [vmem:[%s1 + $0x1e8] sm:$0xf]
  %v250 = vld [vmem:[%s1 + $0x1ec] sm:$0xf]
  %v251 = vld [vmem:[%s1 + $0x1f0] sm:$0xf]
  %v252 = vld [vmem:[%s1 + $0x1f4] sm:$0xf]
  %v253 = vld [vmem:[%s1 + $0x1f8] sm:$0xf]
  %v254 = vld [vmem:[%s1 + $0x1fc] sm:$0xf]
  %v255 = vld [vmem:[%s1 + $0x200] sm:$0xf]
  %v256 = vld [vmem:[%s1 + $0x204] sm:$0xf]
  %v257 = vld [vmem:[%s1 + $0x208] sm:$0xf]
  %v258 = vld [vmem:[%s1 + $0x20c] sm:$0xf]
  %v259 = vld [vmem:[%s1 + $0x210] sm:$0xf]
  %v260 = vld [vmem:[%s1 + $0x214] sm:$0xf]
  %v261 = vld [vmem:[%s1 + $0x218] sm:$0xf]
  %v262 = vld [vmem:[%s1 + $0x21c] sm:$0xf]
  %v263 = vld [vmem:[%s1 + $0x220] sm:$0xf]
  %v264 = vld [vmem:[%s1 + $0x224] sm:$0xf]
  %v265 = vld [vmem:[%s1 + $0x228] sm:$0xf]
  %v266 = vld [vmem:[%s1 + $0x22c] sm:$0xf]
  %v267 = vld [vmem:[%s1 + $0x230] sm:$0xf]
  %v268 = vld [vmem:[%s1 + $0x234] sm:$0xf]
  %v269 = vld [vmem:[%s1 + $0x238] sm:$0xf]
  %v270 = vld [vmem:[%s1 + $0x23c] sm:$0xf]
  %v271 = vld [vmem:[%s1 + $0x240] sm:$0xf]
  %v272 = vld [vmem:[%s1 + $0x244] sm:$0xf]
  %v273 = vld [vmem:[%s1 + $0x248] sm:$0xf]
  %v274 = vld [vmem:[%s1 + $0x24c] sm:$0xf]
  %v275 = vld [vmem:[%s1 + $0x250] sm:$0xf]
  %v276 = vld [vmem:[%s1 + $0x254] sm:$0xf]
  %v277 = vld [vmem:[%s1 + $0x258] sm:$0xf]
  %v278 = vld [vmem:[%s1 + $0x25c] sm:$0xf]
  %v279 = vld [vmem:[%s1 + $0x260] sm:$0xf]
  %v280 = vld [vmem:[%s1 + $0x264] sm:$0xf]
  %v281 = vld [vmem:[%s1 + $0x268] sm:$0xf]
  %v282 = vld [vmem:[%s1 + $0x26c] sm:$0xf]
  %v283 = vld [vmem:[%s1 + $0x270] sm:$0xf]
  %v284 = vld [vmem:[%s1 + $0x274] sm:$0xf]
  %v285 = vld [vmem:[%s1 + $0x278] sm:$0xf]
  %v286 = vld [vmem:[%s1 + $0x27c] sm:$0xf]
  %v287 = vld [vmem:[%s1 + $0x280] sm:$0xf]
  %v288 = vld [vmem:[%s1 + $0x284] sm:$0xf]
  %v289 = vld [vmem:[%s1 + $0x288] sm:$0xf]
  %v290 = vld [vmem:[%s1 + $0x28c] sm:$0xf]
  %v291 = vld [vmem:[%s1 + $0x290] sm:$0xf]
  %v292 = vld [vmem:[%s1 + $0x294] sm:$0xf]
  %v293 = vld [vmem:[%s1 + $0x298] sm:$0xf]
  %v294 = vld [vmem:[%s1 + $0x29c] sm:$0xf]
  %v295 = vld [vmem:[%s1 + $0x2a0] sm:$0xf]
  %v296 = vld [vmem:[%s1 + $0x2a4] sm:$0xf]
  %v297 = vld [vmem:[%s1 + $0x2a8] sm:$0xf]
  %v298 = vld [vmem:[%s1 + $0x2ac] sm:$0xf]
  %v299 = vld [vmem:[%s1 + $0x2b0] sm:$0xf]
  %v300 = vld [vmem:[%s1 + $0x2b4] sm:$0xf]
  %v301 = vld [vmem:[%s1 + $0x2b8] sm:$0xf]
  %v302 = vld [vmem:[%s1 + $0x2bc] sm:$0xf]
  %v303 = vld [vmem:[%s1 + $0x2c0] sm:$0xf]
  %v304 = vld [vmem:[%s1 + $0x2c4] sm:$0xf]
  %v305 = vld [vmem:[%s1 + $0x2c8] sm:$0xf]
  %v306 = vld [vmem:[%s1 + $0x2cc] sm:$0xf]
  %v307 = vld [vmem:[%s1 + $0x2d0] sm:$0xf]
  %v308 = vld [vmem:[%s1 + $0x2d4] sm:$0xf]
  %v309 = vld [vmem:[%s1 + $0x2d8] sm:$0xf]
  %v310 = vld [vmem:[%s1 + $0x2dc] sm:$0xf]
  %v311 = vld [vmem:[%s1 + $0x2e0] sm:$0xf]
  %v312 = vld [vmem:[%s1 + $0x2e4] sm:$0xf]
  %v313 = vld [vmem:[%s1 + $0x2e8] sm:$0xf]
  %v314 = vld [vmem:[%s1 + $0x2ec] sm:$0xf]
  %v315 = vld [vmem:[%s1 + $0x2f0] sm:$0xf]
  %v316 = vld [vmem:[%s1 + $0x2f4] sm:$0xf]
  %v317 = vld [vmem:[%s1 + $0x2f8] sm:$0xf]
  %v318 = vld [vmem:[%s1 + $0x2fc] sm:$0xf]
  %v319 = vld [vmem:[%s1 + $0x300] sm:$0xf]
  %v320 = vld [vmem:[%s1 + $0x304] sm:$0xf]
  %v321 = vld [vmem:[%s1 + $0x308] sm:$0xf]
  %v322 = vld [vmem:[%s1 + $0x30c] sm:$0xf]
  %v323 = vld [vmem:[%s1 + $0x310] sm:$0xf]
  %v324 = vld [vmem:[%s1 + $0x314] sm:$0xf]
  %v325 = vld [vmem:[%s1 + $0x318] sm:$0xf]
  %v326 = vld [vmem:[%s1 + $0x31c] sm:$0xf]
  %v327 = vld [vmem:[%s1 + $0x320] sm:$0xf]
  %v328 = vld [vmem:[%s1 + $0x324] sm:$0xf]
  %v329 = vld [vmem:[%s1 + $0x328] sm:$0xf]
  %v330 = vld [vmem:[%s1 + $0x32c] sm:$0xf]
  %v331 = vld [vmem:[%s1 + $0x330] sm:$0xf]
  %v332 = vld [vmem:[%s1 + $0x334] sm:$0xf]
  %v333 = vld [vmem:[%s1 + $0x338] sm:$0xf]
  %v334 = vld [vmem:[%s1 + $0x33c] sm:$0xf]
  %v335 = vld [vmem:[%s1 + $0x340] sm:$0xf]
  %v336 = vld [vmem:[%s1 + $0x344] sm:$0xf]
  %v337 = vld [vmem:[%s1 + $0x348] sm:$0xf]
  %v338 = vld [vmem:[%s1 + $0x34c] sm:$0xf]
  %v339 = vld [vmem:[%s1 + $0x350] sm:$0xf]
  %v340 = vld [vmem:[%s1 + $0x354] sm:$0xf]
  %v341 = vld [vmem:[%s1 + $0x358] sm:$0xf]
  %v342 = vld [vmem:[%s1 + $0x35c] sm:$0xf]
  %v343 = vld [vmem:[%s1 + $0x360] sm:$0xf]
  %v344 = vld [vmem:[%s1 + $0x364] sm:$0xf]
  %v345 = vld [vmem:[%s1 + $0x368] sm:$0xf]
  %v346 = vld [vmem:[%s1 + $0x36c] sm:$0xf]
  %v347 = vld [vmem:[%s1 + $0x370] sm:$0xf]
  %v348 = vld [vmem:[%s1 + $0x374] sm:$0xf]
  %v349 = vld [vmem:[%s1 + $0x378] sm:$0xf]
  %v350 = vld [vmem:[%s1 + $0x37c] sm:$0xf]
  %v351 = vld [vmem:[%s1 + $0x380] sm:$0xf]
  %v352 = vld [vmem:[%s1 + $0x384] sm:$0xf]
  %v353 = vld [vmem:[%s1 + $0x388] sm:$0xf]
  %v354 = vld [vmem:[%s1 + $0x38c] sm:$0xf]
  %v355 = vld [vmem:[%s1 + $0x390] sm:$0xf]
  %v356 = vld [vmem:[%s1 + $0x394] sm:$0xf]
  %v357 = vld [vmem:[%s1 + $0x398] sm:$0xf]
  %v358 = vld [vmem:[%s1 + $0x39c] sm:$0xf]
  %v359 = vld [vmem:[%s1 + $0x3a0] sm:$0xf]
  %v360 = vld [vmem:[%s1 + $0x3a4] sm:$0xf]
  %v361 = vld [vmem:[%s1 + $0x3a8] sm:$0xf]
  %v362 = vld [vmem:[%s1 + $0x3ac] sm:$0xf]
  %v363 = vld [vmem:[%s1 + $0x3b0] sm:$0xf]
  %v364 = vld [vmem:[%s1 + $0x3b4] sm:$0xf]
  %v365 = vld [vmem:[%s1 + $0x3b8] sm:$0xf]
  %v366 = vld [vmem:[%s1 + $0x3bc] sm:$0xf]
  %v367 = vld [vmem:[%s1 + $0x3c0] sm:$0xf]
  %v368 = vld [vmem:[%s1 + $0x3c4] sm:$0xf]
  %v369 = vld [vmem:[%s1 + $0x3c8] sm:$0xf]
  %v370 = vld [vmem:[%s1 + $0x3cc] sm:$0xf]
  %v371 = vld [vmem:[%s1 + $0x3d0] sm:$0xf]
  %v372 = vld [vmem:[%s1 + $0x3d4] sm:$0xf]
  %v373 = vld [vmem:[%s1 + $0x3d8] sm:$0xf]
  %v374 = vld [vmem:[%s1 + $0x3dc] sm:$0xf]
  %v375 = vld [vmem:[%s1 + $0x3e0] sm:$0xf]
  %v376 = vld [vmem:[%s1 + $0x3e4] sm:$0xf]
  %v377 = vld [vmem:[%s1 + $0x3e8] sm:$0xf]
  %v378 = vld [vmem:[%s1 + $0x3ec] sm:$0xf]
  %v379 = vld [vmem:[%s1 + $0x3f0] sm:$0xf]
  %v380 = vld [vmem:[%s1 + $0x3f4] sm:$0xf]
  %v381 = vld [vmem:[%s1 + $0x3f8] sm:$0xf]
  %v382 = vld [vmem:[%s1 + $0x3fc] sm:$0xf]
  %v383 = vld [vmem:[%s1 + $0x400] sm:$0xf]
  %v384 = vld [vmem:[%s1 + $0x404] sm:$0xf]
  %v385 = vld [vmem:[%s1 + $0x408] sm:$0xf]
  %v386 = vld [vmem:[%s1 + $0x40c] sm:$0xf]
  %v387 = vld [vmem:[%s1 + $0x410] sm:$0xf]
  %v388 = vld [vmem:[%s1 + $0x414] sm:$0xf]
  %v389 = vld [vmem:[%s1 + $0x418] sm:$0xf]
  %v390 = vld [vmem:[%s1 + $0x41c] sm:$0xf]
  %v391 = vld [vmem:[%s1 + $0x420] sm:$0xf]
  %v392 = vld [vmem:[%s1 + $0x424] sm:$0xf]
  %v393 = vld [vmem:[%s1 + $0x428] sm:$0xf]
  %v394 = vld [vmem:[%s1 + $0x42c] sm:$0xf]
  %v395 = vld [vmem:[%s1 + $0x430] sm:$0xf]
  %v396 = vld [vmem:[%s1 + $0x434] sm:$0xf]
  %v397 = vld [vmem:[%s1 + $0x438] sm:$0xf]
  %v398 = vld [vmem:[%s1 + $0x43c] sm:$0xf]
  %v399 = vld [vmem:[%s1 + $0x440] sm:$0xf]
  %v400 = vld [vmem:[%s1 + $0x444] sm:$0xf]
  %v401 = vld [vmem:[%s1 + $0x448] sm:$0xf]
  %v402 = vld [vmem:[%s1 + $0x44c] sm:$0xf]
  %v403 = vld [vmem:[%s1 + $0x450] sm:$0xf]
  %v404 = vld [vmem:[%s1 + $0x454] sm:$0xf]
  %v405 = vld [vmem:[%s1 + $0x458] sm:$0xf]
  %v406 = vld [vmem:[%s1 + $0x45c] sm:$0xf]
  %v407 = vld [vmem:[%s1 + $0x460] sm:$0xf]
  %v408 = vld [vmem:[%s1 + $0x464] sm:$0xf]
  %v409 = vld [vmem:[%s1 + $0x468] sm:$0xf]
  %v410 = vld [vmem:[%s1 + $0x46c] sm:$0xf]
  %v411 = vld [vmem:[%s1 + $0x470] sm:$0xf]
  %v412 = vld [vmem:[%s1 + $0x474] sm:$0xf]
  %v413 = vld [vmem:[%s1 + $0x478] sm:$0xf]
  %v414 = vld [vmem:[%s1 + $0x47c] sm:$0xf]
  %v415 = vld [vmem:[%s1 + $0x480] sm:$0xf]
  %v416 = vld [vmem:[%s1 + $0x484] sm:$0xf]
  %v417 = vld [vmem:[%s1 + $0x488] sm:$0xf]
  %v418 = vld [vmem:[%s1 + $0x48c] sm:$0xf]
  %v419 = vld [vmem:[%s1 + $0x490] sm:$0xf]
  %v420 = vld [vmem:[%s1 + $0x494] sm:$0xf]
  %v421 = vld [vmem:[%s1 + $0x498] sm:$0xf]
  %v422 = vld [vmem:[%s1 + $0x49c] sm:$0xf]
  %v423 = vld [vmem:[%s1 + $0x4a0] sm:$0xf]
  %v424 = vld [vmem:[%s1 + $0x4a4] sm:$0xf]
  %v425 = vld [vmem:[%s1 + $0x4a8] sm:$0xf]
  %v426 = vld [vmem:[%s1 + $0x4ac] sm:$0xf]
  %v427 = vld [vmem:[%s1 + $0x4b0] sm:$0xf]
  %v428 = vld [vmem:[%s1 + $0x4b4] sm:$0xf]
  %v429 = vld [vmem:[%s1 + $0x4b8] sm:$0xf]
  %v430 = vld [vmem:[%s1 + $0x4bc] sm:$0xf]
  %v431 = vld [vmem:[%s1 + $0x4c0] sm:$0xf]
  %v432 = vld [vmem:[%s1 + $0x4c4] sm:$0xf]
  %v433 = vld [vmem:[%s1 + $0x4c8] sm:$0xf]
  %v434 = vld [vmem:[%s1 + $0x4cc] sm:$0xf]
  %v435 = vld [vmem:[%s1 + $0x4d0] sm:$0xf]
  %v436 = vld [vmem:[%s1 + $0x4d4] sm:$0xf]
  %v437 = vld [vmem:[%s1 + $0x4d8] sm:$0xf]
  %v438 = vld [vmem:[%s1 + $0x4dc] sm:$0xf]
  %v439 = vld [vmem:[%s1 + $0x4e0] sm:$0xf]
  %v440 = vld [vmem:[%s1 + $0x4e4] sm:$0xf]
  %v441 = vld [vmem:[%s1 + $0x4e8] sm:$0xf]
  %v442 = vld [vmem:[%s1 + $0x4ec] sm:$0xf]
  %v443 = vld [vmem:[%s1 + $0x4f0] sm:$0xf]
  %v444 = vld [vmem:[%s1 + $0x4f4] sm:$0xf]
  %v445 = vld [vmem:[%s1 + $0x4f8] sm:$0xf]
  %v446 = vld [vmem:[%s1 + $0x4fc] sm:$0xf]
  %v447 = vld [vmem:[%s1 + $0x500] sm:$0xf]
  %v448 = vld [vmem:[%s1 + $0x504] sm:$0xf]
  %v449 = vld [vmem:[%s1 + $0x508] sm:$0xf]
  %v450 = vld [vmem:[%s1 + $0x50c] sm:$0xf]
  %v451 = vld [vmem:[%s1 + $0x510] sm:$0xf]
  %v452 = vld [vmem:[%s1 + $0x514] sm:$0xf]
  %v453 = vld [vmem:[%s1 + $0x518] sm:$0xf]
  %v454 = vld [vmem:[%s1 + $0x51c] sm:$0xf]
  %v455 = vld [vmem:[%s1 + $0x520] sm:$0xf]
  %v456 = vld [vmem:[%s1 + $0x524] sm:$0xf]
  %v457 = vld [vmem:[%s1 + $0x528] sm:$0xf]
  %v458 = vld [vmem:[%s1 + $0x52c] sm:$0xf]
  %v459 = vld [vmem:[%s1 + $0x530] sm:$0xf]
  %v460 = vld [vmem:[%s1 + $0x534] sm:$0xf]
  %v461 = vld [vmem:[%s1 + $0x538] sm:$0xf]
  %v462 = vld [vmem:[%s1 + $0x53c] sm:$0xf]
  %v463 = vld [vmem:[%s1 + $0x540] sm:$0xf]
  %v464 = vld [vmem:[%s1 + $0x544] sm:$0xf]
  %v465 = vld [vmem:[%s1 + $0x548] sm:$0xf]
  %v466 = vld [vmem:[%s1 + $0x54c] sm:$0xf]
  %v467 = vld [vmem:[%s1 + $0x550] sm:$0xf]
  %v468 = vld [vmem:[%s1 + $0x554] sm:$0xf]
  %v469 = vld [vmem:[%s1 + $0x558] sm:$0xf]
  %v470 = vld [vmem:[%s1 + $0x55c] sm:$0xf]
  %v471 = vld [vmem:[%s1 + $0x560] sm:$0xf]
  %v472 = vld [vmem:[%s1 + $0x564] sm:$0xf]
  %v473 = vld [vmem:[%s1 + $0x568] sm:$0xf]
  %v474 = vld [vmem:[%s1 + $0x56c] sm:$0xf]
  %v475 = vld [vmem:[%s1 + $0x570] sm:$0xf]
  %v476 = vld [vmem:[%s1 + $0x574] sm:$0xf]
  %v477 = vld [vmem:[%s1 + $0x578] sm:$0xf]
  %v478 = vld [vmem:[%s1 + $0x57c] sm:$0xf]
  %v479 = vld [vmem:[%s1 + $0x580] sm:$0xf]
  %v480 = vld [vmem:[%s1 + $0x584] sm:$0xf]
  %v481 = vld [vmem:[%s1 + $0x588] sm:$0xf]
  %v482 = vld [vmem:[%s1 + $0x58c] sm:$0xf]
  %v483 = vld [vmem:[%s1 + $0x590] sm:$0xf]
  %v484 = vld [vmem:[%s1 + $0x594] sm:$0xf]
  %v485 = vld [vmem:[%s1 + $0x598] sm:$0xf]
  %v486 = vld [vmem:[%s1 + $0x59c] sm:$0xf]
  %v487 = vld [vmem:[%s1 + $0x5a0] sm:$0xf]
  %v488 = vld [vmem:[%s1 + $0x5a4] sm:$0xf]
  %v489 = vld [vmem:[%s1 + $0x5a8] sm:$0xf]
  %v490 = vld [vmem:[%s1 + $0x5ac] sm:$0xf]
  %v491 = vld [vmem:[%s1 + $0x5b0] sm:$0xf]
  %v492 = vld [vmem:[%s1 + $0x5b4] sm:$0xf]
  %v493 = vld [vmem:[%s1 + $0x5b8] sm:$0xf]
  %v494 = vld [vmem:[%s1 + $0x5bc] sm:$0xf]
  %v495 = vld [vmem:[%s1 + $0x5c0] sm:$0xf]
  %v496 = vld [vmem:[%s1 + $0x5c4] sm:$0xf]
  %v497 = vld [vmem:[%s1 + $0x5c8] sm:$0xf]
  %v498 = vld [vmem:[%s1 + $0x5cc] sm:$0xf]
  %v499 = vld [vmem:[%s1 + $0x5d0] sm:$0xf]
  %v500 = vld [vmem:[%s1 + $0x5d4] sm:$0xf]
  %v501 = vld [vmem:[%s1 + $0x5d8] sm:$0xf]
  %v502 = vld [vmem:[%s1 + $0x5dc] sm:$0xf]
  %v503 = vld [vmem:[%s1 + $0x5e0] sm:$0xf]
  %v504 = vld [vmem:[%s1 + $0x5e4] sm:$0xf]
  %v505 = vld [vmem:[%s1 + $0x5e8] sm:$0xf]
  %v506 = vld [vmem:[%s1 + $0x5ec] sm:$0xf]
  %v507 = vld [vmem:[%s1 + $0x5f0] sm:$0xf]
  %v508 = vld [vmem:[%s1 + $0x5f4] sm:$0xf]
  %v509 = vld [vmem:[%s1 + $0x5f8] sm:$0xf]
  %v510 = vld [vmem:[%s1 + $0x5fc] sm:$0xf]
  %v511 = vld [vmem:[%s1 + $0x600] sm:$0xf]
  %v512 = vld [vmem:[%s1 + $0x604] sm:$0xf]
  %v513 = vld [vmem:[%s1 + $0x608] sm:$0xf]
  %v514 = vld [vmem:[%s1 + $0x60c] sm:$0xf]
  %v515 = vld [vmem:[%s1 + $0x610] sm:$0xf]
  %v516 = vld [vmem:[%s1 + $0x614] sm:$0xf]
  %v517 = vld [vmem:[%s1 + $0x618] sm:$0xf]
  %v518 = vld [vmem:[%s1 + $0x61c] sm:$0xf]
  %v519 = vld [vmem:[%s1 + $0x620] sm:$0xf]
  %v520 = vld [vmem:[%s1 + $0x624] sm:$0xf]
  %v521 = vld [vmem:[%s1 + $0x628] sm:$0xf]
  %v522 = vld [vmem:[%s1 + $0x62c] sm:$0xf]
  %v523 = vld [vmem:[%s1 + $0x630] sm:$0xf]
  %v524 = vld [vmem:[%s1 + $0x634] sm:$0xf]
  %v525 = vld [vmem:[%s1 + $0x638] sm:$0xf]
  %v526 = vld [vmem:[%s1 + $0x63c] sm:$0xf]
  %v527 = vld [vmem:[%s1 + $0x640] sm:$0xf]
  %v528 = vld [vmem:[%s1 + $0x644] sm:$0xf]
  %v529 = vld [vmem:[%s1 + $0x648] sm:$0xf]
  %v530 = vld [vmem:[%s1 + $0x64c] sm:$0xf]
  %v531 = vld [vmem:[%s1 + $0x650] sm:$0xf]
  %v532 = vld [vmem:[%s1 + $0x654] sm:$0xf]
  %v533 = vld [vmem:[%s1 + $0x658] sm:$0xf]
  %v534 = vld [vmem:[%s1 + $0x65c] sm:$0xf]
  %v535 = vld [vmem:[%s1 + $0x660] sm:$0xf]
  %v536 = vld [vmem:[%s1 + $0x664] sm:$0xf]
  %v537 = vld [vmem:[%s1 + $0x668] sm:$0xf]
  %v538 = vld [vmem:[%s1 + $0x66c] sm:$0xf]
  %v539 = vld [vmem:[%s1 + $0x670] sm:$0xf]
  %v540 = vld [vmem:[%s1 + $0x674] sm:$0xf]
  %v541 = vld [vmem:[%s1 + $0x678] sm:$0xf]
  %v542 = vld [vmem:[%s1 + $0x67c] sm:$0xf]
  %v543 = vld [vmem:[%s1 + $0x680] sm:$0xf]
  %v544 = vld [vmem:[%s1 + $0x684] sm:$0xf]
  %v545 = vld [vmem:[%s1 + $0x688] sm:$0xf]
  %v546 = vld [vmem:[%s1 + $0x68c] sm:$0xf]
  %v547 = vld [vmem:[%s1 + $0x690] sm:$0xf]
  %v548 = vld [vmem:[%s1 + $0x694] sm:$0xf]
  %v549 = vld [vmem:[%s1 + $0x698] sm:$0xf]
  %v550 = vld [vmem:[%s1 + $0x69c] sm:$0xf]
  %v551 = vld [vmem:[%s1 + $0x6a0] sm:$0xf]
  %v552 = vld [vmem:[%s1 + $0x6a4] sm:$0xf]
  %v553 = vld [vmem:[%s1 + $0x6a8] sm:$0xf]
  %v554 = vld [vmem:[%s1 + $0x6ac] sm:$0xf]
  %v555 = vld [vmem:[%s1 + $0x6b0] sm:$0xf]
  %v556 = vld [vmem:[%s1 + $0x6b4] sm:$0xf]
  %v557 = vld [vmem:[%s1 + $0x6b8] sm:$0xf]
  %v558 = vld [vmem:[%s1 + $0x6bc] sm:$0xf]
  %v559 = vld [vmem:[%s1 + $0x6c0] sm:$0xf]
  %v560 = vld [vmem:[%s1 + $0x6c4] sm:$0xf]
  %v561 = vld [vmem:[%s1 + $0x6c8] sm:$0xf]
  %v562 = vld [vmem:[%s1 + $0x6cc] sm:$0xf]
  %v563 = vld [vmem:[%s1 + $0x6d0] sm:$0xf]
  %v564 = vld [vmem:[%s1 + $0x6d4] sm:$0xf]
  %v565 = vld [vmem:[%s1 + $0x6d8] sm:$0xf]
  %v566 = vld [vmem:[%s1 + $0x6dc] sm:$0xf]
  %v567 = vld [vmem:[%s1 + $0x6e0] sm:$0xf]
  %v568 = vld [vmem:[%s1 + $0x6e4] sm:$0xf]
  %v569 = vld [vmem:[%s1 + $0x6e8] sm:$0xf]
  %v570 = vld [vmem:[%s1 + $0x6ec] sm:$0xf]
  %v571 = vld [vmem:[%s1 + $0x6f0] sm:$0xf]
  %v572 = vld [vmem:[%s1 + $0x6f4] sm:$0xf]
  %v573 = vld [vmem:[%s1 + $0x6f8] sm:$0xf]
  %v574 = vld [vmem:[%s1 + $0x6fc] sm:$0xf]
  %v575 = vld [vmem:[%s1 + $0x700] sm:$0xf]
  %v576 = vld [vmem:[%s1 + $0x704] sm:$0xf]
  %v577 = vld [vmem:[%s1 + $0x708] sm:$0xf]
  %v578 = vld [vmem:[%s1 + $0x70c] sm:$0xf]
  %v579 = vld [vmem:[%s1 + $0x710] sm:$0xf]
  %v580 = vld [vmem:[%s1 + $0x714] sm:$0xf]
  %v581 = vld [vmem:[%s1 + $0x718] sm:$0xf]
  %v582 = vld [vmem:[%s1 + $0x71c] sm:$0xf]
  %v583 = vld [vmem:[%s1 + $0x720] sm:$0xf]
  %v584 = vld [vmem:[%s1 + $0x724] sm:$0xf]
  %v585 = vld [vmem:[%s1 + $0x728] sm:$0xf]
  %v586 = vld [vmem:[%s1 + $0x72c] sm:$0xf]
  %v587 = vld [vmem:[%s1 + $0x730] sm:$0xf]
  %v588 = vld [vmem:[%s1 + $0x734] sm:$0xf]
  %v589 = vld [vmem:[%s1 + $0x738] sm:$0xf]
  %v590 = vld [vmem:[%s1 + $0x73c] sm:$0xf]
  %v591 = vld [vmem:[%s1 + $0x740] sm:$0xf]
  %v592 = vld [vmem:[%s1 + $0x744] sm:$0xf]
  %v593 = vld [vmem:[%s1 + $0x748] sm:$0xf]
  %v594 = vld [vmem:[%s1 + $0x74c] sm:$0xf]
  %v595 = vld [vmem:[%s1 + $0x750] sm:$0xf]
  %v596 = vld [vmem:[%s1 + $0x754] sm:$0xf]
  %v597 = vld [vmem:[%s1 + $0x758] sm:$0xf]
  %v598 = vld [vmem:[%s1 + $0x75c] sm:$0xf]
  %v599 = vld [vmem:[%s1 + $0x760] sm:$0xf]
  %v600 = vld [vmem:[%s1 + $0x764] sm:$0xf]
  %v601 = vld [vmem:[%s1 + $0x768] sm:$0xf]
  %v602 = vld [vmem:[%s1 + $0x76c] sm:$0xf]
  %v603 = vld [vmem:[%s1 + $0x770] sm:$0xf]
  %v604 = vld [vmem:[%s1 + $0x774] sm:$0xf]
  %v605 = vld [vmem:[%s1 + $0x778] sm:$0xf]
  %v606 = vld [vmem:[%s1 + $0x77c] sm:$0xf]
  %v607 = vld [vmem:[%s1 + $0x780] sm:$0xf]
  %v608 = vld [vmem:[%s1 + $0x784] sm:$0xf]
  %v609 = vld [vmem:[%s1 + $0x788] sm:$0xf]
  %v610 = vld [vmem:[%s1 + $0x78c] sm:$0xf]
  %v611 = vld [vmem:[%s1 + $0x790] sm:$0xf]
  %v612 = vld [vmem:[%s1 + $0x794] sm:$0xf]
  %v613 = vld [vmem:[%s1 + $0x798] sm:$0xf]
  %v614 = vld [vmem:[%s1 + $0x79c] sm:$0xf]
  %v615 = vld [vmem:[%s1 + $0x7a0] sm:$0xf]
  %v616 = vld [vmem:[%s1 + $0x7a4] sm:$0xf]
  %v617 = vld [vmem:[%s1 + $0x7a8] sm:$0xf]
  %v618 = vld [vmem:[%s1 + $0x7ac] sm:$0xf]
  %v619 = vld [vmem:[%s1 + $0x7b0] sm:$0xf]
  %v620 = vld [vmem:[%s1 + $0x7b4] sm:$0xf]
  %v621 = vld [vmem:[%s1 + $0x7b8] sm:$0xf]
  %v622 = vld [vmem:[%s1 + $0x7bc] sm:$0xf]
  %v623 = vld [vmem:[%s1 + $0x7c0] sm:$0xf]
  %v624 = vld [vmem:[%s1 + $0x7c4] sm:$0xf]
  %v625 = vld [vmem:[%s1 + $0x7c8] sm:$0xf]
  %v626 = vld [vmem:[%s1 + $0x7cc] sm:$0xf]
  %v627 = vld [vmem:[%s1 + $0x7d0] sm:$0xf]
  %v628 = vld [vmem:[%s1 + $0x7d4] sm:$0xf]
  %v629 = vld [vmem:[%s1 + $0x7d8] sm:$0xf]
  %v630 = vld [vmem:[%s1 + $0x7dc] sm:$0xf]
  %v631 = vld [vmem:[%s1 + $0x7e0] sm:$0xf]
  %v632 = vld [vmem:[%s1 + $0x7e4] sm:$0xf]
  %v633 = vld [vmem:[%s1 + $0x7e8] sm:$0xf]
  %v634 = vld [vmem:[%s1 + $0x7ec] sm:$0xf]
  %v635 = vld [vmem:[%s1 + $0x7f0] sm:$0xf]
  %v636 = vld [vmem:[%s1 + $0x7f4] sm:$0xf]
  %v637 = vld [vmem:[%s1 + $0x7f8] sm:$0xf]
  %v638 = vld [vmem:[%s1 + $0x7fc] sm:$0xf]
  %v639 = vld [vmem:[%s1 + $0x800] sm:$0xf]
  %v640 = vld [vmem:[%s1 + $0x804] sm:$0xf]
  %v641 = vld [vmem:[%s1 + $0x808] sm:$0xf]
  %v642 = vld [vmem:[%s1 + $0x80c] sm:$0xf]
  %v643 = vld [vmem:[%s1 + $0x810] sm:$0xf]
  %v644 = vld [vmem:[%s1 + $0x814] sm:$0xf]
  %v645 = vld [vmem:[%s1 + $0x818] sm:$0xf]
  %v646 = vld [vmem:[%s1 + $0x81c] sm:$0xf]
  %v647 = vld [vmem:[%s1 + $0x820] sm:$0xf]
  %v648 = vld [vmem:[%s1 + $0x824] sm:$0xf]
  %v649 = vld [vmem:[%s1 + $0x828] sm:$0xf]
  %v650 = vld [vmem:[%s1 + $0x82c] sm:$0xf]
  %v651 = vld [vmem:[%s1 + $0x830] sm:$0xf]
  %v652 = vld [vmem:[%s1 + $0x834] sm:$0xf]
  %v653 = vld [vmem:[%s1 + $0x838] sm:$0xf]
  %v654 = vld [vmem:[%s1 + $0x83c] sm:$0xf]
  %v655 = vld [vmem:[%s1 + $0x840] sm:$0xf]
  %v656 = vld [vmem:[%s1 + $0x844] sm:$0xf]
  %v657 = vld [vmem:[%s1 + $0x848] sm:$0xf]
  %v658 = vld [vmem:[%s1 + $0x84c] sm:$0xf]
  %v659 = vld [vmem:[%s1 + $0x850] sm:$0xf]
  %v660 = vld [vmem:[%s1 + $0x854] sm:$0xf]
  %v661 = vld [vmem:[%s1 + $0x858] sm:$0xf]
  %v662 = vld [vmem:[%s1 + $0x85c] sm:$0xf]
  %v663 = vld [vmem:[%s1 + $0x860] sm:$0xf]
  %v664 = vld [vmem:[%s1 + $0x864] sm:$0xf]
  %v665 = vld [vmem:[%s1 + $0x868] sm:$0xf]
  %v666 = vld [vmem:[%s1 + $0x86c] sm:$0xf]
  %v667 = vld [vmem:[%s1 + $0x870] sm:$0xf]
  %v668 = vld [vmem:[%s1 + $0x874] sm:$0xf]
  %v669 = vld [vmem:[%s1 + $0x878] sm:$0xf]
  %v670 = vld [vmem:[%s1 + $0x87c] sm:$0xf]
  %v671 = vld [vmem:[%s1 + $0x880] sm:$0xf]
  %v672 = vld [vmem:[%s1 + $0x884] sm:$0xf]
  %v673 = vld [vmem:[%s1 + $0x888] sm:$0xf]
  %v674 = vld [vmem:[%s1 + $0x88c] sm:$0xf]
  %v675 = vld [vmem:[%s1 + $0x890] sm:$0xf]
  %v676 = vld [vmem:[%s1 + $0x894] sm:$0xf]
  %v677 = vld [vmem:[%s1 + $0x898] sm:$0xf]
  %v678 = vld [vmem:[%s1 + $0x89c] sm:$0xf]
  %v679 = vld [vmem:[%s1 + $0x8a0] sm:$0xf]
  %v680 = vld [vmem:[%s1 + $0x8a4] sm:$0xf]
  %v681 = vld [vmem:[%s1 + $0x8a8] sm:$0xf]
  %v682 = vld [vmem:[%s1 + $0x8ac] sm:$0xf]
  %v683 = vld [vmem:[%s1 + $0x8b0] sm:$0xf]
  %v684 = vld [vmem:[%s1 + $0x8b4] sm:$0xf]
  %v685 = vld [vmem:[%s1 + $0x8b8] sm:$0xf]
  %v686 = vld [vmem:[%s1 + $0x8bc] sm:$0xf]
  %v687 = vld [vmem:[%s1 + $0x8c0] sm:$0xf]
  %v688 = vld [vmem:[%s1 + $0x8c4] sm:$0xf]
  %v689 = vld [vmem:[%s1 + $0x8c8] sm:$0xf]
  %v690 = vld [vmem:[%s1 + $0x8cc] sm:$0xf]
  %v691 = vld [vmem:[%s1 + $0x8d0] sm:$0xf]
  %v692 = vld [vmem:[%s1 + $0x8d4] sm:$0xf]
  %v693 = vld [vmem:[%s1 + $0x8d8] sm:$0xf]
  %v694 = vld [vmem:[%s1 + $0x8dc] sm:$0xf]
  %v695 = vld [vmem:[%s1 + $0x8e0] sm:$0xf]
  %v696 = vld [vmem:[%s1 + $0x8e4] sm:$0xf]
  %v697 = vld [vmem:[%s1 + $0x8e8] sm:$0xf]
  %v698 = vld [vmem:[%s1 + $0x8ec] sm:$0xf]
  %v699 = vld [vmem:[%s1 + $0x8f0] sm:$0xf]
  %v700 = vld [vmem:[%s1 + $0x8f4] sm:$0xf]
  %v701 = vld [vmem:[%s1 + $0x8f8] sm:$0xf]
  %v702 = vld [vmem:[%s1 + $0x8fc] sm:$0xf]
  %v703 = vld [vmem:[%s1 + $0x900] sm:$0xf]
  %v704 = vld [vmem:[%s1 + $0x904] sm:$0xf]
  %v705 = vld [vmem:[%s1 + $0x908] sm:$0xf]
  %v706 = vld [vmem:[%s1 + $0x90c] sm:$0xf]
  %v707 = vld [vmem:[%s1 + $0x910] sm:$0xf]
  %v708 = vld [vmem:[%s1 + $0x914] sm:$0xf]
  %v709 = vld [vmem:[%s1 + $0x918] sm:$0xf]
  %v710 = vld [vmem:[%s1 + $0x91c] sm:$0xf]
  %v711 = vld [vmem:[%s1 + $0x920] sm:$0xf]
  %v712 = vld [vmem:[%s1 + $0x924] sm:$0xf]
  %v713 = vld [vmem:[%s1 + $0x928] sm:$0xf]
  %v714 = vld [vmem:[%s1 + $0x92c] sm:$0xf]
  %v715 = vld [vmem:[%s1 + $0x930] sm:$0xf]
  %v716 = vld [vmem:[%s1 + $0x934] sm:$0xf]
  %v717 = vld [vmem:[%s1 + $0x938] sm:$0xf]
  %v718 = vld [vmem:[%s1 + $0x93c] sm:$0xf]
  %v719 = vld [vmem:[%s1 + $0x940] sm:$0xf]
  %v720 = vld [vmem:[%s1 + $0x944] sm:$0xf]
  %v721 = vld [vmem:[%s1 + $0x948] sm:$0xf]
  %v722 = vld [vmem:[%s1 + $0x94c] sm:$0xf]
  %v723 = vld [vmem:[%s1 + $0x950] sm:$0xf]
  %v724 = vld [vmem:[%s1 + $0x954] sm:$0xf]
  %v725 = vld [vmem:[%s1 + $0x958] sm:$0xf]
  %v726 = vld [vmem:[%s1 + $0x95c] sm:$0xf]
  %v727 = vld [vmem:[%s1 + $0x960] sm:$0xf]
  %v728 = vld [vmem:[%s1 + $0x964] sm:$0xf]
  %v729 = vld [vmem:[%s1 + $0x968] sm:$0xf]
  %v730 = vld [vmem:[%s1 + $0x96c] sm:$0xf]
  %v731 = vld [vmem:[%s1 + $0x970] sm:$0xf]
  %v732 = vld [vmem:[%s1 + $0x974] sm:$0xf]
  %v733 = vld [vmem:[%s1 + $0x978] sm:$0xf]
  %v734 = vld [vmem:[%s1 + $0x97c] sm:$0xf]
  %v735 = vld [vmem:[%s2] sm:$0x1]
  %v737 = vlaneseq
  %v738 = vshrl.u32 %v737, 7
  %v739 = vsub.s32 0, %v738
  %v740 = vrot.slane %v735, %v739
  %v1350 = vunpack.c.l.b16 %v127
  %v1351 = vunpack.c.l.b16 %v128
  %v1352 = vunpack.c.l.b16 %v129
  %v1353 = vunpack.c.l.b16 %v130
  %v1354 = vunpack.c.l.b16 %v131
  %v1355 = vunpack.c.l.b16 %v132
  %v1356 = vunpack.c.l.b16 %v133
  %v1357 = vunpack.c.l.b16 %v134
  %v1358 = vunpack.c.l.b16 %v135
  %v1359 = vunpack.c.l.b16 %v136
  %v1360 = vunpack.c.l.b16 %v137
  %v1361 = vunpack.c.l.b16 %v138
  %v1362 = vunpack.c.l.b16 %v139
  %v1363 = vunpack.c.l.b16 %v140
  %v1364 = vunpack.c.l.b16 %v141
  %v1365 = vunpack.c.l.b16 %v142
  %v1366 = vunpack.c.l.b16 %v143
  %v1367 = vunpack.c.l.b16 %v144
  %v1368 = vunpack.c.l.b16 %v145
  %v1369 = vunpack.c.l.b16 %v146
  %v1370 = vunpack.c.l.b16 %v147
  %v1371 = vunpack.c.l.b16 %v148
  %v1372 = vunpack.c.l.b16 %v149
  %v1373 = vunpack.c.l.b16 %v150
  %v1374 = vunpack.c.l.b16 %v151
  %v1375 = vunpack.c.l.b16 %v152
  %v1376 = vunpack.c.l.b16 %v153
  %v1377 = vunpack.c.l.b16 %v154
  %v1378 = vunpack.c.l.b16 %v155
  %v1379 = vunpack.c.l.b16 %v156
  %v1380 = vunpack.c.l.b16 %v157
  %v1381 = vunpack.c.l.b16 %v158
  %v1382 = vunpack.c.l.b16 %v159
  %v1383 = vunpack.c.l.b16 %v160
  %v1384 = vunpack.c.l.b16 %v161
  %v1385 = vunpack.c.l.b16 %v162
  %v1386 = vunpack.c.l.b16 %v163
  %v1387 = vunpack.c.l.b16 %v164
  %v1388 = vunpack.c.l.b16 %v165
  %v1389 = vunpack.c.l.b16 %v166
  %v1390 = vunpack.c.l.b16 %v167
  %v1391 = vunpack.c.l.b16 %v168
  %v1392 = vunpack.c.l.b16 %v169
  %v1393 = vunpack.c.l.b16 %v170
  %v1394 = vunpack.c.l.b16 %v171
  %v1395 = vunpack.c.l.b16 %v172
  %v1396 = vunpack.c.l.b16 %v173
  %v1397 = vunpack.c.l.b16 %v174
  %v1398 = vunpack.c.l.b16 %v175
  %v1399 = vunpack.c.l.b16 %v176
  %v1400 = vunpack.c.l.b16 %v177
  %v1401 = vunpack.c.l.b16 %v178
  %v1402 = vunpack.c.l.b16 %v179
  %v1403 = vunpack.c.l.b16 %v180
  %v1404 = vunpack.c.l.b16 %v181
  %v1405 = vunpack.c.l.b16 %v182
  %v1406 = vunpack.c.l.b16 %v183
  %v1407 = vunpack.c.l.b16 %v184
  %v1408 = vunpack.c.l.b16 %v185
  %v1409 = vunpack.c.l.b16 %v186
  %v1410 = vunpack.c.l.b16 %v187
  %v1411 = vunpack.c.l.b16 %v188
  %v1412 = vunpack.c.l.b16 %v189
  %v1413 = vunpack.c.l.b16 %v190
  %v1414 = vunpack.c.l.b16 %v191
  %v1415 = vunpack.c.l.b16 %v192
  %v1416 = vunpack.c.l.b16 %v193
  %v1417 = vunpack.c.l.b16 %v194
  %v1418 = vunpack.c.l.b16 %v195
  %v1419 = vunpack.c.l.b16 %v196
  %v1420 = vunpack.c.l.b16 %v197
  %v1421 = vunpack.c.l.b16 %v198
  %v1422 = vunpack.c.l.b16 %v199
  %v1423 = vunpack.c.l.b16 %v200
  %v1424 = vunpack.c.l.b16 %v201
  %v1425 = vunpack.c.l.b16 %v202
  %v1426 = vunpack.c.l.b16 %v203
  %v1427 = vunpack.c.l.b16 %v204
  %v1428 = vunpack.c.l.b16 %v205
  %v1429 = vunpack.c.l.b16 %v206
  %v1430 = vunpack.c.l.b16 %v207
  %v1431 = vunpack.c.l.b16 %v208
  %v1432 = vunpack.c.l.b16 %v209
  %v1433 = vunpack.c.l.b16 %v210
  %v1434 = vunpack.c.l.b16 %v211
  %v1435 = vunpack.c.l.b16 %v212
  %v1436 = vunpack.c.l.b16 %v213
  %v1437 = vunpack.c.l.b16 %v214
  %v1438 = vunpack.c.l.b16 %v215
  %v1439 = vunpack.c.l.b16 %v216
  %v1440 = vunpack.c.l.b16 %v217
  %v1441 = vunpack.c.l.b16 %v218
  %v1442 = vunpack.c.l.b16 %v219
  %v1443 = vunpack.c.l.b16 %v220
  %v1444 = vunpack.c.l.b16 %v221
  %v1445 = vunpack.c.l.b16 %v222
  %v1446 = vunpack.c.l.b16 %v223
  %v1447 = vunpack.c.l.b16 %v224
  %v1448 = vunpack.c.l.b16 %v225
  %v1449 = vunpack.c.l.b16 %v226
  %v1450 = vunpack.c.l.b16 %v227
  %v1451 = vunpack.c.l.b16 %v228
  %v1452 = vunpack.c.l.b16 %v229
  %v1453 = vunpack.c.l.b16 %v230
  %v1454 = vunpack.c.l.b16 %v231
  %v1455 = vunpack.c.l.b16 %v232
  %v1456 = vunpack.c.l.b16 %v233
  %v1457 = vunpack.c.l.b16 %v234
  %v1458 = vunpack.c.l.b16 %v235
  %v1459 = vunpack.c.l.b16 %v236
  %v1460 = vunpack.c.l.b16 %v237
  %v1461 = vunpack.c.l.b16 %v238
  %v1462 = vunpack.c.l.b16 %v239
  %v1463 = vunpack.c.l.b16 %v240
  %v1464 = vunpack.c.l.b16 %v241
  %v1465 = vunpack.c.l.b16 %v242
  %v1466 = vunpack.c.l.b16 %v243
  %v1467 = vunpack.c.l.b16 %v244
  %v1468 = vunpack.c.l.b16 %v245
  %v1469 = vunpack.c.l.b16 %v246
  %v1470 = vunpack.c.l.b16 %v247
  %v1471 = vunpack.c.l.b16 %v248
  %v1472 = vunpack.c.l.b16 %v249
  %v1473 = vunpack.c.l.b16 %v250
  %v1474 = vunpack.c.l.b16 %v251
  %v1475 = vunpack.c.l.b16 %v252
  %v1476 = vunpack.c.l.b16 %v253
  %v1477 = vunpack.c.l.b16 %v254
  %v1478 = vunpack.c.l.b16 %v255
  %v1479 = vunpack.c.l.b16 %v256
  %v1480 = vunpack.c.l.b16 %v257
  %v1481 = vunpack.c.l.b16 %v258
  %v1482 = vunpack.c.l.b16 %v259
  %v1483 = vunpack.c.l.b16 %v260
  %v1484 = vunpack.c.l.b16 %v261
  %v1485 = vunpack.c.l.b16 %v262
  %v1486 = vunpack.c.l.b16 %v263
  %v1487 = vunpack.c.l.b16 %v264
  %v1488 = vunpack.c.l.b16 %v265
  %v1489 = vunpack.c.l.b16 %v266
  %v1490 = vunpack.c.l.b16 %v267
  %v1491 = vunpack.c.l.b16 %v268
  %v1492 = vunpack.c.l.b16 %v269
  %v1493 = vunpack.c.l.b16 %v270
  %v1494 = vunpack.c.l.b16 %v271
  %v1495 = vunpack.c.l.b16 %v272
  %v1496 = vunpack.c.l.b16 %v273
  %v1497 = vunpack.c.l.b16 %v274
  %v1498 = vunpack.c.l.b16 %v275
  %v1499 = vunpack.c.l.b16 %v276
  %v1500 = vunpack.c.l.b16 %v277
  %v1501 = vunpack.c.l.b16 %v278
  %v1502 = vunpack.c.l.b16 %v279
  %v1503 = vunpack.c.l.b16 %v280
  %v1504 = vunpack.c.l.b16 %v281
  %v1505 = vunpack.c.l.b16 %v282
  %v1506 = vunpack.c.l.b16 %v283
  %v1507 = vunpack.c.l.b16 %v284
  %v1508 = vunpack.c.l.b16 %v285
  %v1509 = vunpack.c.l.b16 %v286
  %v1510 = vunpack.c.l.b16 %v287
  %v1511 = vunpack.c.l.b16 %v288
  %v1512 = vunpack.c.l.b16 %v289
  %v1513 = vunpack.c.l.b16 %v290
  %v1514 = vunpack.c.l.b16 %v291
  %v1515 = vunpack.c.l.b16 %v292
  %v1516 = vunpack.c.l.b16 %v293
  %v1517 = vunpack.c.l.b16 %v294
  %v1518 = vunpack.c.l.b16 %v295
  %v1519 = vunpack.c.l.b16 %v296
  %v1520 = vunpack.c.l.b16 %v297
  %v1521 = vunpack.c.l.b16 %v298
  %v1522 = vunpack.c.l.b16 %v299
  %v1523 = vunpack.c.l.b16 %v300
  %v1524 = vunpack.c.l.b16 %v301
  %v1525 = vunpack.c.l.b16 %v302
  %v1526 = vunpack.c.l.b16 %v303
  %v1527 = vunpack.c.l.b16 %v304
  %v1528 = vunpack.c.l.b16 %v305
  %v1529 = vunpack.c.l.b16 %v306
  %v1530 = vunpack.c.l.b16 %v307
  %v1531 = vunpack.c.l.b16 %v308
  %v1532 = vunpack.c.l.b16 %v309
  %v1533 = vunpack.c.l.b16 %v310
  %v1534 = vunpack.c.l.b16 %v311
  %v1535 = vunpack.c.l.b16 %v312
  %v1536 = vunpack.c.l.b16 %v313
  %v1537 = vunpack.c.l.b16 %v314
  %v1538 = vunpack.c.l.b16 %v315
  %v1539 = vunpack.c.l.b16 %v316
  %v1540 = vunpack.c.l.b16 %v317
  %v1541 = vunpack.c.l.b16 %v318
  %v1542 = vunpack.c.l.b16 %v319
  %v1543 = vunpack.c.l.b16 %v320
  %v1544 = vunpack.c.l.b16 %v321
  %v1545 = vunpack.c.l.b16 %v322
  %v1546 = vunpack.c.l.b16 %v323
  %v1547 = vunpack.c.l.b16 %v324
  %v1548 = vunpack.c.l.b16 %v325
  %v1549 = vunpack.c.l.b16 %v326
  %v1550 = vunpack.c.l.b16 %v327
  %v1551 = vunpack.c.l.b16 %v328
  %v1552 = vunpack.c.l.b16 %v329
  %v1553 = vunpack.c.l.b16 %v330
  %v1554 = vunpack.c.l.b16 %v331
  %v1555 = vunpack.c.l.b16 %v332
  %v1556 = vunpack.c.l.b16 %v333
  %v1557 = vunpack.c.l.b16 %v334
  %v1558 = vunpack.c.l.b16 %v335
  %v1559 = vunpack.c.l.b16 %v336
  %v1560 = vunpack.c.l.b16 %v337
  %v1561 = vunpack.c.l.b16 %v338
  %v1562 = vunpack.c.l.b16 %v339
  %v1563 = vunpack.c.l.b16 %v340
  %v1564 = vunpack.c.l.b16 %v341
  %v1565 = vunpack.c.l.b16 %v342
  %v1566 = vunpack.c.l.b16 %v343
  %v1567 = vunpack.c.l.b16 %v344
  %v1568 = vunpack.c.l.b16 %v345
  %v1569 = vunpack.c.l.b16 %v346
  %v1570 = vunpack.c.l.b16 %v347
  %v1571 = vunpack.c.l.b16 %v348
  %v1572 = vunpack.c.l.b16 %v349
  %v1573 = vunpack.c.l.b16 %v350
  %v1574 = vunpack.c.l.b16 %v351
  %v1575 = vunpack.c.l.b16 %v352
  %v1576 = vunpack.c.l.b16 %v353
  %v1577 = vunpack.c.l.b16 %v354
  %v1578 = vunpack.c.l.b16 %v355
  %v1579 = vunpack.c.l.b16 %v356
  %v1580 = vunpack.c.l.b16 %v357
  %v1581 = vunpack.c.l.b16 %v358
  %v1582 = vunpack.c.l.b16 %v359
  %v1583 = vunpack.c.l.b16 %v360
  %v1584 = vunpack.c.l.b16 %v361
  %v1585 = vunpack.c.l.b16 %v362
  %v1586 = vunpack.c.l.b16 %v363
  %v1587 = vunpack.c.l.b16 %v364
  %v1588 = vunpack.c.l.b16 %v365
  %v1589 = vunpack.c.l.b16 %v366
  %v1590 = vunpack.c.l.b16 %v367
  %v1591 = vunpack.c.l.b16 %v368
  %v1592 = vunpack.c.l.b16 %v369
  %v1593 = vunpack.c.l.b16 %v370
  %v1594 = vunpack.c.l.b16 %v371
  %v1595 = vunpack.c.l.b16 %v372
  %v1596 = vunpack.c.l.b16 %v373
  %v1597 = vunpack.c.l.b16 %v374
  %v1598 = vunpack.c.l.b16 %v375
  %v1599 = vunpack.c.l.b16 %v376
  %v1600 = vunpack.c.l.b16 %v377
  %v1601 = vunpack.c.l.b16 %v378
  %v1602 = vunpack.c.l.b16 %v379
  %v1603 = vunpack.c.l.b16 %v380
  %v1604 = vunpack.c.l.b16 %v381
  %v1605 = vunpack.c.l.b16 %v382
  %v1606 = vunpack.c.l.b16 %v383
  %v1607 = vunpack.c.l.b16 %v384
  %v1608 = vunpack.c.l.b16 %v385
  %v1609 = vunpack.c.l.b16 %v386
  %v1610 = vunpack.c.l.b16 %v387
  %v1611 = vunpack.c.l.b16 %v388
  %v1612 = vunpack.c.l.b16 %v389
  %v1613 = vunpack.c.l.b16 %v390
  %v1614 = vunpack.c.l.b16 %v391
  %v1615 = vunpack.c.l.b16 %v392
  %v1616 = vunpack.c.l.b16 %v393
  %v1617 = vunpack.c.l.b16 %v394
  %v1618 = vunpack.c.l.b16 %v395
  %v1619 = vunpack.c.l.b16 %v396
  %v1620 = vunpack.c.l.b16 %v397
  %v1621 = vunpack.c.l.b16 %v398
  %v1622 = vunpack.c.l.b16 %v399
  %v1623 = vunpack.c.l.b16 %v400
  %v1624 = vunpack.c.l.b16 %v401
  %v1625 = vunpack.c.l.b16 %v402
  %v1626 = vunpack.c.l.b16 %v403
  %v1627 = vunpack.c.l.b16 %v404
  %v1628 = vunpack.c.l.b16 %v405
  %v1629 = vunpack.c.l.b16 %v406
  %v1630 = vunpack.c.l.b16 %v407
  %v1631 = vunpack.c.l.b16 %v408
  %v1632 = vunpack.c.l.b16 %v409
  %v1633 = vunpack.c.l.b16 %v410
  %v1634 = vunpack.c.l.b16 %v411
  %v1635 = vunpack.c.l.b16 %v412
  %v1636 = vunpack.c.l.b16 %v413
  %v1637 = vunpack.c.l.b16 %v414
  %v1638 = vunpack.c.l.b16 %v415
  %v1639 = vunpack.c.l.b16 %v416
  %v1640 = vunpack.c.l.b16 %v417
  %v1641 = vunpack.c.l.b16 %v418
  %v1642 = vunpack.c.l.b16 %v419
  %v1643 = vunpack.c.l.b16 %v420
  %v1644 = vunpack.c.l.b16 %v421
  %v1645 = vunpack.c.l.b16 %v422
  %v1646 = vunpack.c.l.b16 %v423
  %v1647 = vunpack.c.l.b16 %v424
  %v1648 = vunpack.c.l.b16 %v425
  %v1649 = vunpack.c.l.b16 %v426
  %v1650 = vunpack.c.l.b16 %v427
  %v1651 = vunpack.c.l.b16 %v428
  %v1652 = vunpack.c.l.b16 %v429
  %v1653 = vunpack.c.l.b16 %v430
  %v1654 = vunpack.c.l.b16 %v431
  %v1655 = vunpack.c.l.b16 %v432
  %v1656 = vunpack.c.l.b16 %v433
  %v1657 = vunpack.c.l.b16 %v434
  %v1658 = vunpack.c.l.b16 %v435
  %v1659 = vunpack.c.l.b16 %v436
  %v1660 = vunpack.c.l.b16 %v437
  %v1661 = vunpack.c.l.b16 %v438
  %v1662 = vunpack.c.l.b16 %v439
  %v1663 = vunpack.c.l.b16 %v440
  %v1664 = vunpack.c.l.b16 %v441
  %v1665 = vunpack.c.l.b16 %v442
  %v1666 = vunpack.c.l.b16 %v443
  %v1667 = vunpack.c.l.b16 %v444
  %v1668 = vunpack.c.l.b16 %v445
  %v1669 = vunpack.c.l.b16 %v446
  %v1670 = vunpack.c.l.b16 %v447
  %v1671 = vunpack.c.l.b16 %v448
  %v1672 = vunpack.c.l.b16 %v449
  %v1673 = vunpack.c.l.b16 %v450
  %v1674 = vunpack.c.l.b16 %v451
  %v1675 = vunpack.c.l.b16 %v452
  %v1676 = vunpack.c.l.b16 %v453
  %v1677 = vunpack.c.l.b16 %v454
  %v1678 = vunpack.c.l.b16 %v455
  %v1679 = vunpack.c.l.b16 %v456
  %v1680 = vunpack.c.l.b16 %v457
  %v1681 = vunpack.c.l.b16 %v458
  %v1682 = vunpack.c.l.b16 %v459
  %v1683 = vunpack.c.l.b16 %v460
  %v1684 = vunpack.c.l.b16 %v461
  %v1685 = vunpack.c.l.b16 %v462
  %v1686 = vunpack.c.l.b16 %v463
  %v1687 = vunpack.c.l.b16 %v464
  %v1688 = vunpack.c.l.b16 %v465
  %v1689 = vunpack.c.l.b16 %v466
  %v1690 = vunpack.c.l.b16 %v467
  %v1691 = vunpack.c.l.b16 %v468
  %v1692 = vunpack.c.l.b16 %v469
  %v1693 = vunpack.c.l.b16 %v470
  %v1694 = vunpack.c.l.b16 %v471
  %v1695 = vunpack.c.l.b16 %v472
  %v1696 = vunpack.c.l.b16 %v473
  %v1697 = vunpack.c.l.b16 %v474
  %v1698 = vunpack.c.l.b16 %v475
  %v1699 = vunpack.c.l.b16 %v476
  %v1700 = vunpack.c.l.b16 %v477
  %v1701 = vunpack.c.l.b16 %v478
  %v1702 = vunpack.c.l.b16 %v479
  %v1703 = vunpack.c.l.b16 %v480
  %v1704 = vunpack.c.l.b16 %v481
  %v1705 = vunpack.c.l.b16 %v482
  %v1706 = vunpack.c.l.b16 %v483
  %v1707 = vunpack.c.l.b16 %v484
  %v1708 = vunpack.c.l.b16 %v485
  %v1709 = vunpack.c.l.b16 %v486
  %v1710 = vunpack.c.l.b16 %v487
  %v1711 = vunpack.c.l.b16 %v488
  %v1712 = vunpack.c.l.b16 %v489
  %v1713 = vunpack.c.l.b16 %v490
  %v1714 = vunpack.c.l.b16 %v491
  %v1715 = vunpack.c.l.b16 %v492
  %v1716 = vunpack.c.l.b16 %v493
  %v1717 = vunpack.c.l.b16 %v494
  %v1718 = vunpack.c.l.b16 %v495
  %v1719 = vunpack.c.l.b16 %v496
  %v1720 = vunpack.c.l.b16 %v497
  %v1721 = vunpack.c.l.b16 %v498
  %v1722 = vunpack.c.l.b16 %v499
  %v1723 = vunpack.c.l.b16 %v500
  %v1724 = vunpack.c.l.b16 %v501
  %v1725 = vunpack.c.l.b16 %v502
  %v1726 = vunpack.c.l.b16 %v503
  %v1727 = vunpack.c.l.b16 %v504
  %v1728 = vunpack.c.l.b16 %v505
  %v1729 = vunpack.c.l.b16 %v506
  %v1730 = vunpack.c.l.b16 %v507
  %v1731 = vunpack.c.l.b16 %v508
  %v1732 = vunpack.c.l.b16 %v509
  %v1733 = vunpack.c.l.b16 %v510
  %v1734 = vunpack.c.l.b16 %v511
  %v1735 = vunpack.c.l.b16 %v512
  %v1736 = vunpack.c.l.b16 %v513
  %v1737 = vunpack.c.l.b16 %v514
  %v1738 = vunpack.c.l.b16 %v515
  %v1739 = vunpack.c.l.b16 %v516
  %v1740 = vunpack.c.l.b16 %v517
  %v1741 = vunpack.c.l.b16 %v518
  %v1742 = vunpack.c.l.b16 %v519
  %v1743 = vunpack.c.l.b16 %v520
  %v1744 = vunpack.c.l.b16 %v521
  %v1745 = vunpack.c.l.b16 %v522
  %v1746 = vunpack.c.l.b16 %v523
  %v1747 = vunpack.c.l.b16 %v524
  %v1748 = vunpack.c.l.b16 %v525
  %v1749 = vunpack.c.l.b16 %v526
  %v1750 = vunpack.c.l.b16 %v527
  %v1751 = vunpack.c.l.b16 %v528
  %v1752 = vunpack.c.l.b16 %v529
  %v1753 = vunpack.c.l.b16 %v530
  %v1754 = vunpack.c.l.b16 %v531
  %v1755 = vunpack.c.l.b16 %v532
  %v1756 = vunpack.c.l.b16 %v533
  %v1757 = vunpack.c.l.b16 %v534
  %v1758 = vunpack.c.l.b16 %v535
  %v1759 = vunpack.c.l.b16 %v536
  %v1760 = vunpack.c.l.b16 %v537
  %v1761 = vunpack.c.l.b16 %v538
  %v1762 = vunpack.c.l.b16 %v539
  %v1763 = vunpack.c.l.b16 %v540
  %v1764 = vunpack.c.l.b16 %v541
  %v1765 = vunpack.c.l.b16 %v542
  %v1766 = vunpack.c.l.b16 %v543
  %v1767 = vunpack.c.l.b16 %v544
  %v1768 = vunpack.c.l.b16 %v545
  %v1769 = vunpack.c.l.b16 %v546
  %v1770 = vunpack.c.l.b16 %v547
  %v1771 = vunpack.c.l.b16 %v548
  %v1772 = vunpack.c.l.b16 %v549
  %v1773 = vunpack.c.l.b16 %v550
  %v1774 = vunpack.c.l.b16 %v551
  %v1775 = vunpack.c.l.b16 %v552
  %v1776 = vunpack.c.l.b16 %v553
  %v1777 = vunpack.c.l.b16 %v554
  %v1778 = vunpack.c.l.b16 %v555
  %v1779 = vunpack.c.l.b16 %v556
  %v1780 = vunpack.c.l.b16 %v557
  %v1781 = vunpack.c.l.b16 %v558
  %v1782 = vunpack.c.l.b16 %v559
  %v1783 = vunpack.c.l.b16 %v560
  %v1784 = vunpack.c.l.b16 %v561
  %v1785 = vunpack.c.l.b16 %v562
  %v1786 = vunpack.c.l.b16 %v563
  %v1787 = vunpack.c.l.b16 %v564
  %v1788 = vunpack.c.l.b16 %v565
  %v1789 = vunpack.c.l.b16 %v566
  %v1790 = vunpack.c.l.b16 %v567
  %v1791 = vunpack.c.l.b16 %v568
  %v1792 = vunpack.c.l.b16 %v569
  %v1793 = vunpack.c.l.b16 %v570
  %v1794 = vunpack.c.l.b16 %v571
  %v1795 = vunpack.c.l.b16 %v572
  %v1796 = vunpack.c.l.b16 %v573
  %v1797 = vunpack.c.l.b16 %v574
  %v1798 = vunpack.c.l.b16 %v575
  %v1799 = vunpack.c.l.b16 %v576
  %v1800 = vunpack.c.l.b16 %v577
  %v1801 = vunpack.c.l.b16 %v578
  %v1802 = vunpack.c.l.b16 %v579
  %v1803 = vunpack.c.l.b16 %v580
  %v1804 = vunpack.c.l.b16 %v581
  %v1805 = vunpack.c.l.b16 %v582
  %v1806 = vunpack.c.l.b16 %v583
  %v1807 = vunpack.c.l.b16 %v584
  %v1808 = vunpack.c.l.b16 %v585
  %v1809 = vunpack.c.l.b16 %v586
  %v1810 = vunpack.c.l.b16 %v587
  %v1811 = vunpack.c.l.b16 %v588
  %v1812 = vunpack.c.l.b16 %v589
  %v1813 = vunpack.c.l.b16 %v590
  %v1814 = vunpack.c.l.b16 %v591
  %v1815 = vunpack.c.l.b16 %v592
  %v1816 = vunpack.c.l.b16 %v593
  %v1817 = vunpack.c.l.b16 %v594
  %v1818 = vunpack.c.l.b16 %v595
  %v1819 = vunpack.c.l.b16 %v596
  %v1820 = vunpack.c.l.b16 %v597
  %v1821 = vunpack.c.l.b16 %v598
  %v1822 = vunpack.c.l.b16 %v599
  %v1823 = vunpack.c.l.b16 %v600
  %v1824 = vunpack.c.l.b16 %v601
  %v1825 = vunpack.c.l.b16 %v602
  %v1826 = vunpack.c.l.b16 %v603
  %v1827 = vunpack.c.l.b16 %v604
  %v1828 = vunpack.c.l.b16 %v605
  %v1829 = vunpack.c.l.b16 %v606
  %v1830 = vunpack.c.l.b16 %v607
  %v1831 = vunpack.c.l.b16 %v608
  %v1832 = vunpack.c.l.b16 %v609
  %v1833 = vunpack.c.l.b16 %v610
  %v1834 = vunpack.c.l.b16 %v611
  %v1835 = vunpack.c.l.b16 %v612
  %v1836 = vunpack.c.l.b16 %v613
  %v1837 = vunpack.c.l.b16 %v614
  %v1838 = vunpack.c.l.b16 %v615
  %v1839 = vunpack.c.l.b16 %v616
  %v1840 = vunpack.c.l.b16 %v617
  %v1841 = vunpack.c.l.b16 %v618
  %v1842 = vunpack.c.l.b16 %v619
  %v1843 = vunpack.c.l.b16 %v620
  %v1844 = vunpack.c.l.b16 %v621
  %v1845 = vunpack.c.l.b16 %v622
  %v1846 = vunpack.c.l.b16 %v623
  %v1847 = vunpack.c.l.b16 %v624
  %v1848 = vunpack.c.l.b16 %v625
  %v1849 = vunpack.c.l.b16 %v626
  %v1850 = vunpack.c.l.b16 %v627
  %v1851 = vunpack.c.l.b16 %v628
  %v1852 = vunpack.c.l.b16 %v629
  %v1853 = vunpack.c.l.b16 %v630
  %v1854 = vunpack.c.l.b16 %v631
  %v1855 = vunpack.c.l.b16 %v632
  %v1856 = vunpack.c.l.b16 %v633
  %v1857 = vunpack.c.l.b16 %v634
  %v1858 = vunpack.c.l.b16 %v635
  %v1859 = vunpack.c.l.b16 %v636
  %v1860 = vunpack.c.l.b16 %v637
  %v1861 = vunpack.c.l.b16 %v638
  %v1862 = vunpack.c.l.b16 %v639
  %v1863 = vunpack.c.l.b16 %v640
  %v1864 = vunpack.c.l.b16 %v641
  %v1865 = vunpack.c.l.b16 %v642
  %v1866 = vunpack.c.l.b16 %v643
  %v1867 = vunpack.c.l.b16 %v644
  %v1868 = vunpack.c.l.b16 %v645
  %v1869 = vunpack.c.l.b16 %v646
  %v1870 = vunpack.c.l.b16 %v647
  %v1871 = vunpack.c.l.b16 %v648
  %v1872 = vunpack.c.l.b16 %v649
  %v1873 = vunpack.c.l.b16 %v650
  %v1874 = vunpack.c.l.b16 %v651
  %v1875 = vunpack.c.l.b16 %v652
  %v1876 = vunpack.c.l.b16 %v653
  %v1877 = vunpack.c.l.b16 %v654
  %v1878 = vunpack.c.l.b16 %v655
  %v1879 = vunpack.c.l.b16 %v656
  %v1880 = vunpack.c.l.b16 %v657
  %v1881 = vunpack.c.l.b16 %v658
  %v1882 = vunpack.c.l.b16 %v659
  %v1883 = vunpack.c.l.b16 %v660
  %v1884 = vunpack.c.l.b16 %v661
  %v1885 = vunpack.c.l.b16 %v662
  %v1886 = vunpack.c.l.b16 %v663
  %v1887 = vunpack.c.l.b16 %v664
  %v1888 = vunpack.c.l.b16 %v665
  %v1889 = vunpack.c.l.b16 %v666
  %v1890 = vunpack.c.l.b16 %v667
  %v1891 = vunpack.c.l.b16 %v668
  %v1892 = vunpack.c.l.b16 %v669
  %v1893 = vunpack.c.l.b16 %v670
  %v1894 = vunpack.c.l.b16 %v671
  %v1895 = vunpack.c.l.b16 %v672
  %v1896 = vunpack.c.l.b16 %v673
  %v1897 = vunpack.c.l.b16 %v674
  %v1898 = vunpack.c.l.b16 %v675
  %v1899 = vunpack.c.l.b16 %v676
  %v1900 = vunpack.c.l.b16 %v677
  %v1901 = vunpack.c.l.b16 %v678
  %v1902 = vunpack.c.l.b16 %v679
  %v1903 = vunpack.c.l.b16 %v680
  %v1904 = vunpack.c.l.b16 %v681
  %v1905 = vunpack.c.l.b16 %v682
  %v1906 = vunpack.c.l.b16 %v683
  %v1907 = vunpack.c.l.b16 %v684
  %v1908 = vunpack.c.l.b16 %v685
  %v1909 = vunpack.c.l.b16 %v686
  %v1910 = vunpack.c.l.b16 %v687
  %v1911 = vunpack.c.l.b16 %v688
  %v1912 = vunpack.c.l.b16 %v689
  %v1913 = vunpack.c.l.b16 %v690
  %v1914 = vunpack.c.l.b16 %v691
  %v1915 = vunpack.c.l.b16 %v692
  %v1916 = vunpack.c.l.b16 %v693
  %v1917 = vunpack.c.l.b16 %v694
  %v1918 = vunpack.c.l.b16 %v695
  %v1919 = vunpack.c.l.b16 %v696
  %v1920 = vunpack.c.l.b16 %v697
  %v1921 = vunpack.c.l.b16 %v698
  %v1922 = vunpack.c.l.b16 %v699
  %v1923 = vunpack.c.l.b16 %v700
  %v1924 = vunpack.c.l.b16 %v701
  %v1925 = vunpack.c.l.b16 %v702
  %v1926 = vunpack.c.l.b16 %v703
  %v1927 = vunpack.c.l.b16 %v704
  %v1928 = vunpack.c.l.b16 %v705
  %v1929 = vunpack.c.l.b16 %v706
  %v1930 = vunpack.c.l.b16 %v707
  %v1931 = vunpack.c.l.b16 %v708
  %v1932 = vunpack.c.l.b16 %v709
  %v1933 = vunpack.c.l.b16 %v710
  %v1934 = vunpack.c.l.b16 %v711
  %v1935 = vunpack.c.l.b16 %v712
  %v1936 = vunpack.c.l.b16 %v713
  %v1937 = vunpack.c.l.b16 %v714
  %v1938 = vunpack.c.l.b16 %v715
  %v1939 = vunpack.c.l.b16 %v716
  %v1940 = vunpack.c.l.b16 %v717
  %v1941 = vunpack.c.l.b16 %v718
  %v1942 = vunpack.c.l.b16 %v719
  %v1943 = vunpack.c.l.b16 %v720
  %v1944 = vunpack.c.l.b16 %v721
  %v1945 = vunpack.c.l.b16 %v722
  %v1946 = vunpack.c.l.b16 %v723
  %v1947 = vunpack.c.l.b16 %v724
  %v1948 = vunpack.c.l.b16 %v725
  %v1949 = vunpack.c.l.b16 %v726
  %v1950 = vunpack.c.l.b16 %v727
  %v1951 = vunpack.c.l.b16 %v728
  %v1952 = vunpack.c.l.b16 %v729
  %v1953 = vunpack.c.l.b16 %v730
  %v1954 = vunpack.c.l.b16 %v731
  %v1955 = vunpack.c.l.b16 %v732
  %v1956 = vunpack.c.l.b16 %v733
  %v1957 = vunpack.c.l.b16 %v734
  %v1958 = vpack.c.b16 %v1351, %v1350
  %v1959 = vpack.c.b16 %v1353, %v1352
  %v1960 = vpack.c.b16 %v1355, %v1354
  %v1961 = vpack.c.b16 %v1357, %v1356
  %v1962 = vpack.c.b16 %v1359, %v1358
  %v1963 = vpack.c.b16 %v1361, %v1360
  %v1964 = vpack.c.b16 %v1363, %v1362
  %v1965 = vpack.c.b16 %v1365, %v1364
  %v1966 = vpack.c.b16 %v1367, %v1366
  %v1967 = vpack.c.b16 %v1369, %v1368
  %v1968 = vpack.c.b16 %v1371, %v1370
  %v1969 = vpack.c.b16 %v1373, %v1372
  %v1970 = vpack.c.b16 %v1375, %v1374
  %v1971 = vpack.c.b16 %v1377, %v1376
  %v1972 = vpack.c.b16 %v1379, %v1378
  %v1973 = vpack.c.b16 %v1381, %v1380
  %v1974 = vpack.c.b16 %v1383, %v1382
  %v1975 = vpack.c.b16 %v1385, %v1384
  %v1976 = vpack.c.b16 %v1387, %v1386
  %v1977 = vpack.c.b16 %v1389, %v1388
  %v1978 = vpack.c.b16 %v1391, %v1390
  %v1979 = vpack.c.b16 %v1393, %v1392
  %v1980 = vpack.c.b16 %v1395, %v1394
  %v1981 = vpack.c.b16 %v1397, %v1396
  %v1982 = vpack.c.b16 %v1399, %v1398
  %v1983 = vpack.c.b16 %v1401, %v1400
  %v1984 = vpack.c.b16 %v1403, %v1402
  %v1985 = vpack.c.b16 %v1405, %v1404
  %v1986 = vpack.c.b16 %v1407, %v1406
  %v1987 = vpack.c.b16 %v1409, %v1408
  %v1988 = vpack.c.b16 %v1411, %v1410
  %v1989 = vpack.c.b16 %v1413, %v1412
  %v1990 = vpack.c.b16 %v1415, %v1414
  %v1991 = vpack.c.b16 %v1417, %v1416
  %v1992 = vpack.c.b16 %v1419, %v1418
  %v1993 = vpack.c.b16 %v1421, %v1420
  %v1994 = vpack.c.b16 %v1423, %v1422
  %v1995 = vpack.c.b16 %v1425, %v1424
  %v1996 = vpack.c.b16 %v1427, %v1426
  %v1997 = vpack.c.b16 %v1429, %v1428
  %v1998 = vpack.c.b16 %v1431, %v1430
  %v1999 = vpack.c.b16 %v1433, %v1432
  %v2000 = vpack.c.b16 %v1435, %v1434
  %v2001 = vpack.c.b16 %v1437, %v1436
  %v2002 = vpack.c.b16 %v1439, %v1438
  %v2003 = vpack.c.b16 %v1441, %v1440
  %v2004 = vpack.c.b16 %v1443, %v1442
  %v2005 = vpack.c.b16 %v1445, %v1444
  %v2006 = vpack.c.b16 %v1447, %v1446
  %v2007 = vpack.c.b16 %v1449, %v1448
  %v2008 = vpack.c.b16 %v1451, %v1450
  %v2009 = vpack.c.b16 %v1453, %v1452
  %v2010 = vpack.c.b16 %v1455, %v1454
  %v2011 = vpack.c.b16 %v1457, %v1456
  %v2012 = vpack.c.b16 %v1459, %v1458
  %v2013 = vpack.c.b16 %v1461, %v1460
  %v2014 = vpack.c.b16 %v1463, %v1462
  %v2015 = vpack.c.b16 %v1465, %v1464
  %v2016 = vpack.c.b16 %v1467, %v1466
  %v2017 = vpack.c.b16 %v1469, %v1468
  %v2018 = vpack.c.b16 %v1471, %v1470
  %v2019 = vpack.c.b16 %v1473, %v1472
  %v2020 = vpack.c.b16 %v1475, %v1474
  %v2021 = vpack.c.b16 %v1477, %v1476
  %v2022 = vpack.c.b16 %v1479, %v1478
  %v2023 = vpack.c.b16 %v1481, %v1480
  %v2024 = vpack.c.b16 %v1483, %v1482
  %v2025 = vpack.c.b16 %v1485, %v1484
  %v2026 = vpack.c.b16 %v1487, %v1486
  %v2027 = vpack.c.b16 %v1489, %v1488
  %v2028 = vpack.c.b16 %v1491, %v1490
  %v2029 = vpack.c.b16 %v1493, %v1492
  %v2030 = vpack.c.b16 %v1495, %v1494
  %v2031 = vpack.c.b16 %v1497, %v1496
  %v2032 = vpack.c.b16 %v1499, %v1498
  %v2033 = vpack.c.b16 %v1501, %v1500
  %v2034 = vpack.c.b16 %v1503, %v1502
  %v2035 = vpack.c.b16 %v1505, %v1504
  %v2036 = vpack.c.b16 %v1507, %v1506
  %v2037 = vpack.c.b16 %v1509, %v1508
  %v2038 = vpack.c.b16 %v1511, %v1510
  %v2039 = vpack.c.b16 %v1513, %v1512
  %v2040 = vpack.c.b16 %v1515, %v1514
  %v2041 = vpack.c.b16 %v1517, %v1516
  %v2042 = vpack.c.b16 %v1519, %v1518
  %v2043 = vpack.c.b16 %v1521, %v1520
  %v2044 = vpack.c.b16 %v1523, %v1522
  %v2045 = vpack.c.b16 %v1525, %v1524
  %v2046 = vpack.c.b16 %v1527, %v1526
  %v2047 = vpack.c.b16 %v1529, %v1528
  %v2048 = vpack.c.b16 %v1531, %v1530
  %v2049 = vpack.c.b16 %v1533, %v1532
  %v2050 = vpack.c.b16 %v1535, %v1534
  %v2051 = vpack.c.b16 %v1537, %v1536
  %v2052 = vpack.c.b16 %v1539, %v1538
  %v2053 = vpack.c.b16 %v1541, %v1540
  %v2054 = vpack.c.b16 %v1543, %v1542
  %v2055 = vpack.c.b16 %v1545, %v1544
  %v2056 = vpack.c.b16 %v1547, %v1546
  %v2057 = vpack.c.b16 %v1549, %v1548
  %v2058 = vpack.c.b16 %v1551, %v1550
  %v2059 = vpack.c.b16 %v1553, %v1552
  %v2060 = vpack.c.b16 %v1555, %v1554
  %v2061 = vpack.c.b16 %v1557, %v1556
  %v2062 = vpack.c.b16 %v1559, %v1558
  %v2063 = vpack.c.b16 %v1561, %v1560
  %v2064 = vpack.c.b16 %v1563, %v1562
  %v2065 = vpack.c.b16 %v1565, %v1564
  %v2066 = vpack.c.b16 %v1567, %v1566
  %v2067 = vpack.c.b16 %v1569, %v1568
  %v2068 = vpack.c.b16 %v1571, %v1570
  %v2069 = vpack.c.b16 %v1573, %v1572
  %v2070 = vpack.c.b16 %v1575, %v1574
  %v2071 = vpack.c.b16 %v1577, %v1576
  %v2072 = vpack.c.b16 %v1579, %v1578
  %v2073 = vpack.c.b16 %v1581, %v1580
  %v2074 = vpack.c.b16 %v1583, %v1582
  %v2075 = vpack.c.b16 %v1585, %v1584
  %v2076 = vpack.c.b16 %v1587, %v1586
  %v2077 = vpack.c.b16 %v1589, %v1588
  %v2078 = vpack.c.b16 %v1591, %v1590
  %v2079 = vpack.c.b16 %v1593, %v1592
  %v2080 = vpack.c.b16 %v1595, %v1594
  %v2081 = vpack.c.b16 %v1597, %v1596
  %v2082 = vpack.c.b16 %v1599, %v1598
  %v2083 = vpack.c.b16 %v1601, %v1600
  %v2084 = vpack.c.b16 %v1603, %v1602
  %v2085 = vpack.c.b16 %v1605, %v1604
  %v2086 = vpack.c.b16 %v1607, %v1606
  %v2087 = vpack.c.b16 %v1609, %v1608
  %v2088 = vpack.c.b16 %v1611, %v1610
  %v2089 = vpack.c.b16 %v1613, %v1612
  %v2090 = vpack.c.b16 %v1615, %v1614
  %v2091 = vpack.c.b16 %v1617, %v1616
  %v2092 = vpack.c.b16 %v1619, %v1618
  %v2093 = vpack.c.b16 %v1621, %v1620
  %v2094 = vpack.c.b16 %v1623, %v1622
  %v2095 = vpack.c.b16 %v1625, %v1624
  %v2096 = vpack.c.b16 %v1627, %v1626
  %v2097 = vpack.c.b16 %v1629, %v1628
  %v2098 = vpack.c.b16 %v1631, %v1630
  %v2099 = vpack.c.b16 %v1633, %v1632
  %v2100 = vpack.c.b16 %v1635, %v1634
  %v2101 = vpack.c.b16 %v1637, %v1636
  %v2102 = vpack.c.b16 %v1639, %v1638
  %v2103 = vpack.c.b16 %v1641, %v1640
  %v2104 = vpack.c.b16 %v1643, %v1642
  %v2105 = vpack.c.b16 %v1645, %v1644
  %v2106 = vpack.c.b16 %v1647, %v1646
  %v2107 = vpack.c.b16 %v1649, %v1648
  %v2108 = vpack.c.b16 %v1651, %v1650
  %v2109 = vpack.c.b16 %v1653, %v1652
  %v2110 = vpack.c.b16 %v1655, %v1654
  %v2111 = vpack.c.b16 %v1657, %v1656
  %v2112 = vpack.c.b16 %v1659, %v1658
  %v2113 = vpack.c.b16 %v1661, %v1660
  %v2114 = vpack.c.b16 %v1663, %v1662
  %v2115 = vpack.c.b16 %v1665, %v1664
  %v2116 = vpack.c.b16 %v1667, %v1666
  %v2117 = vpack.c.b16 %v1669, %v1668
  %v2118 = vpack.c.b16 %v1671, %v1670
  %v2119 = vpack.c.b16 %v1673, %v1672
  %v2120 = vpack.c.b16 %v1675, %v1674
  %v2121 = vpack.c.b16 %v1677, %v1676
  %v2122 = vpack.c.b16 %v1679, %v1678
  %v2123 = vpack.c.b16 %v1681, %v1680
  %v2124 = vpack.c.b16 %v1683, %v1682
  %v2125 = vpack.c.b16 %v1685, %v1684
  %v2126 = vpack.c.b16 %v1687, %v1686
  %v2127 = vpack.c.b16 %v1689, %v1688
  %v2128 = vpack.c.b16 %v1691, %v1690
  %v2129 = vpack.c.b16 %v1693, %v1692
  %v2130 = vpack.c.b16 %v1695, %v1694
  %v2131 = vpack.c.b16 %v1697, %v1696
  %v2132 = vpack.c.b16 %v1699, %v1698
  %v2133 = vpack.c.b16 %v1701, %v1700
  %v2134 = vpack.c.b16 %v1703, %v1702
  %v2135 = vpack.c.b16 %v1705, %v1704
  %v2136 = vpack.c.b16 %v1707, %v1706
  %v2137 = vpack.c.b16 %v1709, %v1708
  %v2138 = vpack.c.b16 %v1711, %v1710
  %v2139 = vpack.c.b16 %v1713, %v1712
  %v2140 = vpack.c.b16 %v1715, %v1714
  %v2141 = vpack.c.b16 %v1717, %v1716
  %v2142 = vpack.c.b16 %v1719, %v1718
  %v2143 = vpack.c.b16 %v1721, %v1720
  %v2144 = vpack.c.b16 %v1723, %v1722
  %v2145 = vpack.c.b16 %v1725, %v1724
  %v2146 = vpack.c.b16 %v1727, %v1726
  %v2147 = vpack.c.b16 %v1729, %v1728
  %v2148 = vpack.c.b16 %v1731, %v1730
  %v2149 = vpack.c.b16 %v1733, %v1732
  %v2150 = vpack.c.b16 %v1735, %v1734
  %v2151 = vpack.c.b16 %v1737, %v1736
  %v2152 = vpack.c.b16 %v1739, %v1738
  %v2153 = vpack.c.b16 %v1741, %v1740
  %v2154 = vpack.c.b16 %v1743, %v1742
  %v2155 = vpack.c.b16 %v1745, %v1744
  %v2156 = vpack.c.b16 %v1747, %v1746
  %v2157 = vpack.c.b16 %v1749, %v1748
  %v2158 = vpack.c.b16 %v1751, %v1750
  %v2159 = vpack.c.b16 %v1753, %v1752
  %v2160 = vpack.c.b16 %v1755, %v1754
  %v2161 = vpack.c.b16 %v1757, %v1756
  %v2162 = vpack.c.b16 %v1759, %v1758
  %v2163 = vpack.c.b16 %v1761, %v1760
  %v2164 = vpack.c.b16 %v1763, %v1762
  %v2165 = vpack.c.b16 %v1765, %v1764
  %v2166 = vpack.c.b16 %v1767, %v1766
  %v2167 = vpack.c.b16 %v1769, %v1768
  %v2168 = vpack.c.b16 %v1771, %v1770
  %v2169 = vpack.c.b16 %v1773, %v1772
  %v2170 = vpack.c.b16 %v1775, %v1774
  %v2171 = vpack.c.b16 %v1777, %v1776
  %v2172 = vpack.c.b16 %v1779, %v1778
  %v2173 = vpack.c.b16 %v1781, %v1780
  %v2174 = vpack.c.b16 %v1783, %v1782
  %v2175 = vpack.c.b16 %v1785, %v1784
  %v2176 = vpack.c.b16 %v1787, %v1786
  %v2177 = vpack.c.b16 %v1789, %v1788
  %v2178 = vpack.c.b16 %v1791, %v1790
  %v2179 = vpack.c.b16 %v1793, %v1792
  %v2180 = vpack.c.b16 %v1795, %v1794
  %v2181 = vpack.c.b16 %v1797, %v1796
  %v2182 = vpack.c.b16 %v1799, %v1798
  %v2183 = vpack.c.b16 %v1801, %v1800
  %v2184 = vpack.c.b16 %v1803, %v1802
  %v2185 = vpack.c.b16 %v1805, %v1804
  %v2186 = vpack.c.b16 %v1807, %v1806
  %v2187 = vpack.c.b16 %v1809, %v1808
  %v2188 = vpack.c.b16 %v1811, %v1810
  %v2189 = vpack.c.b16 %v1813, %v1812
  %v2190 = vpack.c.b16 %v1815, %v1814
  %v2191 = vpack.c.b16 %v1817, %v1816
  %v2192 = vpack.c.b16 %v1819, %v1818
  %v2193 = vpack.c.b16 %v1821, %v1820
  %v2194 = vpack.c.b16 %v1823, %v1822
  %v2195 = vpack.c.b16 %v1825, %v1824
  %v2196 = vpack.c.b16 %v1827, %v1826
  %v2197 = vpack.c.b16 %v1829, %v1828
  %v2198 = vpack.c.b16 %v1831, %v1830
  %v2199 = vpack.c.b16 %v1833, %v1832
  %v2200 = vpack.c.b16 %v1835, %v1834
  %v2201 = vpack.c.b16 %v1837, %v1836
  %v2202 = vpack.c.b16 %v1839, %v1838
  %v2203 = vpack.c.b16 %v1841, %v1840
  %v2204 = vpack.c.b16 %v1843, %v1842
  %v2205 = vpack.c.b16 %v1845, %v1844
  %v2206 = vpack.c.b16 %v1847, %v1846
  %v2207 = vpack.c.b16 %v1849, %v1848
  %v2208 = vpack.c.b16 %v1851, %v1850
  %v2209 = vpack.c.b16 %v1853, %v1852
  %v2210 = vpack.c.b16 %v1855, %v1854
  %v2211 = vpack.c.b16 %v1857, %v1856
  %v2212 = vpack.c.b16 %v1859, %v1858
  %v2213 = vpack.c.b16 %v1861, %v1860
  %v2214 = vpack.c.b16 %v1863, %v1862
  %v2215 = vpack.c.b16 %v1865, %v1864
  %v2216 = vpack.c.b16 %v1867, %v1866
  %v2217 = vpack.c.b16 %v1869, %v1868
  %v2218 = vpack.c.b16 %v1871, %v1870
  %v2219 = vpack.c.b16 %v1873, %v1872
  %v2220 = vpack.c.b16 %v1875, %v1874
  %v2221 = vpack.c.b16 %v1877, %v1876
  %v2222 = vpack.c.b16 %v1879, %v1878
  %v2223 = vpack.c.b16 %v1881, %v1880
  %v2224 = vpack.c.b16 %v1883, %v1882
  %v2225 = vpack.c.b16 %v1885, %v1884
  %v2226 = vpack.c.b16 %v1887, %v1886
  %v2227 = vpack.c.b16 %v1889, %v1888
  %v2228 = vpack.c.b16 %v1891, %v1890
  %v2229 = vpack.c.b16 %v1893, %v1892
  %v2230 = vpack.c.b16 %v1895, %v1894
  %v2231 = vpack.c.b16 %v1897, %v1896
  %v2232 = vpack.c.b16 %v1899, %v1898
  %v2233 = vpack.c.b16 %v1901, %v1900
  %v2234 = vpack.c.b16 %v1903, %v1902
  %v2235 = vpack.c.b16 %v1905, %v1904
  %v2236 = vpack.c.b16 %v1907, %v1906
  %v2237 = vpack.c.b16 %v1909, %v1908
  %v2238 = vpack.c.b16 %v1911, %v1910
  %v2239 = vpack.c.b16 %v1913, %v1912
  %v2240 = vpack.c.b16 %v1915, %v1914
  %v2241 = vpack.c.b16 %v1917, %v1916
  %v2242 = vpack.c.b16 %v1919, %v1918
  %v2243 = vpack.c.b16 %v1921, %v1920
  %v2244 = vpack.c.b16 %v1923, %v1922
  %v2245 = vpack.c.b16 %v1925, %v1924
  %v2246 = vpack.c.b16 %v1927, %v1926
  %v2247 = vpack.c.b16 %v1929, %v1928
  %v2248 = vpack.c.b16 %v1931, %v1930
  %v2249 = vpack.c.b16 %v1933, %v1932
  %v2250 = vpack.c.b16 %v1935, %v1934
  %v2251 = vpack.c.b16 %v1937, %v1936
  %v2252 = vpack.c.b16 %v1939, %v1938
  %v2253 = vpack.c.b16 %v1941, %v1940
  %v2254 = vpack.c.b16 %v1943, %v1942
  %v2255 = vpack.c.b16 %v1945, %v1944
  %v2256 = vpack.c.b16 %v1947, %v1946
  %v2257 = vpack.c.b16 %v1949, %v1948
  %v2258 = vpack.c.b16 %v1951, %v1950
  %v2259 = vpack.c.b16 %v1953, %v1952
  %v2260 = vpack.c.b16 %v1955, %v1954
  %v2261 = vpack.c.b16 %v1957, %v1956
  %2566 = vmatprep.subr.bf16.mxu0 0
  %2567 = vmatpush1.bf16.msra.mxu0 %v1958
  %2568 = vmatprep.subr.bf16.mxu0 0
  %2569 = vmatpush1.bf16.msra.mxu0 %v1959
  %2570 = vmatprep.subr.bf16.mxu0 0
  %2571 = vmatpush1.bf16.msra.mxu0 %v1960
  %2572 = vmatprep.subr.bf16.mxu0 0
  %2573 = vmatpush1.bf16.msra.mxu0 %v1961
  %2574 = vmatprep.subr.bf16.mxu0 0
  %2575 = vmatpush1.bf16.msra.mxu0 %v1962
  %2576 = vmatprep.subr.bf16.mxu0 0
  %2577 = vmatpush1.bf16.msra.mxu0 %v1963
  %2578 = vmatprep.subr.bf16.mxu0 0
  %2579 = vmatpush1.bf16.msra.mxu0 %v1964
  %2580 = vmatprep.subr.bf16.mxu0 0
  %2581 = vmatpush1.bf16.msra.mxu0 %v1965
  %2582 = vmatprep.subr.bf16.mxu0 0
  %2583 = vmatpush1.bf16.msra.mxu0 %v1966
  %2584 = vmatprep.subr.bf16.mxu0 0
  %2585 = vmatpush1.bf16.msra.mxu0 %v1967
  %2586 = vmatprep.subr.bf16.mxu0 0
  %2587 = vmatpush1.bf16.msra.mxu0 %v1968
  %2588 = vmatprep.subr.bf16.mxu0 0
  %2589 = vmatpush1.bf16.msra.mxu0 %v1969
  %2590 = vmatprep.subr.bf16.mxu0 0
  %2591 = vmatpush1.bf16.msra.mxu0 %v1970
  %2592 = vmatprep.subr.bf16.mxu0 0
  %2593 = vmatpush1.bf16.msra.mxu0 %v1971
  %2594 = vmatprep.subr.bf16.mxu0 0
  %2595 = vmatpush1.bf16.msra.mxu0 %v1972
  %2596 = vmatprep.subr.bf16.mxu0 0
  %2597 = vmatpush1.bf16.msra.mxu0 %v1973
  %2598 = vmatprep.mubr.bf16.mxu0 %v90
  %2599 = vmatmul.mubr.bf16.gmra.mrb[0].mxu0 %v89
  %v2600 = vpop.f32.mrb[0].mxu0
  %v2601 = vadd.f32 %v740, %v2600
  %v2602 = vpop.f32.mrb[0].mxu0
  %v2603 = vpop.f32.mrb[0].mxu0
  %v2604 = vpop.f32.mrb[0].mxu0
  %2605 = vdwg.mxu0
  %2606 = vmatprep.subr.bf16.mxu0 0
  %2607 = vmatpush1.bf16.msra.mxu0 %v1974
  %2608 = vmatprep.subr.bf16.mxu0 0
  %2609 = vmatpush1.bf16.msra.mxu0 %v1975
  %2610 = vmatprep.subr.bf16.mxu0 0
  %2611 = vmatpush1.bf16.msra.mxu0 %v1976
  %2612 = vmatprep.subr.bf16.mxu0 0
  %2613 = vmatpush1.bf16.msra.mxu0 %v1977
  %2614 = vmatprep.subr.bf16.mxu0 0
  %2615 = vmatpush1.bf16.msra.mxu0 %v1978
  %2616 = vmatprep.subr.bf16.mxu0 0
  %2617 = vmatpush1.bf16.msra.mxu0 %v1979
  %2618 = vmatprep.subr.bf16.mxu0 0
  %2619 = vmatpush1.bf16.msra.mxu0 %v1980
  %2620 = vmatprep.subr.bf16.mxu0 0
  %2621 = vmatpush1.bf16.msra.mxu0 %v1981
  %2622 = vmatprep.subr.bf16.mxu0 0
  %2623 = vmatpush1.bf16.msra.mxu0 %v1982
  %2624 = vmatprep.subr.bf16.mxu0 0
  %2625 = vmatpush1.bf16.msra.mxu0 %v1983
  %2626 = vmatprep.subr.bf16.mxu0 0
  %2627 = vmatpush1.bf16.msra.mxu0 %v1984
  %2628 = vmatprep.subr.bf16.mxu0 0
  %2629 = vmatpush1.bf16.msra.mxu0 %v1985
  %2630 = vmatprep.subr.bf16.mxu0 0
  %2631 = vmatpush1.bf16.msra.mxu0 %v1986
  %2632 = vmatprep.subr.bf16.mxu0 0
  %2633 = vmatpush1.bf16.msra.mxu0 %v1987
  %2634 = vmatprep.subr.bf16.mxu0 0
  %2635 = vmatpush1.bf16.msra.mxu0 %v1988
  %2636 = vmatprep.subr.bf16.mxu0 0
  %2637 = vmatpush1.bf16.msra.mxu0 %v1989
  %2638 = vmatprep.mubr.bf16.mxu0 %v92
  %2639 = vmatmul.mubr.bf16.gmra.mrb[0].mxu0 %v91
  %v2640 = vpop.f32.mrb[0].mxu0
  %v2641 = vadd.f32 %v2601, %v2640
  %v2642 = vpop.f32.mrb[0].mxu0
  %v2643 = vpop.f32.mrb[0].mxu0
  %v2644 = vpop.f32.mrb[0].mxu0
  %2645 = vdwg.mxu0
  %2646 = vmatprep.subr.bf16.mxu0 0
  %2647 = vmatpush1.bf16.msra.mxu0 %v1990
  %2648 = vmatprep.subr.bf16.mxu0 0
  %2649 = vmatpush1.bf16.msra.mxu0 %v1991
  %2650 = vmatprep.subr.bf16.mxu0 0
  %2651 = vmatpush1.bf16.msra.mxu0 %v1992
  %2652 = vmatprep.subr.bf16.mxu0 0
  %2653 = vmatpush1.bf16.msra.mxu0 %v1993
  %2654 = vmatprep.subr.bf16.mxu0 0
  %2655 = vmatpush1.bf16.msra.mxu0 %v1994
  %2656 = vmatprep.subr.bf16.mxu0 0
  %2657 = vmatpush1.bf16.msra.mxu0 %v1995
  %2658 = vmatprep.subr.bf16.mxu0 0
  %2659 = vmatpush1.bf16.msra.mxu0 %v1996
  %2660 = vmatprep.subr.bf16.mxu0 0
  %2661 = vmatpush1.bf16.msra.mxu0 %v1997
  %2662 = vmatprep.subr.bf16.mxu0 0
  %2663 = vmatpush1.bf16.msra.mxu0 %v1998
  %2664 = vmatprep.subr.bf16.mxu0 0
  %2665 = vmatpush1.bf16.msra.mxu0 %v1999
  %2666 = vmatprep.subr.bf16.mxu0 0
  %2667 = vmatpush1.bf16.msra.mxu0 %v2000
  %2668 = vmatprep.subr.bf16.mxu0 0
  %2669 = vmatpush1.bf16.msra.mxu0 %v2001
  %2670 = vmatprep.subr.bf16.mxu0 0
  %2671 = vmatpush1.bf16.msra.mxu0 %v2002
  %2672 = vmatprep.subr.bf16.mxu0 0
  %2673 = vmatpush1.bf16.msra.mxu0 %v2003
  %2674 = vmatprep.subr.bf16.mxu0 0
  %2675 = vmatpush1.bf16.msra.mxu0 %v2004
  %2676 = vmatprep.subr.bf16.mxu0 0
  %2677 = vmatpush1.bf16.msra.mxu0 %v2005
  %2678 = vmatprep.mubr.bf16.mxu0 %v94
  %2679 = vmatmul.mubr.bf16.gmra.mrb[0].mxu0 %v93
  %v2680 = vpop.f32.mrb[0].mxu0
  %v2681 = vadd.f32 %v2641, %v2680
  %v2682 = vpop.f32.mrb[0].mxu0
  %v2683 = vpop.f32.mrb[0].mxu0
  %v2684 = vpop.f32.mrb[0].mxu0
  %2685 = vdwg.mxu0
  %2686 = vmatprep.subr.bf16.mxu0 0
  %2687 = vmatpush1.bf16.msra.mxu0 %v2006
  %2688 = vmatprep.subr.bf16.mxu0 0
  %2689 = vmatpush1.bf16.msra.mxu0 %v2007
  %2690 = vmatprep.subr.bf16.mxu0 0
  %2691 = vmatpush1.bf16.msra.mxu0 %v2008
  %2692 = vmatprep.subr.bf16.mxu0 0
  %2693 = vmatpush1.bf16.msra.mxu0 %v2009
  %2694 = vmatprep.subr.bf16.mxu0 0
  %2695 = vmatpush1.bf16.msra.mxu0 %v2010
  %2696 = vmatprep.subr.bf16.mxu0 0
  %2697 = vmatpush1.bf16.msra.mxu0 %v2011
  %2698 = vmatprep.subr.bf16.mxu0 0
  %2699 = vmatpush1.bf16.msra.mxu0 %v2012
  %2700 = vmatprep.subr.bf16.mxu0 0
  %2701 = vmatpush1.bf16.msra.mxu0 %v2013
  %2702 = vmatprep.subr.bf16.mxu0 0
  %2703 = vmatpush1.bf16.msra.mxu0 %v2014
  %2704 = vmatprep.subr.bf16.mxu0 0
  %2705 = vmatpush1.bf16.msra.mxu0 %v2015
  %2706 = vmatprep.subr.bf16.mxu0 0
  %2707 = vmatpush1.bf16.msra.mxu0 %v2016
  %2708 = vmatprep.subr.bf16.mxu0 0
  %2709 = vmatpush1.bf16.msra.mxu0 %v2017
  %2710 = vmatprep.subr.bf16.mxu0 0
  %2711 = vmatpush1.bf16.msra.mxu0 %v2018
  %2712 = vmatprep.subr.bf16.mxu0 0
  %2713 = vmatpush1.bf16.msra.mxu0 %v2019
  %2714 = vmatprep.subr.bf16.mxu0 0
  %2715 = vmatpush1.bf16.msra.mxu0 %v2020
  %2716 = vmatprep.subr.bf16.mxu0 0
  %2717 = vmatpush1.bf16.msra.mxu0 %v2021
  %2718 = vmatprep.mubr.bf16.mxu0 %v96
  %2719 = vmatmul.mubr.bf16.gmra.mrb[0].mxu0 %v95
  %v2720 = vpop.f32.mrb[0].mxu0
  %v2721 = vadd.f32 %v2681, %v2720
  %v2722 = vpop.f32.mrb[0].mxu0
  %v2723 = vpop.f32.mrb[0].mxu0
  %v2724 = vpop.f32.mrb[0].mxu0
  %2725 = vdwg.mxu0
  %2726 = vmatprep.subr.bf16.mxu0 0
  %2727 = vmatpush1.bf16.msra.mxu0 %v2022
  %2728 = vmatprep.subr.bf16.mxu0 0
  %2729 = vmatpush1.bf16.msra.mxu0 %v2023
  %2730 = vmatprep.subr.bf16.mxu0 0
  %2731 = vmatpush1.bf16.msra.mxu0 %v2024
  %2732 = vmatprep.subr.bf16.mxu0 0
  %2733 = vmatpush1.bf16.msra.mxu0 %v2025
  %2734 = vmatprep.subr.bf16.mxu0 0
  %2735 = vmatpush1.bf16.msra.mxu0 %v2026
  %2736 = vmatprep.subr.bf16.mxu0 0
  %2737 = vmatpush1.bf16.msra.mxu0 %v2027
  %2738 = vmatprep.subr.bf16.mxu0 0
  %2739 = vmatpush1.bf16.msra.mxu0 %v2028
  %2740 = vmatprep.subr.bf16.mxu0 0
  %2741 = vmatpush1.bf16.msra.mxu0 %v2029
  %2742 = vmatprep.subr.bf16.mxu0 0
  %2743 = vmatpush1.bf16.msra.mxu0 %v2030
  %2744 = vmatprep.subr.bf16.mxu0 0
  %2745 = vmatpush1.bf16.msra.mxu0 %v2031
  %2746 = vmatprep.subr.bf16.mxu0 0
  %2747 = vmatpush1.bf16.msra.mxu0 %v2032
  %2748 = vmatprep.subr.bf16.mxu0 0
  %2749 = vmatpush1.bf16.msra.mxu0 %v2033
  %2750 = vmatprep.subr.bf16.mxu0 0
  %2751 = vmatpush1.bf16.msra.mxu0 %v2034
  %2752 = vmatprep.subr.bf16.mxu0 0
  %2753 = vmatpush1.bf16.msra.mxu0 %v2035
  %2754 = vmatprep.subr.bf16.mxu0 0
  %2755 = vmatpush1.bf16.msra.mxu0 %v2036
  %2756 = vmatprep.subr.bf16.mxu0 0
  %2757 = vmatpush1.bf16.msra.mxu0 %v2037
  %2758 = vmatprep.mubr.bf16.mxu0 %v98
  %2759 = vmatmul.mubr.bf16.gmra.mrb[0].mxu0 %v97
  %v2760 = vpop.f32.mrb[0].mxu0
  %v2761 = vadd.f32 %v2721, %v2760
  %v2762 = vpop.f32.mrb[0].mxu0
  %v2763 = vpop.f32.mrb[0].mxu0
  %v2764 = vpop.f32.mrb[0].mxu0
  %2765 = vdwg.mxu0
  %2766 = vmatprep.subr.bf16.mxu0 0
  %2767 = vmatpush1.bf16.msra.mxu0 %v2038
  %2768 = vmatprep.subr.bf16.mxu0 0
  %2769 = vmatpush1.bf16.msra.mxu0 %v2039
  %2770 = vmatprep.subr.bf16.mxu0 0
  %2771 = vmatpush1.bf16.msra.mxu0 %v2040
  %2772 = vmatprep.subr.bf16.mxu0 0
  %2773 = vmatpush1.bf16.msra.mxu0 %v2041
  %2774 = vmatprep.subr.bf16.mxu0 0
  %2775 = vmatpush1.bf16.msra.mxu0 %v2042
  %2776 = vmatprep.subr.bf16.mxu0 0
  %2777 = vmatpush1.bf16.msra.mxu0 %v2043
  %2778 = vmatprep.subr.bf16.mxu0 0
  %2779 = vmatpush1.bf16.msra.mxu0 %v2044
  %2780 = vmatprep.subr.bf16.mxu0 0
  %2781 = vmatpush1.bf16.msra.mxu0 %v2045
  %2782 = vmatprep.subr.bf16.mxu0 0
  %2783 = vmatpush1.bf16.msra.mxu0 %v2046
  %2784 = vmatprep.subr.bf16.mxu0 0
  %2785 = vmatpush1.bf16.msra.mxu0 %v2047
  %2786 = vmatprep.subr.bf16.mxu0 0
  %2787 = vmatpush1.bf16.msra.mxu0 %v2048
  %2788 = vmatprep.subr.bf16.mxu0 0
  %2789 = vmatpush1.bf16.msra.mxu0 %v2049
  %2790 = vmatprep.subr.bf16.mxu0 0
  %2791 = vmatpush1.bf16.msra.mxu0 %v2050
  %2792 = vmatprep.subr.bf16.mxu0 0
  %2793 = vmatpush1.bf16.msra.mxu0 %v2051
  %2794 = vmatprep.subr.bf16.mxu0 0
  %2795 = vmatpush1.bf16.msra.mxu0 %v2052
  %2796 = vmatprep.subr.bf16.mxu0 0
  %2797 = vmatpush1.bf16.msra.mxu0 %v2053
  %2798 = vmatprep.mubr.bf16.mxu0 %v100
  %2799 = vmatmul.mubr.bf16.gmra.mrb[0].mxu0 %v99
  %v2800 = vpop.f32.mrb[0].mxu0
  %v2801 = vadd.f32 %v2761, %v2800
  %v2802 = vpop.f32.mrb[0].mxu0
  %v2803 = vpop.f32.mrb[0].mxu0
  %v2804 = vpop.f32.mrb[0].mxu0
  %2805 = vdwg.mxu0
  %2806 = vmatprep.subr.bf16.mxu0 0
  %2807 = vmatpush1.bf16.msra.mxu0 %v2054
  %2808 = vmatprep.subr.bf16.mxu0 0
  %2809 = vmatpush1.bf16.msra.mxu0 %v2055
  %2810 = vmatprep.subr.bf16.mxu0 0
  %2811 = vmatpush1.bf16.msra.mxu0 %v2056
  %2812 = vmatprep.subr.bf16.mxu0 0
  %2813 = vmatpush1.bf16.msra.mxu0 %v2057
  %2814 = vmatprep.subr.bf16.mxu0 0
  %2815 = vmatpush1.bf16.msra.mxu0 %v2058
  %2816 = vmatprep.subr.bf16.mxu0 0
  %2817 = vmatpush1.bf16.msra.mxu0 %v2059
  %2818 = vmatprep.subr.bf16.mxu0 0
  %2819 = vmatpush1.bf16.msra.mxu0 %v2060
  %2820 = vmatprep.subr.bf16.mxu0 0
  %2821 = vmatpush1.bf16.msra.mxu0 %v2061
  %2822 = vmatprep.subr.bf16.mxu0 0
  %2823 = vmatpush1.bf16.msra.mxu0 %v2062
  %2824 = vmatprep.subr.bf16.mxu0 0
  %2825 = vmatpush1.bf16.msra.mxu0 %v2063
  %2826 = vmatprep.subr.bf16.mxu0 0
  %2827 = vmatpush1.bf16.msra.mxu0 %v2064
  %2828 = vmatprep.subr.bf16.mxu0 0
  %2829 = vmatpush1.bf16.msra.mxu0 %v2065
  %2830 = vmatprep.subr.bf16.mxu0 0
  %2831 = vmatpush1.bf16.msra.mxu0 %v2066
  %2832 = vmatprep.subr.bf16.mxu0 0
  %2833 = vmatpush1.bf16.msra.mxu0 %v2067
  %2834 = vmatprep.subr.bf16.mxu0 0
  %2835 = vmatpush1.bf16.msra.mxu0 %v2068
  %2836 = vmatprep.subr.bf16.mxu0 0
  %2837 = vmatpush1.bf16.msra.mxu0 %v2069
  %2838 = vmatprep.mubr.bf16.mxu0 %v102
  %2839 = vmatmul.mubr.bf16.gmra.mrb[0].mxu0 %v101
  %v2840 = vpop.f32.mrb[0].mxu0
  %v2841 = vadd.f32 %v2801, %v2840
  %v2842 = vpop.f32.mrb[0].mxu0
  %v2843 = vpop.f32.mrb[0].mxu0
  %v2844 = vpop.f32.mrb[0].mxu0
  %2845 = vdwg.mxu0
  %2846 = vmatprep.subr.bf16.mxu0 0
  %2847 = vmatpush1.bf16.msra.mxu0 %v2070
  %2848 = vmatprep.subr.bf16.mxu0 0
  %2849 = vmatpush1.bf16.msra.mxu0 %v2071
  %2850 = vmatprep.subr.bf16.mxu0 0
  %2851 = vmatpush1.bf16.msra.mxu0 %v2072
  %2852 = vmatprep.subr.bf16.mxu0 0
  %2853 = vmatpush1.bf16.msra.mxu0 %v2073
  %2854 = vmatprep.subr.bf16.mxu0 0
  %2855 = vmatpush1.bf16.msra.mxu0 %v2074
  %2856 = vmatprep.subr.bf16.mxu0 0
  %2857 = vmatpush1.bf16.msra.mxu0 %v2075
  %2858 = vmatprep.subr.bf16.mxu0 0
  %2859 = vmatpush1.bf16.msra.mxu0 %v2076
  %2860 = vmatprep.subr.bf16.mxu0 0
  %2861 = vmatpush1.bf16.msra.mxu0 %v2077
  %2862 = vmatprep.subr.bf16.mxu0 0
  %2863 = vmatpush1.bf16.msra.mxu0 %v2078
  %2864 = vmatprep.subr.bf16.mxu0 0
  %2865 = vmatpush1.bf16.msra.mxu0 %v2079
  %2866 = vmatprep.subr.bf16.mxu0 0
  %2867 = vmatpush1.bf16.msra.mxu0 %v2080
  %2868 = vmatprep.subr.bf16.mxu0 0
  %2869 = vmatpush1.bf16.msra.mxu0 %v2081
  %2870 = vmatprep.subr.bf16.mxu0 0
  %2871 = vmatpush1.bf16.msra.mxu0 %v2082
  %2872 = vmatprep.subr.bf16.mxu0 0
  %2873 = vmatpush1.bf16.msra.mxu0 %v2083
  %2874 = vmatprep.subr.bf16.mxu0 0
  %2875 = vmatpush1.bf16.msra.mxu0 %v2084
  %2876 = vmatprep.subr.bf16.mxu0 0
  %2877 = vmatpush1.bf16.msra.mxu0 %v2085
  %2878 = vmatprep.mubr.bf16.mxu0 %v104
  %2879 = vmatmul.mubr.bf16.gmra.mrb[0].mxu0 %v103
  %v2880 = vpop.f32.mrb[0].mxu0
  %v2881 = vadd.f32 %v2841, %v2880
  %v2882 = vpop.f32.mrb[0].mxu0
  %v2883 = vpop.f32.mrb[0].mxu0
  %v2884 = vpop.f32.mrb[0].mxu0
  %2885 = vdwg.mxu0
  %2886 = vmatprep.subr.bf16.mxu0 0
  %2887 = vmatpush1.bf16.msra.mxu0 %v2086
  %2888 = vmatprep.subr.bf16.mxu0 0
  %2889 = vmatpush1.bf16.msra.mxu0 %v2087
  %2890 = vmatprep.subr.bf16.mxu0 0
  %2891 = vmatpush1.bf16.msra.mxu0 %v2088
  %2892 = vmatprep.subr.bf16.mxu0 0
  %2893 = vmatpush1.bf16.msra.mxu0 %v2089
  %2894 = vmatprep.subr.bf16.mxu0 0
  %2895 = vmatpush1.bf16.msra.mxu0 %v2090
  %2896 = vmatprep.subr.bf16.mxu0 0
  %2897 = vmatpush1.bf16.msra.mxu0 %v2091
  %2898 = vmatprep.subr.bf16.mxu0 0
  %2899 = vmatpush1.bf16.msra.mxu0 %v2092
  %2900 = vmatprep.subr.bf16.mxu0 0
  %2901 = vmatpush1.bf16.msra.mxu0 %v2093
  %2902 = vmatprep.subr.bf16.mxu0 0
  %2903 = vmatpush1.bf16.msra.mxu0 %v2094
  %2904 = vmatprep.subr.bf16.mxu0 0
  %2905 = vmatpush1.bf16.msra.mxu0 %v2095
  %2906 = vmatprep.subr.bf16.mxu0 0
  %2907 = vmatpush1.bf16.msra.mxu0 %v2096
  %2908 = vmatprep.subr.bf16.mxu0 0
  %2909 = vmatpush1.bf16.msra.mxu0 %v2097
  %2910 = vmatprep.subr.bf16.mxu0 0
  %2911 = vmatpush1.bf16.msra.mxu0 %v2098
  %2912 = vmatprep.subr.bf16.mxu0 0
  %2913 = vmatpush1.bf16.msra.mxu0 %v2099
  %2914 = vmatprep.subr.bf16.mxu0 0
  %2915 = vmatpush1.bf16.msra.mxu0 %v2100
  %2916 = vmatprep.subr.bf16.mxu0 0
  %2917 = vmatpush1.bf16.msra.mxu0 %v2101
  %2918 = vmatprep.mubr.bf16.mxu0 %v106
  %2919 = vmatmul.mubr.bf16.gmra.mrb[0].mxu0 %v105
  %v2920 = vpop.f32.mrb[0].mxu0
  %v2921 = vadd.f32 %v2881, %v2920
  %v2922 = vpop.f32.mrb[0].mxu0
  %v2923 = vpop.f32.mrb[0].mxu0
  %v2924 = vpop.f32.mrb[0].mxu0
  %2925 = vdwg.mxu0
  %2926 = vmatprep.subr.bf16.mxu0 0
  %2927 = vmatpush1.bf16.msra.mxu0 %v2102
  %2928 = vmatprep.subr.bf16.mxu0 0
  %2929 = vmatpush1.bf16.msra.mxu0 %v2103
  %2930 = vmatprep.subr.bf16.mxu0 0
  %2931 = vmatpush1.bf16.msra.mxu0 %v2104
  %2932 = vmatprep.subr.bf16.mxu0 0
  %2933 = vmatpush1.bf16.msra.mxu0 %v2105
  %2934 = vmatprep.subr.bf16.mxu0 0
  %2935 = vmatpush1.bf16.msra.mxu0 %v2106
  %2936 = vmatprep.subr.bf16.mxu0 0
  %2937 = vmatpush1.bf16.msra.mxu0 %v2107
  %2938 = vmatprep.subr.bf16.mxu0 0
  %2939 = vmatpush1.bf16.msra.mxu0 %v2108
  %2940 = vmatprep.subr.bf16.mxu0 0
  %2941 = vmatpush1.bf16.msra.mxu0 %v2109
  %2942 = vmatprep.subr.bf16.mxu0 0
  %2943 = vmatpush1.bf16.msra.mxu0 %v2110
  %2944 = vmatprep.subr.bf16.mxu0 0
  %2945 = vmatpush1.bf16.msra.mxu0 %v2111
  %2946 = vmatprep.subr.bf16.mxu0 0
  %2947 = vmatpush1.bf16.msra.mxu0 %v2112
  %2948 = vmatprep.subr.bf16.mxu0 0
  %2949 = vmatpush1.bf16.msra.mxu0 %v2113
  %2950 = vmatprep.subr.bf16.mxu0 0
  %2951 = vmatpush1.bf16.msra.mxu0 %v2114
  %2952 = vmatprep.subr.bf16.mxu0 0
  %2953 = vmatpush1.bf16.msra.mxu0 %v2115
  %2954 = vmatprep.subr.bf16.mxu0 0
  %2955 = vmatpush1.bf16.msra.mxu0 %v2116
  %2956 = vmatprep.subr.bf16.mxu0 0
  %2957 = vmatpush1.bf16.msra.mxu0 %v2117
  %2958 = vmatprep.mubr.bf16.mxu0 %v108
  %2959 = vmatmul.mubr.bf16.gmra.mrb[0].mxu0 %v107
  %v2960 = vpop.f32.mrb[0].mxu0
  %v2961 = vadd.f32 %v2921, %v2960
  %v2962 = vpop.f32.mrb[0].mxu0
  %v2963 = vpop.f32.mrb[0].mxu0
  %v2964 = vpop.f32.mrb[0].mxu0
  %2965 = vdwg.mxu0
  %2966 = vmatprep.subr.bf16.mxu0 0
  %2967 = vmatpush1.bf16.msra.mxu0 %v2118
  %2968 = vmatprep.subr.bf16.mxu0 0
  %2969 = vmatpush1.bf16.msra.mxu0 %v2119
  %2970 = vmatprep.subr.bf16.mxu0 0
  %2971 = vmatpush1.bf16.msra.mxu0 %v2120
  %2972 = vmatprep.subr.bf16.mxu0 0
  %2973 = vmatpush1.bf16.msra.mxu0 %v2121
  %2974 = vmatprep.subr.bf16.mxu0 0
  %2975 = vmatpush1.bf16.msra.mxu0 %v2122
  %2976 = vmatprep.subr.bf16.mxu0 0
  %2977 = vmatpush1.bf16.msra.mxu0 %v2123
  %2978 = vmatprep.subr.bf16.mxu0 0
  %2979 = vmatpush1.bf16.msra.mxu0 %v2124
  %2980 = vmatprep.subr.bf16.mxu0 0
  %2981 = vmatpush1.bf16.msra.mxu0 %v2125
  %2982 = vmatprep.subr.bf16.mxu0 0
  %2983 = vmatpush1.bf16.msra.mxu0 %v2126
  %2984 = vmatprep.subr.bf16.mxu0 0
  %2985 = vmatpush1.bf16.msra.mxu0 %v2127
  %2986 = vmatprep.subr.bf16.mxu0 0
  %2987 = vmatpush1.bf16.msra.mxu0 %v2128
  %2988 = vmatprep.subr.bf16.mxu0 0
  %2989 = vmatpush1.bf16.msra.mxu0 %v2129
  %2990 = vmatprep.subr.bf16.mxu0 0
  %2991 = vmatpush1.bf16.msra.mxu0 %v2130
  %2992 = vmatprep.subr.bf16.mxu0 0
  %2993 = vmatpush1.bf16.msra.mxu0 %v2131
  %2994 = vmatprep.subr.bf16.mxu0 0
  %2995 = vmatpush1.bf16.msra.mxu0 %v2132
  %2996 = vmatprep.subr.bf16.mxu0 0
  %2997 = vmatpush1.bf16.msra.mxu0 %v2133
  %2998 = vmatprep.mubr.bf16.mxu0 %v110
  %2999 = vmatmul.mubr.bf16.gmra.mrb[0].mxu0 %v109
  %v3000 = vpop.f32.mrb[0].mxu0
  %v3001 = vadd.f32 %v2961, %v3000
  %v3002 = vpop.f32.mrb[0].mxu0
  %v3003 = vpop.f32.mrb[0].mxu0
  %v3004 = vpop.f32.mrb[0].mxu0
  %3005 = vdwg.mxu0
  %3006 = vmatprep.subr.bf16.mxu0 0
  %3007 = vmatpush1.bf16.msra.mxu0 %v2134
  %3008 = vmatprep.subr.bf16.mxu0 0
  %3009 = vmatpush1.bf16.msra.mxu0 %v2135
  %3010 = vmatprep.subr.bf16.mxu0 0
  %3011 = vmatpush1.bf16.msra.mxu0 %v2136
  %3012 = vmatprep.subr.bf16.mxu0 0
  %3013 = vmatpush1.bf16.msra.mxu0 %v2137
  %3014 = vmatprep.subr.bf16.mxu0 0
  %3015 = vmatpush1.bf16.msra.mxu0 %v2138
  %3016 = vmatprep.subr.bf16.mxu0 0
  %3017 = vmatpush1.bf16.msra.mxu0 %v2139
  %3018 = vmatprep.subr.bf16.mxu0 0
  %3019 = vmatpush1.bf16.msra.mxu0 %v2140
  %3020 = vmatprep.subr.bf16.mxu0 0
  %3021 = vmatpush1.bf16.msra.mxu0 %v2141
  %3022 = vmatprep.subr.bf16.mxu0 0
  %3023 = vmatpush1.bf16.msra.mxu0 %v2142
  %3024 = vmatprep.subr.bf16.mxu0 0
  %3025 = vmatpush1.bf16.msra.mxu0 %v2143
  %3026 = vmatprep.subr.bf16.mxu0 0
  %3027 = vmatpush1.bf16.msra.mxu0 %v2144
  %3028 = vmatprep.subr.bf16.mxu0 0
  %3029 = vmatpush1.bf16.msra.mxu0 %v2145
  %3030 = vmatprep.subr.bf16.mxu0 0
  %3031 = vmatpush1.bf16.msra.mxu0 %v2146
  %3032 = vmatprep.subr.bf16.mxu0 0
  %3033 = vmatpush1.bf16.msra.mxu0 %v2147
  %3034 = vmatprep.subr.bf16.mxu0 0
  %3035 = vmatpush1.bf16.msra.mxu0 %v2148
  %3036 = vmatprep.subr.bf16.mxu0 0
  %3037 = vmatpush1.bf16.msra.mxu0 %v2149
  %3038 = vmatprep.mubr.bf16.mxu0 %v112
  %3039 = vmatmul.mubr.bf16.gmra.mrb[0].mxu0 %v111
  %v3040 = vpop.f32.mrb[0].mxu0
  %v3041 = vadd.f32 %v3001, %v3040
  %v3042 = vpop.f32.mrb[0].mxu0
  %v3043 = vpop.f32.mrb[0].mxu0
  %v3044 = vpop.f32.mrb[0].mxu0
  %3045 = vdwg.mxu0
  %3046 = vmatprep.subr.bf16.mxu0 0
  %3047 = vmatpush1.bf16.msra.mxu0 %v2150
  %3048 = vmatprep.subr.bf16.mxu0 0
  %3049 = vmatpush1.bf16.msra.mxu0 %v2151
  %3050 = vmatprep.subr.bf16.mxu0 0
  %3051 = vmatpush1.bf16.msra.mxu0 %v2152
  %3052 = vmatprep.subr.bf16.mxu0 0
  %3053 = vmatpush1.bf16.msra.mxu0 %v2153
  %3054 = vmatprep.subr.bf16.mxu0 0
  %3055 = vmatpush1.bf16.msra.mxu0 %v2154
  %3056 = vmatprep.subr.bf16.mxu0 0
  %3057 = vmatpush1.bf16.msra.mxu0 %v2155
  %3058 = vmatprep.subr.bf16.mxu0 0
  %3059 = vmatpush1.bf16.msra.mxu0 %v2156
  %3060 = vmatprep.subr.bf16.mxu0 0
  %3061 = vmatpush1.bf16.msra.mxu0 %v2157
  %3062 = vmatprep.subr.bf16.mxu0 0
  %3063 = vmatpush1.bf16.msra.mxu0 %v2158
  %3064 = vmatprep.subr.bf16.mxu0 0
  %3065 = vmatpush1.bf16.msra.mxu0 %v2159
  %3066 = vmatprep.subr.bf16.mxu0 0
  %3067 = vmatpush1.bf16.msra.mxu0 %v2160
  %3068 = vmatprep.subr.bf16.mxu0 0
  %3069 = vmatpush1.bf16.msra.mxu0 %v2161
  %3070 = vmatprep.subr.bf16.mxu0 0
  %3071 = vmatpush1.bf16.msra.mxu0 %v2162
  %3072 = vmatprep.subr.bf16.mxu0 0
  %3073 = vmatpush1.bf16.msra.mxu0 %v2163
  %3074 = vmatprep.subr.bf16.mxu0 0
  %3075 = vmatpush1.bf16.msra.mxu0 %v2164
  %3076 = vmatprep.subr.bf16.mxu0 0
  %3077 = vmatpush1.bf16.msra.mxu0 %v2165
  %3078 = vmatprep.mubr.bf16.mxu0 %v114
  %3079 = vmatmul.mubr.bf16.gmra.mrb[0].mxu0 %v113
  %v3080 = vpop.f32.mrb[0].mxu0
  %v3081 = vadd.f32 %v3041, %v3080
  %v3082 = vpop.f32.mrb[0].mxu0
  %v3083 = vpop.f32.mrb[0].mxu0
  %v3084 = vpop.f32.mrb[0].mxu0
  %3085 = vdwg.mxu0
  %3086 = vmatprep.subr.bf16.mxu0 0
  %3087 = vmatpush1.bf16.msra.mxu0 %v2166
  %3088 = vmatprep.subr.bf16.mxu0 0
  %3089 = vmatpush1.bf16.msra.mxu0 %v2167
  %3090 = vmatprep.subr.bf16.mxu0 0
  %3091 = vmatpush1.bf16.msra.mxu0 %v2168
  %3092 = vmatprep.subr.bf16.mxu0 0
  %3093 = vmatpush1.bf16.msra.mxu0 %v2169
  %3094 = vmatprep.subr.bf16.mxu0 0
  %3095 = vmatpush1.bf16.msra.mxu0 %v2170
  %3096 = vmatprep.subr.bf16.mxu0 0
  %3097 = vmatpush1.bf16.msra.mxu0 %v2171
  %3098 = vmatprep.subr.bf16.mxu0 0
  %3099 = vmatpush1.bf16.msra.mxu0 %v2172
  %3100 = vmatprep.subr.bf16.mxu0 0
  %3101 = vmatpush1.bf16.msra.mxu0 %v2173
  %3102 = vmatprep.subr.bf16.mxu0 0
  %3103 = vmatpush1.bf16.msra.mxu0 %v2174
  %3104 = vmatprep.subr.bf16.mxu0 0
  %3105 = vmatpush1.bf16.msra.mxu0 %v2175
  %3106 = vmatprep.subr.bf16.mxu0 0
  %3107 = vmatpush1.bf16.msra.mxu0 %v2176
  %3108 = vmatprep.subr.bf16.mxu0 0
  %3109 = vmatpush1.bf16.msra.mxu0 %v2177
  %3110 = vmatprep.subr.bf16.mxu0 0
  %3111 = vmatpush1.bf16.msra.mxu0 %v2178
  %3112 = vmatprep.subr.bf16.mxu0 0
  %3113 = vmatpush1.bf16.msra.mxu0 %v2179
  %3114 = vmatprep.subr.bf16.mxu0 0
  %3115 = vmatpush1.bf16.msra.mxu0 %v2180
  %3116 = vmatprep.subr.bf16.mxu0 0
  %3117 = vmatpush1.bf16.msra.mxu0 %v2181
  %3118 = vmatprep.mubr.bf16.mxu0 %v116
  %3119 = vmatmul.mubr.bf16.gmra.mrb[0].mxu0 %v115
  %v3120 = vpop.f32.mrb[0].mxu0
  %v3121 = vadd.f32 %v3081, %v3120
  %v3122 = vpop.f32.mrb[0].mxu0
  %v3123 = vpop.f32.mrb[0].mxu0
  %v3124 = vpop.f32.mrb[0].mxu0
  %3125 = vdwg.mxu0
  %3126 = vmatprep.subr.bf16.mxu0 0
  %3127 = vmatpush1.bf16.msra.mxu0 %v2182
  %3128 = vmatprep.subr.bf16.mxu0 0
  %3129 = vmatpush1.bf16.msra.mxu0 %v2183
  %3130 = vmatprep.subr.bf16.mxu0 0
  %3131 = vmatpush1.bf16.msra.mxu0 %v2184
  %3132 = vmatprep.subr.bf16.mxu0 0
  %3133 = vmatpush1.bf16.msra.mxu0 %v2185
  %3134 = vmatprep.subr.bf16.mxu0 0
  %3135 = vmatpush1.bf16.msra.mxu0 %v2186
  %3136 = vmatprep.subr.bf16.mxu0 0
  %3137 = vmatpush1.bf16.msra.mxu0 %v2187
  %3138 = vmatprep.subr.bf16.mxu0 0
  %3139 = vmatpush1.bf16.msra.mxu0 %v2188
  %3140 = vmatprep.subr.bf16.mxu0 0
  %3141 = vmatpush1.bf16.msra.mxu0 %v2189
  %3142 = vmatprep.subr.bf16.mxu0 0
  %3143 = vmatpush1.bf16.msra.mxu0 %v2190
  %3144 = vmatprep.subr.bf16.mxu0 0
  %3145 = vmatpush1.bf16.msra.mxu0 %v2191
  %3146 = vmatprep.subr.bf16.mxu0 0
  %3147 = vmatpush1.bf16.msra.mxu0 %v2192
  %3148 = vmatprep.subr.bf16.mxu0 0
  %3149 = vmatpush1.bf16.msra.mxu0 %v2193
  %3150 = vmatprep.subr.bf16.mxu0 0
  %3151 = vmatpush1.bf16.msra.mxu0 %v2194
  %3152 = vmatprep.subr.bf16.mxu0 0
  %3153 = vmatpush1.bf16.msra.mxu0 %v2195
  %3154 = vmatprep.subr.bf16.mxu0 0
  %3155 = vmatpush1.bf16.msra.mxu0 %v2196
  %3156 = vmatprep.subr.bf16.mxu0 0
  %3157 = vmatpush1.bf16.msra.mxu0 %v2197
  %3158 = vmatprep.mubr.bf16.mxu0 %v118
  %3159 = vmatmul.mubr.bf16.gmra.mrb[0].mxu0 %v117
  %v3160 = vpop.f32.mrb[0].mxu0
  %v3161 = vadd.f32 %v3121, %v3160
  %v3162 = vpop.f32.mrb[0].mxu0
  %v3163 = vpop.f32.mrb[0].mxu0
  %v3164 = vpop.f32.mrb[0].mxu0
  %3165 = vdwg.mxu0
  %3166 = vmatprep.subr.bf16.mxu0 0
  %3167 = vmatpush1.bf16.msra.mxu0 %v2198
  %3168 = vmatprep.subr.bf16.mxu0 0
  %3169 = vmatpush1.bf16.msra.mxu0 %v2199
  %3170 = vmatprep.subr.bf16.mxu0 0
  %3171 = vmatpush1.bf16.msra.mxu0 %v2200
  %3172 = vmatprep.subr.bf16.mxu0 0
  %3173 = vmatpush1.bf16.msra.mxu0 %v2201
  %3174 = vmatprep.subr.bf16.mxu0 0
  %3175 = vmatpush1.bf16.msra.mxu0 %v2202
  %3176 = vmatprep.subr.bf16.mxu0 0
  %3177 = vmatpush1.bf16.msra.mxu0 %v2203
  %3178 = vmatprep.subr.bf16.mxu0 0
  %3179 = vmatpush1.bf16.msra.mxu0 %v2204
  %3180 = vmatprep.subr.bf16.mxu0 0
  %3181 = vmatpush1.bf16.msra.mxu0 %v2205
  %3182 = vmatprep.subr.bf16.mxu0 0
  %3183 = vmatpush1.bf16.msra.mxu0 %v2206
  %3184 = vmatprep.subr.bf16.mxu0 0
  %3185 = vmatpush1.bf16.msra.mxu0 %v2207
  %3186 = vmatprep.subr.bf16.mxu0 0
  %3187 = vmatpush1.bf16.msra.mxu0 %v2208
  %3188 = vmatprep.subr.bf16.mxu0 0
  %3189 = vmatpush1.bf16.msra.mxu0 %v2209
  %3190 = vmatprep.subr.bf16.mxu0 0
  %3191 = vmatpush1.bf16.msra.mxu0 %v2210
  %3192 = vmatprep.subr.bf16.mxu0 0
  %3193 = vmatpush1.bf16.msra.mxu0 %v2211
  %3194 = vmatprep.subr.bf16.mxu0 0
  %3195 = vmatpush1.bf16.msra.mxu0 %v2212
  %3196 = vmatprep.subr.bf16.mxu0 0
  %3197 = vmatpush1.bf16.msra.mxu0 %v2213
  %3198 = vmatprep.mubr.bf16.mxu0 %v120
  %3199 = vmatmul.mubr.bf16.gmra.mrb[0].mxu0 %v119
  %v3200 = vpop.f32.mrb[0].mxu0
  %v3201 = vadd.f32 %v3161, %v3200
  %v3202 = vpop.f32.mrb[0].mxu0
  %v3203 = vpop.f32.mrb[0].mxu0
  %v3204 = vpop.f32.mrb[0].mxu0
  %3205 = vdwg.mxu0
  %3206 = vmatprep.subr.bf16.mxu0 0
  %3207 = vmatpush1.bf16.msra.mxu0 %v2214
  %3208 = vmatprep.subr.bf16.mxu0 0
  %3209 = vmatpush1.bf16.msra.mxu0 %v2215
  %3210 = vmatprep.subr.bf16.mxu0 0
  %3211 = vmatpush1.bf16.msra.mxu0 %v2216
  %3212 = vmatprep.subr.bf16.mxu0 0
  %3213 = vmatpush1.bf16.msra.mxu0 %v2217
  %3214 = vmatprep.subr.bf16.mxu0 0
  %3215 = vmatpush1.bf16.msra.mxu0 %v2218
  %3216 = vmatprep.subr.bf16.mxu0 0
  %3217 = vmatpush1.bf16.msra.mxu0 %v2219
  %3218 = vmatprep.subr.bf16.mxu0 0
  %3219 = vmatpush1.bf16.msra.mxu0 %v2220
  %3220 = vmatprep.subr.bf16.mxu0 0
  %3221 = vmatpush1.bf16.msra.mxu0 %v2221
  %3222 = vmatprep.subr.bf16.mxu0 0
  %3223 = vmatpush1.bf16.msra.mxu0 %v2222
  %3224 = vmatprep.subr.bf16.mxu0 0
  %3225 = vmatpush1.bf16.msra.mxu0 %v2223
  %3226 = vmatprep.subr.bf16.mxu0 0
  %3227 = vmatpush1.bf16.msra.mxu0 %v2224
  %3228 = vmatprep.subr.bf16.mxu0 0
  %3229 = vmatpush1.bf16.msra.mxu0 %v2225
  %3230 = vmatprep.subr.bf16.mxu0 0
  %3231 = vmatpush1.bf16.msra.mxu0 %v2226
  %3232 = vmatprep.subr.bf16.mxu0 0
  %3233 = vmatpush1.bf16.msra.mxu0 %v2227
  %3234 = vmatprep.subr.bf16.mxu0 0
  %3235 = vmatpush1.bf16.msra.mxu0 %v2228
  %3236 = vmatprep.subr.bf16.mxu0 0
  %3237 = vmatpush1.bf16.msra.mxu0 %v2229
  %3238 = vmatprep.mubr.bf16.mxu0 %v122
  %3239 = vmatmul.mubr.bf16.gmra.mrb[0].mxu0 %v121
  %v3240 = vpop.f32.mrb[0].mxu0
  %v3241 = vadd.f32 %v3201, %v3240
  %v3242 = vpop.f32.mrb[0].mxu0
  %v3243 = vpop.f32.mrb[0].mxu0
  %v3244 = vpop.f32.mrb[0].mxu0
  %3245 = vdwg.mxu0
  %3246 = vmatprep.subr.bf16.mxu0 0
  %3247 = vmatpush1.bf16.msra.mxu0 %v2230
  %3248 = vmatprep.subr.bf16.mxu0 0
  %3249 = vmatpush1.bf16.msra.mxu0 %v2231
  %3250 = vmatprep.subr.bf16.mxu0 0
  %3251 = vmatpush1.bf16.msra.mxu0 %v2232
  %3252 = vmatprep.subr.bf16.mxu0 0
  %3253 = vmatpush1.bf16.msra.mxu0 %v2233
  %3254 = vmatprep.subr.bf16.mxu0 0
  %3255 = vmatpush1.bf16.msra.mxu0 %v2234
  %3256 = vmatprep.subr.bf16.mxu0 0
  %3257 = vmatpush1.bf16.msra.mxu0 %v2235
  %3258 = vmatprep.subr.bf16.mxu0 0
  %3259 = vmatpush1.bf16.msra.mxu0 %v2236
  %3260 = vmatprep.subr.bf16.mxu0 0
  %3261 = vmatpush1.bf16.msra.mxu0 %v2237
  %3262 = vmatprep.subr.bf16.mxu0 0
  %3263 = vmatpush1.bf16.msra.mxu0 %v2238
  %3264 = vmatprep.subr.bf16.mxu0 0
  %3265 = vmatpush1.bf16.msra.mxu0 %v2239
  %3266 = vmatprep.subr.bf16.mxu0 0
  %3267 = vmatpush1.bf16.msra.mxu0 %v2240
  %3268 = vmatprep.subr.bf16.mxu0 0
  %3269 = vmatpush1.bf16.msra.mxu0 %v2241
  %3270 = vmatprep.subr.bf16.mxu0 0
  %3271 = vmatpush1.bf16.msra.mxu0 %v2242
  %3272 = vmatprep.subr.bf16.mxu0 0
  %3273 = vmatpush1.bf16.msra.mxu0 %v2243
  %3274 = vmatprep.subr.bf16.mxu0 0
  %3275 = vmatpush1.bf16.msra.mxu0 %v2244
  %3276 = vmatprep.subr.bf16.mxu0 0
  %3277 = vmatpush1.bf16.msra.mxu0 %v2245
  %3278 = vmatprep.mubr.bf16.mxu0 %v124
  %3279 = vmatmul.mubr.bf16.gmra.mrb[0].mxu0 %v123
  %v3280 = vpop.f32.mrb[0].mxu0
  %v3281 = vadd.f32 %v3241, %v3280
  %v3282 = vpop.f32.mrb[0].mxu0
  %v3283 = vpop.f32.mrb[0].mxu0
  %v3284 = vpop.f32.mrb[0].mxu0
  %3285 = vdwg.mxu0
  %3286 = vmatprep.subr.bf16.mxu0 0
  %3287 = vmatpush1.bf16.msra.mxu0 %v2246
  %3288 = vmatprep.subr.bf16.mxu0 0
  %3289 = vmatpush1.bf16.msra.mxu0 %v2247
  %3290 = vmatprep.subr.bf16.mxu0 0
  %3291 = vmatpush1.bf16.msra.mxu0 %v2248
  %3292 = vmatprep.subr.bf16.mxu0 0
  %3293 = vmatpush1.bf16.msra.mxu0 %v2249
  %3294 = vmatprep.subr.bf16.mxu0 0
  %3295 = vmatpush1.bf16.msra.mxu0 %v2250
  %3296 = vmatprep.subr.bf16.mxu0 0
  %3297 = vmatpush1.bf16.msra.mxu0 %v2251
  %3298 = vmatprep.subr.bf16.mxu0 0
  %3299 = vmatpush1.bf16.msra.mxu0 %v2252
  %3300 = vmatprep.subr.bf16.mxu0 0
  %3301 = vmatpush1.bf16.msra.mxu0 %v2253
  %3302 = vmatprep.subr.bf16.mxu0 0
  %3303 = vmatpush1.bf16.msra.mxu0 %v2254
  %3304 = vmatprep.subr.bf16.mxu0 0
  %3305 = vmatpush1.bf16.msra.mxu0 %v2255
  %3306 = vmatprep.subr.bf16.mxu0 0
  %3307 = vmatpush1.bf16.msra.mxu0 %v2256
  %3308 = vmatprep.subr.bf16.mxu0 0
  %3309 = vmatpush1.bf16.msra.mxu0 %v2257
  %3310 = vmatprep.subr.bf16.mxu0 0
  %3311 = vmatpush1.bf16.msra.mxu0 %v2258
  %3312 = vmatprep.subr.bf16.mxu0 0
  %3313 = vmatpush1.bf16.msra.mxu0 %v2259
  %3314 = vmatprep.subr.bf16.mxu0 0
  %3315 = vmatpush1.bf16.msra.mxu0 %v2260
  %3316 = vmatprep.subr.bf16.mxu0 0
  %3317 = vmatpush1.bf16.msra.mxu0 %v2261
  %3318 = vmatprep.mubr.bf16.mxu0 %v126
  %3319 = vmatmul.mubr.bf16.gmra.mrb[0].mxu0 %v125
  %v3320 = vpop.f32.mrb[0].mxu0
  %v3321 = vadd.f32 %v3281, %v3320
  %v3322 = vpop.f32.mrb[0].mxu0
  %v3323 = vpop.f32.mrb[0].mxu0
  %v3324 = vpop.f32.mrb[0].mxu0
  %3325 = vdwg.mxu0
  %v3326 = vld [vmem:[%s3] sm:$0xff]
  %v3327 = vld [vmem:[%s3 + $0x8] sm:$0xff]
  %v3328 = vld [vmem:[%s3 + $0x10] sm:$0xff]
  %v3329 = vld [vmem:[%s3 + $0x18] sm:$0xff]
  %v3330 = vld [vmem:[%s4] sm:$0x1]
  %v3332 = vlaneseq
  %v3333 = vshrl.u32 %v3332, 7
  %v3334 = vsub.s32 0, %v3333
  %v3335 = vrot.slane %v3330, %v3334
  %vm3337 = vcmask 261120
  %v3339 = vsel %vm3337, %v3321, 0
  %3341 = vmatprep.subr.mxu0 0.0
  %3342 = vmatpush1.msra.mxu0 %v3326
  %3343 = vmatprep.subr.mxu0 0.0
  %3344 = vmatpush1.msra.mxu0 %v3327
  %3345 = vmatprep.subr.mxu0 0.0
  %3346 = vmatpush1.msra.mxu0 %v3328
  %3347 = vmatprep.subr.mxu0 0.0
  %3348 = vmatpush1.msra.mxu0 %v3329
  %3349 = vmatprep.subr.mxu0 0.0
  %3350 = vmatpush1.msra.mxu0 0.0
  %3351 = vmatprep.subr.mxu0 0.0
  %3352 = vmatpush1.msra.mxu0 0.0
  %3353 = vmatprep.subr.mxu0 0.0
  %3354 = vmatpush1.msra.mxu0 0.0
  %3355 = vmatprep.subr.mxu0 0.0
  %3356 = vmatpush1.msra.mxu0 0.0
  %3357 = vmatprep.subr.mxu0 0.0
  %3358 = vmatpush1.msra.mxu0 0.0
  %3359 = vmatprep.subr.mxu0 0.0
  %3360 = vmatpush1.msra.mxu0 0.0
  %3361 = vmatprep.subr.mxu0 0.0
  %3362 = vmatpush1.msra.mxu0 0.0
  %3363 = vmatprep.subr.mxu0 0.0
  %3364 = vmatpush1.msra.mxu0 0.0
  %3365 = vmatprep.subr.mxu0 0.0
  %3366 = vmatpush1.msra.mxu0 0.0
  %3367 = vmatprep.subr.mxu0 0.0
  %3368 = vmatpush1.msra.mxu0 0.0
  %3369 = vmatprep.subr.mxu0 0.0
  %3370 = vmatpush1.msra.mxu0 0.0
  %3371 = vmatprep.subr.mxu0 0.0
  %3372 = vmatpush1.msra.mxu0 0.0
  %3373 = vmatprep.subr.mxu0 0.0
  %3374 = vmatpush1.msra.mxu0 0.0
  %3375 = vmatprep.subr.mxu0 0.0
  %3376 = vmatpush1.msra.mxu0 0.0
  %3377 = vmatprep.subr.mxu0 0.0
  %3378 = vmatpush1.msra.mxu0 0.0
  %3379 = vmatprep.subr.mxu0 0.0
  %3380 = vmatpush1.msra.mxu0 0.0
  %3381 = vmatprep.subr.mxu0 0.0
  %3382 = vmatpush1.msra.mxu0 0.0
  %3383 = vmatprep.subr.mxu0 0.0
  %3384 = vmatpush1.msra.mxu0 0.0
  %3385 = vmatprep.subr.mxu0 0.0
  %3386 = vmatpush1.msra.mxu0 0.0
  %3387 = vmatprep.subr.mxu0 0.0
  %3388 = vmatpush1.msra.mxu0 0.0
  %3389 = vmatprep.subr.mxu0 0.0
  %3390 = vmatpush1.msra.mxu0 0.0
  %3391 = vmatprep.subr.mxu0 0.0
  %3392 = vmatpush1.msra.mxu0 0.0
  %3393 = vmatprep.subr.mxu0 0.0
  %3394 = vmatpush1.msra.mxu0 0.0
  %3395 = vmatprep.subr.mxu0 0.0
  %3396 = vmatpush1.msra.mxu0 0.0
  %3397 = vmatprep.subr.mxu0 0.0
  %3398 = vmatpush1.msra.mxu0 0.0
  %3399 = vmatprep.subr.mxu0 0.0
  %3400 = vmatpush1.msra.mxu0 0.0
  %3401 = vmatprep.subr.mxu0 0.0
  %3402 = vmatpush1.msra.mxu0 0.0
  %3403 = vmatprep.subr.mxu0 0.0
  %3404 = vmatpush1.msra.mxu0 0.0
  %3405 = vmatprep.mubr.f32.mxu0 0.0
  %3406 = vmatmul.mubr.f32.gmra.mrb[0].mxu0 %v3339
  %v3407 = vpop.f32.mrb[0].mxu0
  %v3408 = vadd.f32 %v3335, %v3407
  %v3409 = vpop.f32.mrb[0].mxu0
  %3410 = vdwg.mxu0
  %v3411 = vadd.f32 %v3321, %v3408
  %v3412 = vld [vmem:[%s5] sm:$0x1]
  %v3413 = vld [vmem:[%s6] sm:$0x1]
  %v3414 = vsel %vm3337, %v3411, 0.0
  %3415 = vadd.xlane.f32.xlu0 %v3414
  %v3416 = vpop.xlane.xlu0 %3415
  %v3417 = vmul.f32 %v3411, %v3411
  %v3418 = vsel %vm3337, %v3417, 0.0
  %3419 = vadd.xlane.f32.xlu0 %v3418
  %v3420 = vpop.xlane.xlu0 %3419
  %v3421 = vmul.f32 %v3416, 0.03125
  %v3422 = vmul.f32 %v3420, 0.03125
  %v3423 = vmul.f32 %v3421, %v3421
  %v3424 = vsub.f32 %v3422, %v3423
  %v3425 = vsub.f32 %v3411, %v3421
  %v3426 = vadd.f32 %v3424, 1e-05
  %v3427 = vrsqrt.pop %v3426
  %v3428 = vmul.f32 %v3425, %v3427
  %v3430 = vlaneseq
  %v3431 = vshrl.u32 %v3430, 7
  %v3432 = vsub.s32 0, %v3431
  %v3433 = vrot.slane %v3412, %v3432
  %v3435 = vmul.f32 %v3428, %v3433
  %v3437 = vlaneseq
  %v3438 = vshrl.u32 %v3437, 7
  %v3439 = vsub.s32 0, %v3438
  %v3440 = vrot.slane %v3413, %v3439
  %v3442 = vadd.f32 %v3435, %v3440
  %v3443 = vpack.c.bf16 %v3442, %v3442
  %v3444 = vld [vmem:[%s7] sm:$0xff]
  %v3445 = vld [vmem:[%s7 + $0x8] sm:$0xff]
  %v3446 = vld [vmem:[%s7 + $0x10] sm:$0xff]
  %v3447 = vld [vmem:[%s7 + $0x18] sm:$0xff]
  %v3448 = vld [vmem:[%s7 + $0x20] sm:$0xff]
  %v3449 = vld [vmem:[%s7 + $0x28] sm:$0xff]
  %v3450 = vld [vmem:[%s7 + $0x30] sm:$0xff]
  %v3451 = vld [vmem:[%s7 + $0x38] sm:$0xff]
  %v3452 = vld [vmem:[%s7 + $0x40] sm:$0xff]
  %v3453 = vld [vmem:[%s7 + $0x48] sm:$0xff]
  %v3454 = vld [vmem:[%s7 + $0x50] sm:$0xff]
  %v3455 = vld [vmem:[%s7 + $0x58] sm:$0xff]
  %v3456 = vld [vmem:[%s7 + $0x60] sm:$0xff]
  %v3457 = vld [vmem:[%s7 + $0x68] sm:$0xff]
  %v3458 = vld [vmem:[%s7 + $0x70] sm:$0xff]
  %v3459 = vld [vmem:[%s7 + $0x78] sm:$0xff]
  %v3460 = vld [vmem:[%s7 + $0x80] sm:$0xff]
  %v3461 = vld [vmem:[%s7 + $0x88] sm:$0xff]
  %v3462 = vld [vmem:[%s7 + $0x90] sm:$0xff]
  %v3463 = vld [vmem:[%s7 + $0x98] sm:$0xff]
  %v3464 = vld [vmem:[%s7 + $0xa0] sm:$0xff]
  %v3465 = vld [vmem:[%s7 + $0xa8] sm:$0xff]
  %v3466 = vld [vmem:[%s7 + $0xb0] sm:$0xff]
  %v3467 = vld [vmem:[%s7 + $0xb8] sm:$0xff]
  %v3468 = vld [vmem:[%s7 + $0xc0] sm:$0xff]
  %v3469 = vld [vmem:[%s7 + $0xc8] sm:$0xff]
  %v3470 = vld [vmem:[%s7 + $0xd0] sm:$0xff]
  %v3471 = vld [vmem:[%s7 + $0xd8] sm:$0xff]
  %v3472 = vld [vmem:[%s7 + $0xe0] sm:$0xff]
  %v3473 = vld [vmem:[%s7 + $0xe8] sm:$0xff]
  %v3474 = vld [vmem:[%s7 + $0xf0] sm:$0xff]
  %v3475 = vld [vmem:[%s7 + $0xf8] sm:$0xff]
  %v3476 = vld [vmem:[%s8] sm:$0xff]
  %v3477 = vld [vmem:[%s8 + $0x8] sm:$0xff]
  %v3480 = vlaneseq
  %v3481 = vshrl.u32 %v3480, 7
  %v3482 = vsub.s32 0, %v3481
  %v3483 = vrot.slane %v3476, %v3482
  %v3484 = vlaneseq
  %v3485 = vshrl.u32 %v3484, 7
  %v3486 = vsub.s32 1, %v3485
  %v3487 = vrot.slane %v3476, %v3486
  %v3488 = vlaneseq
  %v3489 = vshrl.u32 %v3488, 7
  %v3490 = vsub.s32 2, %v3489
  %v3491 = vrot.slane %v3476, %v3490
  %v3492 = vlaneseq
  %v3493 = vshrl.u32 %v3492, 7
  %v3494 = vsub.s32 3, %v3493
  %v3495 = vrot.slane %v3476, %v3494
  %v3496 = vlaneseq
  %v3497 = vshrl.u32 %v3496, 7
  %v3498 = vsub.s32 4, %v3497
  %v3499 = vrot.slane %v3476, %v3498
  %v3500 = vlaneseq
  %v3501 = vshrl.u32 %v3500, 7
  %v3502 = vsub.s32 5, %v3501
  %v3503 = vrot.slane %v3476, %v3502
  %v3504 = vlaneseq
  %v3505 = vshrl.u32 %v3504, 7
  %v3506 = vsub.s32 6, %v3505
  %v3507 = vrot.slane %v3476, %v3506
  %v3508 = vlaneseq
  %v3509 = vshrl.u32 %v3508, 7
  %v3510 = vsub.s32 7, %v3509
  %v3511 = vrot.slane %v3476, %v3510
  %v3512 = vlaneseq
  %v3513 = vshrl.u32 %v3512, 7
  %v3514 = vsub.s32 0, %v3513
  %v3515 = vrot.slane %v3477, %v3514
  %v3516 = vlaneseq
  %v3517 = vshrl.u32 %v3516, 7
  %v3518 = vsub.s32 1, %v3517
  %v3519 = vrot.slane %v3477, %v3518
  %v3520 = vlaneseq
  %v3521 = vshrl.u32 %v3520, 7
  %v3522 = vsub.s32 2, %v3521
  %v3523 = vrot.slane %v3477, %v3522
  %v3524 = vlaneseq
  %v3525 = vshrl.u32 %v3524, 7
  %v3526 = vsub.s32 3, %v3525
  %v3527 = vrot.slane %v3477, %v3526
  %v3528 = vlaneseq
  %v3529 = vshrl.u32 %v3528, 7
  %v3530 = vsub.s32 4, %v3529
  %v3531 = vrot.slane %v3477, %v3530
  %v3532 = vlaneseq
  %v3533 = vshrl.u32 %v3532, 7
  %v3534 = vsub.s32 5, %v3533
  %v3535 = vrot.slane %v3477, %v3534
  %v3536 = vlaneseq
  %v3537 = vshrl.u32 %v3536, 7
  %v3538 = vsub.s32 6, %v3537
  %v3539 = vrot.slane %v3477, %v3538
  %v3540 = vlaneseq
  %v3541 = vshrl.u32 %v3540, 7
  %v3542 = vsub.s32 7, %v3541
  %v3543 = vrot.slane %v3477, %v3542
  %v3592 = vunpack.c.l.b16 %v3444
  %v3593 = vunpack.c.h.b16 %v3444
  %v3594 = vunpack.c.l.b16 %v3445
  %v3595 = vunpack.c.h.b16 %v3445
  %v3596 = vunpack.c.l.b16 %v3446
  %v3597 = vunpack.c.h.b16 %v3446
  %v3598 = vunpack.c.l.b16 %v3447
  %v3599 = vunpack.c.h.b16 %v3447
  %v3600 = vunpack.c.l.b16 %v3448
  %v3601 = vunpack.c.h.b16 %v3448
  %v3602 = vunpack.c.l.b16 %v3449
  %v3603 = vunpack.c.h.b16 %v3449
  %v3604 = vunpack.c.l.b16 %v3450
  %v3605 = vunpack.c.h.b16 %v3450
  %v3606 = vunpack.c.l.b16 %v3451
  %v3607 = vunpack.c.h.b16 %v3451
  %v3608 = vunpack.c.l.b16 %v3452
  %v3609 = vunpack.c.h.b16 %v3452
  %v3610 = vunpack.c.l.b16 %v3453
  %v3611 = vunpack.c.h.b16 %v3453
  %v3612 = vunpack.c.l.b16 %v3454
  %v3613 = vunpack.c.h.b16 %v3454
  %v3614 = vunpack.c.l.b16 %v3455
  %v3615 = vunpack.c.h.b16 %v3455
  %v3616 = vunpack.c.l.b16 %v3456
  %v3617 = vunpack.c.h.b16 %v3456
  %v3618 = vunpack.c.l.b16 %v3457
  %v3619 = vunpack.c.h.b16 %v3457
  %v3620 = vunpack.c.l.b16 %v3458
  %v3621 = vunpack.c.h.b16 %v3458
  %v3622 = vunpack.c.l.b16 %v3459
  %v3623 = vunpack.c.h.b16 %v3459
  %v3624 = vunpack.c.l.b16 %v3460
  %v3625 = vunpack.c.h.b16 %v3460
  %v3626 = vunpack.c.l.b16 %v3461
  %v3627 = vunpack.c.h.b16 %v3461
  %v3628 = vunpack.c.l.b16 %v3462
  %v3629 = vunpack.c.h.b16 %v3462
  %v3630 = vunpack.c.l.b16 %v3463
  %v3631 = vunpack.c.h.b16 %v3463
  %v3632 = vunpack.c.l.b16 %v3464
  %v3633 = vunpack.c.h.b16 %v3464
  %v3634 = vunpack.c.l.b16 %v3465
  %v3635 = vunpack.c.h.b16 %v3465
  %v3636 = vunpack.c.l.b16 %v3466
  %v3637 = vunpack.c.h.b16 %v3466
  %v3638 = vunpack.c.l.b16 %v3467
  %v3639 = vunpack.c.h.b16 %v3467
  %v3640 = vunpack.c.l.b16 %v3468
  %v3641 = vunpack.c.h.b16 %v3468
  %v3642 = vunpack.c.l.b16 %v3469
  %v3643 = vunpack.c.h.b16 %v3469
  %v3644 = vunpack.c.l.b16 %v3470
  %v3645 = vunpack.c.h.b16 %v3470
  %v3646 = vunpack.c.l.b16 %v3471
  %v3647 = vunpack.c.h.b16 %v3471
  %v3648 = vunpack.c.l.b16 %v3472
  %v3649 = vunpack.c.h.b16 %v3472
  %v3650 = vunpack.c.l.b16 %v3473
  %v3651 = vunpack.c.h.b16 %v3473
  %v3652 = vunpack.c.l.b16 %v3474
  %v3653 = vunpack.c.h.b16 %v3474
  %v3654 = vunpack.c.l.b16 %v3475
  %v3655 = vunpack.c.h.b16 %v3475
  %v3656 = vpack.c.b16 %v3608, %v3592
  %v3657 = vpack.c.b16 %v3609, %v3593
  %v3658 = vpack.c.b16 %v3610, %v3594
  %v3659 = vpack.c.b16 %v3611, %v3595
  %v3660 = vpack.c.b16 %v3612, %v3596
  %v3661 = vpack.c.b16 %v3613, %v3597
  %v3662 = vpack.c.b16 %v3614, %v3598
  %v3663 = vpack.c.b16 %v3615, %v3599
  %v3664 = vpack.c.b16 %v3616, %v3600
  %v3665 = vpack.c.b16 %v3617, %v3601
  %v3666 = vpack.c.b16 %v3618, %v3602
  %v3667 = vpack.c.b16 %v3619, %v3603
  %v3668 = vpack.c.b16 %v3620, %v3604
  %v3669 = vpack.c.b16 %v3621, %v3605
  %v3670 = vpack.c.b16 %v3622, %v3606
  %v3671 = vpack.c.b16 %v3623, %v3607
  %v3672 = vpack.c.b16 %v3640, %v3624
  %v3673 = vpack.c.b16 %v3641, %v3625
  %v3674 = vpack.c.b16 %v3642, %v3626
  %v3675 = vpack.c.b16 %v3643, %v3627
  %v3676 = vpack.c.b16 %v3644, %v3628
  %v3677 = vpack.c.b16 %v3645, %v3629
  %v3678 = vpack.c.b16 %v3646, %v3630
  %v3679 = vpack.c.b16 %v3647, %v3631
  %v3680 = vpack.c.b16 %v3648, %v3632
  %v3681 = vpack.c.b16 %v3649, %v3633
  %v3682 = vpack.c.b16 %v3650, %v3634
  %v3683 = vpack.c.b16 %v3651, %v3635
  %v3684 = vpack.c.b16 %v3652, %v3636
  %v3685 = vpack.c.b16 %v3653, %v3637
  %v3686 = vpack.c.b16 %v3654, %v3638
  %v3687 = vpack.c.b16 %v3655, %v3639
  %v3721 = vsel %vm3337, %v3443, 0
  %3723 = vmatprep.subr.bf16.mxu0 %v3657
  %3724 = vmatpush1.bf16.msra.mxu0 %v3656
  %3725 = vmatprep.subr.bf16.mxu0 %v3673
  %3726 = vmatpush1.bf16.msra.mxu0 %v3672
  %3727 = vmatprep.subr.bf16.mxu0 0
  %3728 = vmatpush1.bf16.msra.mxu0 0
  %3729 = vmatprep.subr.bf16.mxu0 0
  %3730 = vmatpush1.bf16.msra.mxu0 0
  %3731 = vmatprep.subr.bf16.mxu0 0
  %3732 = vmatpush1.bf16.msra.mxu0 0
  %3733 = vmatprep.subr.bf16.mxu0 0
  %3734 = vmatpush1.bf16.msra.mxu0 0
  %3735 = vmatprep.subr.bf16.mxu0 0
  %3736 = vmatpush1.bf16.msra.mxu0 0
  %3737 = vmatprep.subr.bf16.mxu0 0
  %3738 = vmatpush1.bf16.msra.mxu0 0
  %3739 = vmatprep.subr.bf16.mxu0 0
  %3740 = vmatpush1.bf16.msra.mxu0 0
  %3741 = vmatprep.subr.bf16.mxu0 0
  %3742 = vmatpush1.bf16.msra.mxu0 0
  %3743 = vmatprep.subr.bf16.mxu0 0
  %3744 = vmatpush1.bf16.msra.mxu0 0
  %3745 = vmatprep.subr.bf16.mxu0 0
  %3746 = vmatpush1.bf16.msra.mxu0 0
  %3747 = vmatprep.subr.bf16.mxu0 0
  %3748 = vmatpush1.bf16.msra.mxu0 0
  %3749 = vmatprep.subr.bf16.mxu0 0
  %3750 = vmatpush1.bf16.msra.mxu0 0
  %3751 = vmatprep.subr.bf16.mxu0 0
  %3752 = vmatpush1.bf16.msra.mxu0 0
  %3753 = vmatprep.subr.bf16.mxu0 0
  %3754 = vmatpush1.bf16.msra.mxu0 0
  %3755 = vmatprep.mubr.bf16.mxu0 0
  %3756 = vmatmul.mubr.bf16.gmra.mrb[0].mxu0 %v3721
  %v3757 = vpop.f32.mrb[0].mxu0
  %v3758 = vadd.f32 %v3483, %v3757
  %v3759 = vpop.f32.mrb[0].mxu0
  %v3760 = vadd.f32 %v3487, %v3759
  %v3761 = vpop.f32.mrb[0].mxu0
  %v3762 = vpop.f32.mrb[0].mxu0
  %3763 = vdwg.mxu0
  %3764 = vmatprep.subr.bf16.mxu0 %v3659
  %3765 = vmatpush1.bf16.msra.mxu0 %v3658
  %3766 = vmatprep.subr.bf16.mxu0 %v3675
  %3767 = vmatpush1.bf16.msra.mxu0 %v3674
  %3768 = vmatprep.subr.bf16.mxu0 0
  %3769 = vmatpush1.bf16.msra.mxu0 0
  %3770 = vmatprep.subr.bf16.mxu0 0
  %3771 = vmatpush1.bf16.msra.mxu0 0
  %3772 = vmatprep.subr.bf16.mxu0 0
  %3773 = vmatpush1.bf16.msra.mxu0 0
  %3774 = vmatprep.subr.bf16.mxu0 0
  %3775 = vmatpush1.bf16.msra.mxu0 0
  %3776 = vmatprep.subr.bf16.mxu0 0
  %3777 = vmatpush1.bf16.msra.mxu0 0
  %3778 = vmatprep.subr.bf16.mxu0 0
  %3779 = vmatpush1.bf16.msra.mxu0 0
  %3780 = vmatprep.subr.bf16.mxu0 0
  %3781 = vmatpush1.bf16.msra.mxu0 0
  %3782 = vmatprep.subr.bf16.mxu0 0
  %3783 = vmatpush1.bf16.msra.mxu0 0
  %3784 = vmatprep.subr.bf16.mxu0 0
  %3785 = vmatpush1.bf16.msra.mxu0 0
  %3786 = vmatprep.subr.bf16.mxu0 0
  %3787 = vmatpush1.bf16.msra.mxu0 0
  %3788 = vmatprep.subr.bf16.mxu0 0
  %3789 = vmatpush1.bf16.msra.mxu0 0
  %3790 = vmatprep.subr.bf16.mxu0 0
  %3791 = vmatpush1.bf16.msra.mxu0 0
  %3792 = vmatprep.subr.bf16.mxu0 0
  %3793 = vmatpush1.bf16.msra.mxu0 0
  %3794 = vmatprep.subr.bf16.mxu0 0
  %3795 = vmatpush1.bf16.msra.mxu0 0
  %3796 = vmatprep.mubr.bf16.mxu0 0
  %3797 = vmatmul.mubr.bf16.gmra.mrb[0].mxu0 %v3721
  %v3798 = vpop.f32.mrb[0].mxu0
  %v3799 = vadd.f32 %v3491, %v3798
  %v3800 = vpop.f32.mrb[0].mxu0
  %v3801 = vadd.f32 %v3495, %v3800
  %v3802 = vpop.f32.mrb[0].mxu0
  %v3803 = vpop.f32.mrb[0].mxu0
  %3804 = vdwg.mxu0
  %3805 = vmatprep.subr.bf16.mxu0 %v3661
  %3806 = vmatpush1.bf16.msra.mxu0 %v3660
  %3807 = vmatprep.subr.bf16.mxu0 %v3677
  %3808 = vmatpush1.bf16.msra.mxu0 %v3676
  %3809 = vmatprep.subr.bf16.mxu0 0
  %3810 = vmatpush1.bf16.msra.mxu0 0
  %3811 = vmatprep.subr.bf16.mxu0 0
  %3812 = vmatpush1.bf16.msra.mxu0 0
  %3813 = vmatprep.subr.bf16.mxu0 0
  %3814 = vmatpush1.bf16.msra.mxu0 0
  %3815 = vmatprep.subr.bf16.mxu0 0
  %3816 = vmatpush1.bf16.msra.mxu0 0
  %3817 = vmatprep.subr.bf16.mxu0 0
  %3818 = vmatpush1.bf16.msra.mxu0 0
  %3819 = vmatprep.subr.bf16.mxu0 0
  %3820 = vmatpush1.bf16.msra.mxu0 0
  %3821 = vmatprep.subr.bf16.mxu0 0
  %3822 = vmatpush1.bf16.msra.mxu0 0
  %3823 = vmatprep.subr.bf16.mxu0 0
  %3824 = vmatpush1.bf16.msra.mxu0 0
  %3825 = vmatprep.subr.bf16.mxu0 0
  %3826 = vmatpush1.bf16.msra.mxu0 0
  %3827 = vmatprep.subr.bf16.mxu0 0
  %3828 = vmatpush1.bf16.msra.mxu0 0
  %3829 = vmatprep.subr.bf16.mxu0 0
  %3830 = vmatpush1.bf16.msra.mxu0 0
  %3831 = vmatprep.subr.bf16.mxu0 0
  %3832 = vmatpush1.bf16.msra.mxu0 0
  %3833 = vmatprep.subr.bf16.mxu0 0
  %3834 = vmatpush1.bf16.msra.mxu0 0
  %3835 = vmatprep.subr.bf16.mxu0 0
  %3836 = vmatpush1.bf16.msra.mxu0 0
  %3837 = vmatprep.mubr.bf16.mxu0 0
  %3838 = vmatmul.mubr.bf16.gmra.mrb[0].mxu0 %v3721
  %v3839 = vpop.f32.mrb[0].mxu0
  %v3840 = vadd.f32 %v3499, %v3839
  %v3841 = vpop.f32.mrb[0].mxu0
  %v3842 = vadd.f32 %v3503, %v3841
  %v3843 = vpop.f32.mrb[0].mxu0
  %v3844 = vpop.f32.mrb[0].mxu0
  %3845 = vdwg.mxu0
  %3846 = vmatprep.subr.bf16.mxu0 %v3663
  %3847 = vmatpush1.bf16.msra.mxu0 %v3662
  %3848 = vmatprep.subr.bf16.mxu0 %v3679
  %3849 = vmatpush1.bf16.msra.mxu0 %v3678
  %3850 = vmatprep.subr.bf16.mxu0 0
  %3851 = vmatpush1.bf16.msra.mxu0 0
  %3852 = vmatprep.subr.bf16.mxu0 0
  %3853 = vmatpush1.bf16.msra.mxu0 0
  %3854 = vmatprep.subr.bf16.mxu0 0
  %3855 = vmatpush1.bf16.msra.mxu0 0
  %3856 = vmatprep.subr.bf16.mxu0 0
  %3857 = vmatpush1.bf16.msra.mxu0 0
  %3858 = vmatprep.subr.bf16.mxu0 0
  %3859 = vmatpush1.bf16.msra.mxu0 0
  %3860 = vmatprep.subr.bf16.mxu0 0
  %3861 = vmatpush1.bf16.msra.mxu0 0
  %3862 = vmatprep.subr.bf16.mxu0 0
  %3863 = vmatpush1.bf16.msra.mxu0 0
  %3864 = vmatprep.subr.bf16.mxu0 0
  %3865 = vmatpush1.bf16.msra.mxu0 0
  %3866 = vmatprep.subr.bf16.mxu0 0
  %3867 = vmatpush1.bf16.msra.mxu0 0
  %3868 = vmatprep.subr.bf16.mxu0 0
  %3869 = vmatpush1.bf16.msra.mxu0 0
  %3870 = vmatprep.subr.bf16.mxu0 0
  %3871 = vmatpush1.bf16.msra.mxu0 0
  %3872 = vmatprep.subr.bf16.mxu0 0
  %3873 = vmatpush1.bf16.msra.mxu0 0
  %3874 = vmatprep.subr.bf16.mxu0 0
  %3875 = vmatpush1.bf16.msra.mxu0 0
  %3876 = vmatprep.subr.bf16.mxu0 0
  %3877 = vmatpush1.bf16.msra.mxu0 0
  %3878 = vmatprep.mubr.bf16.mxu0 0
  %3879 = vmatmul.mubr.bf16.gmra.mrb[0].mxu0 %v3721
  %v3880 = vpop.f32.mrb[0].mxu0
  %v3881 = vadd.f32 %v3507, %v3880
  %v3882 = vpop.f32.mrb[0].mxu0
  %v3883 = vadd.f32 %v3511, %v3882
  %v3884 = vpop.f32.mrb[0].mxu0
  %v3885 = vpop.f32.mrb[0].mxu0
  %3886 = vdwg.mxu0
  %3887 = vmatprep.subr.bf16.mxu0 %v3665
  %3888 = vmatpush1.bf16.msra.mxu0 %v3664
  %3889 = vmatprep.subr.bf16.mxu0 %v3681
  %3890 = vmatpush1.bf16.msra.mxu0 %v3680
  %3891 = vmatprep.subr.bf16.mxu0 0
  %3892 = vmatpush1.bf16.msra.mxu0 0
  %3893 = vmatprep.subr.bf16.mxu0 0
  %3894 = vmatpush1.bf16.msra.mxu0 0
  %3895 = vmatprep.subr.bf16.mxu0 0
  %3896 = vmatpush1.bf16.msra.mxu0 0
  %3897 = vmatprep.subr.bf16.mxu0 0
  %3898 = vmatpush1.bf16.msra.mxu0 0
  %3899 = vmatprep.subr.bf16.mxu0 0
  %3900 = vmatpush1.bf16.msra.mxu0 0
  %3901 = vmatprep.subr.bf16.mxu0 0
  %3902 = vmatpush1.bf16.msra.mxu0 0
  %3903 = vmatprep.subr.bf16.mxu0 0
  %3904 = vmatpush1.bf16.msra.mxu0 0
  %3905 = vmatprep.subr.bf16.mxu0 0
  %3906 = vmatpush1.bf16.msra.mxu0 0
  %3907 = vmatprep.subr.bf16.mxu0 0
  %3908 = vmatpush1.bf16.msra.mxu0 0
  %3909 = vmatprep.subr.bf16.mxu0 0
  %3910 = vmatpush1.bf16.msra.mxu0 0
  %3911 = vmatprep.subr.bf16.mxu0 0
  %3912 = vmatpush1.bf16.msra.mxu0 0
  %3913 = vmatprep.subr.bf16.mxu0 0
  %3914 = vmatpush1.bf16.msra.mxu0 0
  %3915 = vmatprep.subr.bf16.mxu0 0
  %3916 = vmatpush1.bf16.msra.mxu0 0
  %3917 = vmatprep.subr.bf16.mxu0 0
  %3918 = vmatpush1.bf16.msra.mxu0 0
  %3919 = vmatprep.mubr.bf16.mxu0 0
  %3920 = vmatmul.mubr.bf16.gmra.mrb[0].mxu0 %v3721
  %v3921 = vpop.f32.mrb[0].mxu0
  %v3922 = vadd.f32 %v3515, %v3921
  %v3923 = vpop.f32.mrb[0].mxu0
  %v3924 = vadd.f32 %v3519, %v3923
  %v3925 = vpop.f32.mrb[0].mxu0
  %v3926 = vpop.f32.mrb[0].mxu0
  %3927 = vdwg.mxu0
  %3928 = vmatprep.subr.bf16.mxu0 %v3667
  %3929 = vmatpush1.bf16.msra.mxu0 %v3666
  %3930 = vmatprep.subr.bf16.mxu0 %v3683
  %3931 = vmatpush1.bf16.msra.mxu0 %v3682
  %3932 = vmatprep.subr.bf16.mxu0 0
  %3933 = vmatpush1.bf16.msra.mxu0 0
  %3934 = vmatprep.subr.bf16.mxu0 0
  %3935 = vmatpush1.bf16.msra.mxu0 0
  %3936 = vmatprep.subr.bf16.mxu0 0
  %3937 = vmatpush1.bf16.msra.mxu0 0
  %3938 = vmatprep.subr.bf16.mxu0 0
  %3939 = vmatpush1.bf16.msra.mxu0 0
  %3940 = vmatprep.subr.bf16.mxu0 0
  %3941 = vmatpush1.bf16.msra.mxu0 0
  %3942 = vmatprep.subr.bf16.mxu0 0
  %3943 = vmatpush1.bf16.msra.mxu0 0
  %3944 = vmatprep.subr.bf16.mxu0 0
  %3945 = vmatpush1.bf16.msra.mxu0 0
  %3946 = vmatprep.subr.bf16.mxu0 0
  %3947 = vmatpush1.bf16.msra.mxu0 0
  %3948 = vmatprep.subr.bf16.mxu0 0
  %3949 = vmatpush1.bf16.msra.mxu0 0
  %3950 = vmatprep.subr.bf16.mxu0 0
  %3951 = vmatpush1.bf16.msra.mxu0 0
  %3952 = vmatprep.subr.bf16.mxu0 0
  %3953 = vmatpush1.bf16.msra.mxu0 0
  %3954 = vmatprep.subr.bf16.mxu0 0
  %3955 = vmatpush1.bf16.msra.mxu0 0
  %3956 = vmatprep.subr.bf16.mxu0 0
  %3957 = vmatpush1.bf16.msra.mxu0 0
  %3958 = vmatprep.subr.bf16.mxu0 0
  %3959 = vmatpush1.bf16.msra.mxu0 0
  %3960 = vmatprep.mubr.bf16.mxu0 0
  %3961 = vmatmul.mubr.bf16.gmra.mrb[0].mxu0 %v3721
  %v3962 = vpop.f32.mrb[0].mxu0
  %v3963 = vadd.f32 %v3523, %v3962
  %v3964 = vpop.f32.mrb[0].mxu0
  %v3965 = vadd.f32 %v3527, %v3964
  %v3966 = vpop.f32.mrb[0].mxu0
  %v3967 = vpop.f32.mrb[0].mxu0
  %3968 = vdwg.mxu0
  %3969 = vmatprep.subr.bf16.mxu0 %v3669
  %3970 = vmatpush1.bf16.msra.mxu0 %v3668
  %3971 = vmatprep.subr.bf16.mxu0 %v3685
  %3972 = vmatpush1.bf16.msra.mxu0 %v3684
  %3973 = vmatprep.subr.bf16.mxu0 0
  %3974 = vmatpush1.bf16.msra.mxu0 0
  %3975 = vmatprep.subr.bf16.mxu0 0
  %3976 = vmatpush1.bf16.msra.mxu0 0
  %3977 = vmatprep.subr.bf16.mxu0 0
  %3978 = vmatpush1.bf16.msra.mxu0 0
  %3979 = vmatprep.subr.bf16.mxu0 0
  %3980 = vmatpush1.bf16.msra.mxu0 0
  %3981 = vmatprep.subr.bf16.mxu0 0
  %3982 = vmatpush1.bf16.msra.mxu0 0
  %3983 = vmatprep.subr.bf16.mxu0 0
  %3984 = vmatpush1.bf16.msra.mxu0 0
  %3985 = vmatprep.subr.bf16.mxu0 0
  %3986 = vmatpush1.bf16.msra.mxu0 0
  %3987 = vmatprep.subr.bf16.mxu0 0
  %3988 = vmatpush1.bf16.msra.mxu0 0
  %3989 = vmatprep.subr.bf16.mxu0 0
  %3990 = vmatpush1.bf16.msra.mxu0 0
  %3991 = vmatprep.subr.bf16.mxu0 0
  %3992 = vmatpush1.bf16.msra.mxu0 0
  %3993 = vmatprep.subr.bf16.mxu0 0
  %3994 = vmatpush1.bf16.msra.mxu0 0
  %3995 = vmatprep.subr.bf16.mxu0 0
  %3996 = vmatpush1.bf16.msra.mxu0 0
  %3997 = vmatprep.subr.bf16.mxu0 0
  %3998 = vmatpush1.bf16.msra.mxu0 0
  %3999 = vmatprep.subr.bf16.mxu0 0
  %4000 = vmatpush1.bf16.msra.mxu0 0
  %4001 = vmatprep.mubr.bf16.mxu0 0
  %4002 = vmatmul.mubr.bf16.gmra.mrb[0].mxu0 %v3721
  %v4003 = vpop.f32.mrb[0].mxu0
  %v4004 = vadd.f32 %v3531, %v4003
  %v4005 = vpop.f32.mrb[0].mxu0
  %v4006 = vadd.f32 %v3535, %v4005
  %v4007 = vpop.f32.mrb[0].mxu0
  %v4008 = vpop.f32.mrb[0].mxu0
  %4009 = vdwg.mxu0
  %4010 = vmatprep.subr.bf16.mxu0 %v3671
  %4011 = vmatpush1.bf16.msra.mxu0 %v3670
  %4012 = vmatprep.subr.bf16.mxu0 %v3687
  %4013 = vmatpush1.bf16.msra.mxu0 %v3686
  %4014 = vmatprep.subr.bf16.mxu0 0
  %4015 = vmatpush1.bf16.msra.mxu0 0
  %4016 = vmatprep.subr.bf16.mxu0 0
  %4017 = vmatpush1.bf16.msra.mxu0 0
  %4018 = vmatprep.subr.bf16.mxu0 0
  %4019 = vmatpush1.bf16.msra.mxu0 0
  %4020 = vmatprep.subr.bf16.mxu0 0
  %4021 = vmatpush1.bf16.msra.mxu0 0
  %4022 = vmatprep.subr.bf16.mxu0 0
  %4023 = vmatpush1.bf16.msra.mxu0 0
  %4024 = vmatprep.subr.bf16.mxu0 0
  %4025 = vmatpush1.bf16.msra.mxu0 0
  %4026 = vmatprep.subr.bf16.mxu0 0
  %4027 = vmatpush1.bf16.msra.mxu0 0
  %4028 = vmatprep.subr.bf16.mxu0 0
  %4029 = vmatpush1.bf16.msra.mxu0 0
  %4030 = vmatprep.subr.bf16.mxu0 0
  %4031 = vmatpush1.bf16.msra.mxu0 0
  %4032 = vmatprep.subr.bf16.mxu0 0
  %4033 = vmatpush1.bf16.msra.mxu0 0
  %4034 = vmatprep.subr.bf16.mxu0 0
  %4035 = vmatpush1.bf16.msra.mxu0 0
  %4036 = vmatprep.subr.bf16.mxu0 0
  %4037 = vmatpush1.bf16.msra.mxu0 0
  %4038 = vmatprep.subr.bf16.mxu0 0
  %4039 = vmatpush1.bf16.msra.mxu0 0
  %4040 = vmatprep.subr.bf16.mxu0 0
  %4041 = vmatpush1.bf16.msra.mxu0 0
  %4042 = vmatprep.mubr.bf16.mxu0 0
  %4043 = vmatmul.mubr.bf16.gmra.mrb[0].mxu0 %v3721
  %v4044 = vpop.f32.mrb[0].mxu0
  %v4045 = vadd.f32 %v3539, %v4044
  %v4046 = vpop.f32.mrb[0].mxu0
  %v4047 = vadd.f32 %v3543, %v4046
  %v4048 = vpop.f32.mrb[0].mxu0
  %v4049 = vpop.f32.mrb[0].mxu0
  %4050 = vdwg.mxu0
  %v4051 = vmax.f32 %v3758, 0.0
  %v4052 = vmax.f32 %v3760, 0.0
  %v4053 = vmax.f32 %v3799, 0.0
  %v4054 = vmax.f32 %v3801, 0.0
  %v4055 = vmax.f32 %v3840, 0.0
  %v4056 = vmax.f32 %v3842, 0.0
  %v4057 = vmax.f32 %v3881, 0.0
  %v4058 = vmax.f32 %v3883, 0.0
  %v4059 = vmax.f32 %v3922, 0.0
  %v4060 = vmax.f32 %v3924, 0.0
  %v4061 = vmax.f32 %v3963, 0.0
  %v4062 = vmax.f32 %v3965, 0.0
  %v4063 = vmax.f32 %v4004, 0.0
  %v4064 = vmax.f32 %v4006, 0.0
  %v4065 = vmax.f32 %v4045, 0.0
  %v4066 = vmax.f32 %v4047, 0.0
  %v4067 = vpack.c.bf16 %v4051, %v4051
  %v4068 = vpack.c.bf16 %v4052, %v4052
  %v4069 = vpack.c.bf16 %v4053, %v4053
  %v4070 = vpack.c.bf16 %v4054, %v4054
  %v4071 = vpack.c.bf16 %v4055, %v4055
  %v4072 = vpack.c.bf16 %v4056, %v4056
  %v4073 = vpack.c.bf16 %v4057, %v4057
  %v4074 = vpack.c.bf16 %v4058, %v4058
  %v4075 = vpack.c.bf16 %v4059, %v4059
  %v4076 = vpack.c.bf16 %v4060, %v4060
  %v4077 = vpack.c.bf16 %v4061, %v4061
  %v4078 = vpack.c.bf16 %v4062, %v4062
  %v4079 = vpack.c.bf16 %v4063, %v4063
  %v4080 = vpack.c.bf16 %v4064, %v4064
  %v4081 = vpack.c.bf16 %v4065, %v4065
  %v4082 = vpack.c.bf16 %v4066, %v4066
  %v4083 = vld [vmem:[%s9] sm:$0xf]
  %v4084 = vld [vmem:[%s9 + $0x4] sm:$0xf]
  %v4085 = vld [vmem:[%s9 + $0x8] sm:$0xf]
  %v4086 = vld [vmem:[%s9 + $0xc] sm:$0xf]
  %v4087 = vld [vmem:[%s9 + $0x10] sm:$0xf]
  %v4088 = vld [vmem:[%s9 + $0x14] sm:$0xf]
  %v4089 = vld [vmem:[%s9 + $0x18] sm:$0xf]
  %v4090 = vld [vmem:[%s9 + $0x1c] sm:$0xf]
  %v4091 = vld [vmem:[%s9 + $0x20] sm:$0xf]
  %v4092 = vld [vmem:[%s9 + $0x24] sm:$0xf]
  %v4093 = vld [vmem:[%s9 + $0x28] sm:$0xf]
  %v4094 = vld [vmem:[%s9 + $0x2c] sm:$0xf]
  %v4095 = vld [vmem:[%s9 + $0x30] sm:$0xf]
  %v4096 = vld [vmem:[%s9 + $0x34] sm:$0xf]
  %v4097 = vld [vmem:[%s9 + $0x38] sm:$0xf]
  %v4098 = vld [vmem:[%s9 + $0x3c] sm:$0xf]
  %v4099 = vld [vmem:[%s9 + $0x40] sm:$0xf]
  %v4100 = vld [vmem:[%s9 + $0x44] sm:$0xf]
  %v4101 = vld [vmem:[%s9 + $0x48] sm:$0xf]
  %v4102 = vld [vmem:[%s9 + $0x4c] sm:$0xf]
  %v4103 = vld [vmem:[%s9 + $0x50] sm:$0xf]
  %v4104 = vld [vmem:[%s9 + $0x54] sm:$0xf]
  %v4105 = vld [vmem:[%s9 + $0x58] sm:$0xf]
  %v4106 = vld [vmem:[%s9 + $0x5c] sm:$0xf]
  %v4107 = vld [vmem:[%s9 + $0x60] sm:$0xf]
  %v4108 = vld [vmem:[%s9 + $0x64] sm:$0xf]
  %v4109 = vld [vmem:[%s9 + $0x68] sm:$0xf]
  %v4110 = vld [vmem:[%s9 + $0x6c] sm:$0xf]
  %v4111 = vld [vmem:[%s9 + $0x70] sm:$0xf]
  %v4112 = vld [vmem:[%s9 + $0x74] sm:$0xf]
  %v4113 = vld [vmem:[%s9 + $0x78] sm:$0xf]
  %v4114 = vld [vmem:[%s9 + $0x7c] sm:$0xf]
  %v4115 = vld [vmem:[%s9 + $0x80] sm:$0xf]
  %v4116 = vld [vmem:[%s9 + $0x84] sm:$0xf]
  %v4117 = vld [vmem:[%s9 + $0x88] sm:$0xf]
  %v4118 = vld [vmem:[%s9 + $0x8c] sm:$0xf]
  %v4119 = vld [vmem:[%s9 + $0x90] sm:$0xf]
  %v4120 = vld [vmem:[%s9 + $0x94] sm:$0xf]
  %v4121 = vld [vmem:[%s9 + $0x98] sm:$0xf]
  %v4122 = vld [vmem:[%s9 + $0x9c] sm:$0xf]
  %v4123 = vld [vmem:[%s9 + $0xa0] sm:$0xf]
  %v4124 = vld [vmem:[%s9 + $0xa4] sm:$0xf]
  %v4125 = vld [vmem:[%s9 + $0xa8] sm:$0xf]
  %v4126 = vld [vmem:[%s9 + $0xac] sm:$0xf]
  %v4127 = vld [vmem:[%s9 + $0xb0] sm:$0xf]
  %v4128 = vld [vmem:[%s9 + $0xb4] sm:$0xf]
  %v4129 = vld [vmem:[%s9 + $0xb8] sm:$0xf]
  %v4130 = vld [vmem:[%s9 + $0xbc] sm:$0xf]
  %v4131 = vld [vmem:[%s9 + $0xc0] sm:$0xf]
  %v4132 = vld [vmem:[%s9 + $0xc4] sm:$0xf]
  %v4133 = vld [vmem:[%s9 + $0xc8] sm:$0xf]
  %v4134 = vld [vmem:[%s9 + $0xcc] sm:$0xf]
  %v4135 = vld [vmem:[%s9 + $0xd0] sm:$0xf]
  %v4136 = vld [vmem:[%s9 + $0xd4] sm:$0xf]
  %v4137 = vld [vmem:[%s9 + $0xd8] sm:$0xf]
  %v4138 = vld [vmem:[%s9 + $0xdc] sm:$0xf]
  %v4139 = vld [vmem:[%s9 + $0xe0] sm:$0xf]
  %v4140 = vld [vmem:[%s9 + $0xe4] sm:$0xf]
  %v4141 = vld [vmem:[%s9 + $0xe8] sm:$0xf]
  %v4142 = vld [vmem:[%s9 + $0xec] sm:$0xf]
  %v4143 = vld [vmem:[%s9 + $0xf0] sm:$0xf]
  %v4144 = vld [vmem:[%s9 + $0xf4] sm:$0xf]
  %v4145 = vld [vmem:[%s9 + $0xf8] sm:$0xf]
  %v4146 = vld [vmem:[%s9 + $0xfc] sm:$0xf]
  %v4147 = vld [vmem:[%s9 + $0x100] sm:$0xf]
  %v4148 = vld [vmem:[%s9 + $0x104] sm:$0xf]
  %v4149 = vld [vmem:[%s9 + $0x108] sm:$0xf]
  %v4150 = vld [vmem:[%s9 + $0x10c] sm:$0xf]
  %v4151 = vld [vmem:[%s9 + $0x110] sm:$0xf]
  %v4152 = vld [vmem:[%s9 + $0x114] sm:$0xf]
  %v4153 = vld [vmem:[%s9 + $0x118] sm:$0xf]
  %v4154 = vld [vmem:[%s9 + $0x11c] sm:$0xf]
  %v4155 = vld [vmem:[%s9 + $0x120] sm:$0xf]
  %v4156 = vld [vmem:[%s9 + $0x124] sm:$0xf]
  %v4157 = vld [vmem:[%s9 + $0x128] sm:$0xf]
  %v4158 = vld [vmem:[%s9 + $0x12c] sm:$0xf]
  %v4159 = vld [vmem:[%s9 + $0x130] sm:$0xf]
  %v4160 = vld [vmem:[%s9 + $0x134] sm:$0xf]
  %v4161 = vld [vmem:[%s9 + $0x138] sm:$0xf]
  %v4162 = vld [vmem:[%s9 + $0x13c] sm:$0xf]
  %v4163 = vld [vmem:[%s9 + $0x140] sm:$0xf]
  %v4164 = vld [vmem:[%s9 + $0x144] sm:$0xf]
  %v4165 = vld [vmem:[%s9 + $0x148] sm:$0xf]
  %v4166 = vld [vmem:[%s9 + $0x14c] sm:$0xf]
  %v4167 = vld [vmem:[%s9 + $0x150] sm:$0xf]
  %v4168 = vld [vmem:[%s9 + $0x154] sm:$0xf]
  %v4169 = vld [vmem:[%s9 + $0x158] sm:$0xf]
  %v4170 = vld [vmem:[%s9 + $0x15c] sm:$0xf]
  %v4171 = vld [vmem:[%s9 + $0x160] sm:$0xf]
  %v4172 = vld [vmem:[%s9 + $0x164] sm:$0xf]
  %v4173 = vld [vmem:[%s9 + $0x168] sm:$0xf]
  %v4174 = vld [vmem:[%s9 + $0x16c] sm:$0xf]
  %v4175 = vld [vmem:[%s9 + $0x170] sm:$0xf]
  %v4176 = vld [vmem:[%s9 + $0x174] sm:$0xf]
  %v4177 = vld [vmem:[%s9 + $0x178] sm:$0xf]
  %v4178 = vld [vmem:[%s9 + $0x17c] sm:$0xf]
  %v4179 = vld [vmem:[%s9 + $0x180] sm:$0xf]
  %v4180 = vld [vmem:[%s9 + $0x184] sm:$0xf]
  %v4181 = vld [vmem:[%s9 + $0x188] sm:$0xf]
  %v4182 = vld [vmem:[%s9 + $0x18c] sm:$0xf]
  %v4183 = vld [vmem:[%s9 + $0x190] sm:$0xf]
  %v4184 = vld [vmem:[%s9 + $0x194] sm:$0xf]
  %v4185 = vld [vmem:[%s9 + $0x198] sm:$0xf]
  %v4186 = vld [vmem:[%s9 + $0x19c] sm:$0xf]
  %v4187 = vld [vmem:[%s9 + $0x1a0] sm:$0xf]
  %v4188 = vld [vmem:[%s9 + $0x1a4] sm:$0xf]
  %v4189 = vld [vmem:[%s9 + $0x1a8] sm:$0xf]
  %v4190 = vld [vmem:[%s9 + $0x1ac] sm:$0xf]
  %v4191 = vld [vmem:[%s9 + $0x1b0] sm:$0xf]
  %v4192 = vld [vmem:[%s9 + $0x1b4] sm:$0xf]
  %v4193 = vld [vmem:[%s9 + $0x1b8] sm:$0xf]
  %v4194 = vld [vmem:[%s9 + $0x1bc] sm:$0xf]
  %v4195 = vld [vmem:[%s9 + $0x1c0] sm:$0xf]
  %v4196 = vld [vmem:[%s9 + $0x1c4] sm:$0xf]
  %v4197 = vld [vmem:[%s9 + $0x1c8] sm:$0xf]
  %v4198 = vld [vmem:[%s9 + $0x1cc] sm:$0xf]
  %v4199 = vld [vmem:[%s9 + $0x1d0] sm:$0xf]
  %v4200 = vld [vmem:[%s9 + $0x1d4] sm:$0xf]
  %v4201 = vld [vmem:[%s9 + $0x1d8] sm:$0xf]
  %v4202 = vld [vmem:[%s9 + $0x1dc] sm:$0xf]
  %v4203 = vld [vmem:[%s9 + $0x1e0] sm:$0xf]
  %v4204 = vld [vmem:[%s9 + $0x1e4] sm:$0xf]
  %v4205 = vld [vmem:[%s9 + $0x1e8] sm:$0xf]
  %v4206 = vld [vmem:[%s9 + $0x1ec] sm:$0xf]
  %v4207 = vld [vmem:[%s9 + $0x1f0] sm:$0xf]
  %v4208 = vld [vmem:[%s9 + $0x1f4] sm:$0xf]
  %v4209 = vld [vmem:[%s9 + $0x1f8] sm:$0xf]
  %v4210 = vld [vmem:[%s9 + $0x1fc] sm:$0xf]
  %v4211 = vld [vmem:[%s9 + $0x200] sm:$0xf]
  %v4212 = vld [vmem:[%s9 + $0x204] sm:$0xf]
  %v4213 = vld [vmem:[%s9 + $0x208] sm:$0xf]
  %v4214 = vld [vmem:[%s9 + $0x20c] sm:$0xf]
  %v4215 = vld [vmem:[%s9 + $0x210] sm:$0xf]
  %v4216 = vld [vmem:[%s9 + $0x214] sm:$0xf]
  %v4217 = vld [vmem:[%s9 + $0x218] sm:$0xf]
  %v4218 = vld [vmem:[%s9 + $0x21c] sm:$0xf]
  %v4219 = vld [vmem:[%s9 + $0x220] sm:$0xf]
  %v4220 = vld [vmem:[%s9 + $0x224] sm:$0xf]
  %v4221 = vld [vmem:[%s9 + $0x228] sm:$0xf]
  %v4222 = vld [vmem:[%s9 + $0x22c] sm:$0xf]
  %v4223 = vld [vmem:[%s9 + $0x230] sm:$0xf]
  %v4224 = vld [vmem:[%s9 + $0x234] sm:$0xf]
  %v4225 = vld [vmem:[%s9 + $0x238] sm:$0xf]
  %v4226 = vld [vmem:[%s9 + $0x23c] sm:$0xf]
  %v4227 = vld [vmem:[%s9 + $0x240] sm:$0xf]
  %v4228 = vld [vmem:[%s9 + $0x244] sm:$0xf]
  %v4229 = vld [vmem:[%s9 + $0x248] sm:$0xf]
  %v4230 = vld [vmem:[%s9 + $0x24c] sm:$0xf]
  %v4231 = vld [vmem:[%s9 + $0x250] sm:$0xf]
  %v4232 = vld [vmem:[%s9 + $0x254] sm:$0xf]
  %v4233 = vld [vmem:[%s9 + $0x258] sm:$0xf]
  %v4234 = vld [vmem:[%s9 + $0x25c] sm:$0xf]
  %v4235 = vld [vmem:[%s9 + $0x260] sm:$0xf]
  %v4236 = vld [vmem:[%s9 + $0x264] sm:$0xf]
  %v4237 = vld [vmem:[%s9 + $0x268] sm:$0xf]
  %v4238 = vld [vmem:[%s9 + $0x26c] sm:$0xf]
  %v4239 = vld [vmem:[%s9 + $0x270] sm:$0xf]
  %v4240 = vld [vmem:[%s9 + $0x274] sm:$0xf]
  %v4241 = vld [vmem:[%s9 + $0x278] sm:$0xf]
  %v4242 = vld [vmem:[%s9 + $0x27c] sm:$0xf]
  %v4243 = vld [vmem:[%s9 + $0x280] sm:$0xf]
  %v4244 = vld [vmem:[%s9 + $0x284] sm:$0xf]
  %v4245 = vld [vmem:[%s9 + $0x288] sm:$0xf]
  %v4246 = vld [vmem:[%s9 + $0x28c] sm:$0xf]
  %v4247 = vld [vmem:[%s9 + $0x290] sm:$0xf]
  %v4248 = vld [vmem:[%s9 + $0x294] sm:$0xf]
  %v4249 = vld [vmem:[%s9 + $0x298] sm:$0xf]
  %v4250 = vld [vmem:[%s9 + $0x29c] sm:$0xf]
  %v4251 = vld [vmem:[%s9 + $0x2a0] sm:$0xf]
  %v4252 = vld [vmem:[%s9 + $0x2a4] sm:$0xf]
  %v4253 = vld [vmem:[%s9 + $0x2a8] sm:$0xf]
  %v4254 = vld [vmem:[%s9 + $0x2ac] sm:$0xf]
  %v4255 = vld [vmem:[%s9 + $0x2b0] sm:$0xf]
  %v4256 = vld [vmem:[%s9 + $0x2b4] sm:$0xf]
  %v4257 = vld [vmem:[%s9 + $0x2b8] sm:$0xf]
  %v4258 = vld [vmem:[%s9 + $0x2bc] sm:$0xf]
  %v4259 = vld [vmem:[%s9 + $0x2c0] sm:$0xf]
  %v4260 = vld [vmem:[%s9 + $0x2c4] sm:$0xf]
  %v4261 = vld [vmem:[%s9 + $0x2c8] sm:$0xf]
  %v4262 = vld [vmem:[%s9 + $0x2cc] sm:$0xf]
  %v4263 = vld [vmem:[%s9 + $0x2d0] sm:$0xf]
  %v4264 = vld [vmem:[%s9 + $0x2d4] sm:$0xf]
  %v4265 = vld [vmem:[%s9 + $0x2d8] sm:$0xf]
  %v4266 = vld [vmem:[%s9 + $0x2dc] sm:$0xf]
  %v4267 = vld [vmem:[%s9 + $0x2e0] sm:$0xf]
  %v4268 = vld [vmem:[%s9 + $0x2e4] sm:$0xf]
  %v4269 = vld [vmem:[%s9 + $0x2e8] sm:$0xf]
  %v4270 = vld [vmem:[%s9 + $0x2ec] sm:$0xf]
  %v4271 = vld [vmem:[%s9 + $0x2f0] sm:$0xf]
  %v4272 = vld [vmem:[%s9 + $0x2f4] sm:$0xf]
  %v4273 = vld [vmem:[%s9 + $0x2f8] sm:$0xf]
  %v4274 = vld [vmem:[%s9 + $0x2fc] sm:$0xf]
  %v4275 = vld [vmem:[%s9 + $0x300] sm:$0xf]
  %v4276 = vld [vmem:[%s9 + $0x304] sm:$0xf]
  %v4277 = vld [vmem:[%s9 + $0x308] sm:$0xf]
  %v4278 = vld [vmem:[%s9 + $0x30c] sm:$0xf]
  %v4279 = vld [vmem:[%s9 + $0x310] sm:$0xf]
  %v4280 = vld [vmem:[%s9 + $0x314] sm:$0xf]
  %v4281 = vld [vmem:[%s9 + $0x318] sm:$0xf]
  %v4282 = vld [vmem:[%s9 + $0x31c] sm:$0xf]
  %v4283 = vld [vmem:[%s9 + $0x320] sm:$0xf]
  %v4284 = vld [vmem:[%s9 + $0x324] sm:$0xf]
  %v4285 = vld [vmem:[%s9 + $0x328] sm:$0xf]
  %v4286 = vld [vmem:[%s9 + $0x32c] sm:$0xf]
  %v4287 = vld [vmem:[%s9 + $0x330] sm:$0xf]
  %v4288 = vld [vmem:[%s9 + $0x334] sm:$0xf]
  %v4289 = vld [vmem:[%s9 + $0x338] sm:$0xf]
  %v4290 = vld [vmem:[%s9 + $0x33c] sm:$0xf]
  %v4291 = vld [vmem:[%s9 + $0x340] sm:$0xf]
  %v4292 = vld [vmem:[%s9 + $0x344] sm:$0xf]
  %v4293 = vld [vmem:[%s9 + $0x348] sm:$0xf]
  %v4294 = vld [vmem:[%s9 + $0x34c] sm:$0xf]
  %v4295 = vld [vmem:[%s9 + $0x350] sm:$0xf]
  %v4296 = vld [vmem:[%s9 + $0x354] sm:$0xf]
  %v4297 = vld [vmem:[%s9 + $0x358] sm:$0xf]
  %v4298 = vld [vmem:[%s9 + $0x35c] sm:$0xf]
  %v4299 = vld [vmem:[%s9 + $0x360] sm:$0xf]
  %v4300 = vld [vmem:[%s9 + $0x364] sm:$0xf]
  %v4301 = vld [vmem:[%s9 + $0x368] sm:$0xf]
  %v4302 = vld [vmem:[%s9 + $0x36c] sm:$0xf]
  %v4303 = vld [vmem:[%s9 + $0x370] sm:$0xf]
  %v4304 = vld [vmem:[%s9 + $0x374] sm:$0xf]
  %v4305 = vld [vmem:[%s9 + $0x378] sm:$0xf]
  %v4306 = vld [vmem:[%s9 + $0x37c] sm:$0xf]
  %v4307 = vld [vmem:[%s9 + $0x380] sm:$0xf]
  %v4308 = vld [vmem:[%s9 + $0x384] sm:$0xf]
  %v4309 = vld [vmem:[%s9 + $0x388] sm:$0xf]
  %v4310 = vld [vmem:[%s9 + $0x38c] sm:$0xf]
  %v4311 = vld [vmem:[%s9 + $0x390] sm:$0xf]
  %v4312 = vld [vmem:[%s9 + $0x394] sm:$0xf]
  %v4313 = vld [vmem:[%s9 + $0x398] sm:$0xf]
  %v4314 = vld [vmem:[%s9 + $0x39c] sm:$0xf]
  %v4315 = vld [vmem:[%s9 + $0x3a0] sm:$0xf]
  %v4316 = vld [vmem:[%s9 + $0x3a4] sm:$0xf]
  %v4317 = vld [vmem:[%s9 + $0x3a8] sm:$0xf]
  %v4318 = vld [vmem:[%s9 + $0x3ac] sm:$0xf]
  %v4319 = vld [vmem:[%s9 + $0x3b0] sm:$0xf]
  %v4320 = vld [vmem:[%s9 + $0x3b4] sm:$0xf]
  %v4321 = vld [vmem:[%s9 + $0x3b8] sm:$0xf]
  %v4322 = vld [vmem:[%s9 + $0x3bc] sm:$0xf]
  %v4323 = vld [vmem:[%s9 + $0x3c0] sm:$0xf]
  %v4324 = vld [vmem:[%s9 + $0x3c4] sm:$0xf]
  %v4325 = vld [vmem:[%s9 + $0x3c8] sm:$0xf]
  %v4326 = vld [vmem:[%s9 + $0x3cc] sm:$0xf]
  %v4327 = vld [vmem:[%s9 + $0x3d0] sm:$0xf]
  %v4328 = vld [vmem:[%s9 + $0x3d4] sm:$0xf]
  %v4329 = vld [vmem:[%s9 + $0x3d8] sm:$0xf]
  %v4330 = vld [vmem:[%s9 + $0x3dc] sm:$0xf]
  %v4331 = vld [vmem:[%s9 + $0x3e0] sm:$0xf]
  %v4332 = vld [vmem:[%s9 + $0x3e4] sm:$0xf]
  %v4333 = vld [vmem:[%s9 + $0x3e8] sm:$0xf]
  %v4334 = vld [vmem:[%s9 + $0x3ec] sm:$0xf]
  %v4335 = vld [vmem:[%s9 + $0x3f0] sm:$0xf]
  %v4336 = vld [vmem:[%s9 + $0x3f4] sm:$0xf]
  %v4337 = vld [vmem:[%s9 + $0x3f8] sm:$0xf]
  %v4338 = vld [vmem:[%s9 + $0x3fc] sm:$0xf]
  %v4339 = vld [vmem:[%s10] sm:$0x1]
  %v4341 = vlaneseq
  %v4342 = vshrl.u32 %v4341, 7
  %v4343 = vsub.s32 0, %v4342
  %v4344 = vrot.slane %v4339, %v4343
  %v4602 = vunpack.c.l.b16 %v4083
  %v4603 = vunpack.c.l.b16 %v4084
  %v4604 = vunpack.c.l.b16 %v4085
  %v4605 = vunpack.c.l.b16 %v4086
  %v4606 = vunpack.c.l.b16 %v4087
  %v4607 = vunpack.c.l.b16 %v4088
  %v4608 = vunpack.c.l.b16 %v4089
  %v4609 = vunpack.c.l.b16 %v4090
  %v4610 = vunpack.c.l.b16 %v4091
  %v4611 = vunpack.c.l.b16 %v4092
  %v4612 = vunpack.c.l.b16 %v4093
  %v4613 = vunpack.c.l.b16 %v4094
  %v4614 = vunpack.c.l.b16 %v4095
  %v4615 = vunpack.c.l.b16 %v4096
  %v4616 = vunpack.c.l.b16 %v4097
  %v4617 = vunpack.c.l.b16 %v4098
  %v4618 = vunpack.c.l.b16 %v4099
  %v4619 = vunpack.c.l.b16 %v4100
  %v4620 = vunpack.c.l.b16 %v4101
  %v4621 = vunpack.c.l.b16 %v4102
  %v4622 = vunpack.c.l.b16 %v4103
  %v4623 = vunpack.c.l.b16 %v4104
  %v4624 = vunpack.c.l.b16 %v4105
  %v4625 = vunpack.c.l.b16 %v4106
  %v4626 = vunpack.c.l.b16 %v4107
  %v4627 = vunpack.c.l.b16 %v4108
  %v4628 = vunpack.c.l.b16 %v4109
  %v4629 = vunpack.c.l.b16 %v4110
  %v4630 = vunpack.c.l.b16 %v4111
  %v4631 = vunpack.c.l.b16 %v4112
  %v4632 = vunpack.c.l.b16 %v4113
  %v4633 = vunpack.c.l.b16 %v4114
  %v4634 = vunpack.c.l.b16 %v4115
  %v4635 = vunpack.c.l.b16 %v4116
  %v4636 = vunpack.c.l.b16 %v4117
  %v4637 = vunpack.c.l.b16 %v4118
  %v4638 = vunpack.c.l.b16 %v4119
  %v4639 = vunpack.c.l.b16 %v4120
  %v4640 = vunpack.c.l.b16 %v4121
  %v4641 = vunpack.c.l.b16 %v4122
  %v4642 = vunpack.c.l.b16 %v4123
  %v4643 = vunpack.c.l.b16 %v4124
  %v4644 = vunpack.c.l.b16 %v4125
  %v4645 = vunpack.c.l.b16 %v4126
  %v4646 = vunpack.c.l.b16 %v4127
  %v4647 = vunpack.c.l.b16 %v4128
  %v4648 = vunpack.c.l.b16 %v4129
  %v4649 = vunpack.c.l.b16 %v4130
  %v4650 = vunpack.c.l.b16 %v4131
  %v4651 = vunpack.c.l.b16 %v4132
  %v4652 = vunpack.c.l.b16 %v4133
  %v4653 = vunpack.c.l.b16 %v4134
  %v4654 = vunpack.c.l.b16 %v4135
  %v4655 = vunpack.c.l.b16 %v4136
  %v4656 = vunpack.c.l.b16 %v4137
  %v4657 = vunpack.c.l.b16 %v4138
  %v4658 = vunpack.c.l.b16 %v4139
  %v4659 = vunpack.c.l.b16 %v4140
  %v4660 = vunpack.c.l.b16 %v4141
  %v4661 = vunpack.c.l.b16 %v4142
  %v4662 = vunpack.c.l.b16 %v4143
  %v4663 = vunpack.c.l.b16 %v4144
  %v4664 = vunpack.c.l.b16 %v4145
  %v4665 = vunpack.c.l.b16 %v4146
  %v4666 = vunpack.c.l.b16 %v4147
  %v4667 = vunpack.c.l.b16 %v4148
  %v4668 = vunpack.c.l.b16 %v4149
  %v4669 = vunpack.c.l.b16 %v4150
  %v4670 = vunpack.c.l.b16 %v4151
  %v4671 = vunpack.c.l.b16 %v4152
  %v4672 = vunpack.c.l.b16 %v4153
  %v4673 = vunpack.c.l.b16 %v4154
  %v4674 = vunpack.c.l.b16 %v4155
  %v4675 = vunpack.c.l.b16 %v4156
  %v4676 = vunpack.c.l.b16 %v4157
  %v4677 = vunpack.c.l.b16 %v4158
  %v4678 = vunpack.c.l.b16 %v4159
  %v4679 = vunpack.c.l.b16 %v4160
  %v4680 = vunpack.c.l.b16 %v4161
  %v4681 = vunpack.c.l.b16 %v4162
  %v4682 = vunpack.c.l.b16 %v4163
  %v4683 = vunpack.c.l.b16 %v4164
  %v4684 = vunpack.c.l.b16 %v4165
  %v4685 = vunpack.c.l.b16 %v4166
  %v4686 = vunpack.c.l.b16 %v4167
  %v4687 = vunpack.c.l.b16 %v4168
  %v4688 = vunpack.c.l.b16 %v4169
  %v4689 = vunpack.c.l.b16 %v4170
  %v4690 = vunpack.c.l.b16 %v4171
  %v4691 = vunpack.c.l.b16 %v4172
  %v4692 = vunpack.c.l.b16 %v4173
  %v4693 = vunpack.c.l.b16 %v4174
  %v4694 = vunpack.c.l.b16 %v4175
  %v4695 = vunpack.c.l.b16 %v4176
  %v4696 = vunpack.c.l.b16 %v4177
  %v4697 = vunpack.c.l.b16 %v4178
  %v4698 = vunpack.c.l.b16 %v4179
  %v4699 = vunpack.c.l.b16 %v4180
  %v4700 = vunpack.c.l.b16 %v4181
  %v4701 = vunpack.c.l.b16 %v4182
  %v4702 = vunpack.c.l.b16 %v4183
  %v4703 = vunpack.c.l.b16 %v4184
  %v4704 = vunpack.c.l.b16 %v4185
  %v4705 = vunpack.c.l.b16 %v4186
  %v4706 = vunpack.c.l.b16 %v4187
  %v4707 = vunpack.c.l.b16 %v4188
  %v4708 = vunpack.c.l.b16 %v4189
  %v4709 = vunpack.c.l.b16 %v4190
  %v4710 = vunpack.c.l.b16 %v4191
  %v4711 = vunpack.c.l.b16 %v4192
  %v4712 = vunpack.c.l.b16 %v4193
  %v4713 = vunpack.c.l.b16 %v4194
  %v4714 = vunpack.c.l.b16 %v4195
  %v4715 = vunpack.c.l.b16 %v4196
  %v4716 = vunpack.c.l.b16 %v4197
  %v4717 = vunpack.c.l.b16 %v4198
  %v4718 = vunpack.c.l.b16 %v4199
  %v4719 = vunpack.c.l.b16 %v4200
  %v4720 = vunpack.c.l.b16 %v4201
  %v4721 = vunpack.c.l.b16 %v4202
  %v4722 = vunpack.c.l.b16 %v4203
  %v4723 = vunpack.c.l.b16 %v4204
  %v4724 = vunpack.c.l.b16 %v4205
  %v4725 = vunpack.c.l.b16 %v4206
  %v4726 = vunpack.c.l.b16 %v4207
  %v4727 = vunpack.c.l.b16 %v4208
  %v4728 = vunpack.c.l.b16 %v4209
  %v4729 = vunpack.c.l.b16 %v4210
  %v4730 = vunpack.c.l.b16 %v4211
  %v4731 = vunpack.c.l.b16 %v4212
  %v4732 = vunpack.c.l.b16 %v4213
  %v4733 = vunpack.c.l.b16 %v4214
  %v4734 = vunpack.c.l.b16 %v4215
  %v4735 = vunpack.c.l.b16 %v4216
  %v4736 = vunpack.c.l.b16 %v4217
  %v4737 = vunpack.c.l.b16 %v4218
  %v4738 = vunpack.c.l.b16 %v4219
  %v4739 = vunpack.c.l.b16 %v4220
  %v4740 = vunpack.c.l.b16 %v4221
  %v4741 = vunpack.c.l.b16 %v4222
  %v4742 = vunpack.c.l.b16 %v4223
  %v4743 = vunpack.c.l.b16 %v4224
  %v4744 = vunpack.c.l.b16 %v4225
  %v4745 = vunpack.c.l.b16 %v4226
  %v4746 = vunpack.c.l.b16 %v4227
  %v4747 = vunpack.c.l.b16 %v4228
  %v4748 = vunpack.c.l.b16 %v4229
  %v4749 = vunpack.c.l.b16 %v4230
  %v4750 = vunpack.c.l.b16 %v4231
  %v4751 = vunpack.c.l.b16 %v4232
  %v4752 = vunpack.c.l.b16 %v4233
  %v4753 = vunpack.c.l.b16 %v4234
  %v4754 = vunpack.c.l.b16 %v4235
  %v4755 = vunpack.c.l.b16 %v4236
  %v4756 = vunpack.c.l.b16 %v4237
  %v4757 = vunpack.c.l.b16 %v4238
  %v4758 = vunpack.c.l.b16 %v4239
  %v4759 = vunpack.c.l.b16 %v4240
  %v4760 = vunpack.c.l.b16 %v4241
  %v4761 = vunpack.c.l.b16 %v4242
  %v4762 = vunpack.c.l.b16 %v4243
  %v4763 = vunpack.c.l.b16 %v4244
  %v4764 = vunpack.c.l.b16 %v4245
  %v4765 = vunpack.c.l.b16 %v4246
  %v4766 = vunpack.c.l.b16 %v4247
  %v4767 = vunpack.c.l.b16 %v4248
  %v4768 = vunpack.c.l.b16 %v4249
  %v4769 = vunpack.c.l.b16 %v4250
  %v4770 = vunpack.c.l.b16 %v4251
  %v4771 = vunpack.c.l.b16 %v4252
  %v4772 = vunpack.c.l.b16 %v4253
  %v4773 = vunpack.c.l.b16 %v4254
  %v4774 = vunpack.c.l.b16 %v4255
  %v4775 = vunpack.c.l.b16 %v4256
  %v4776 = vunpack.c.l.b16 %v4257
  %v4777 = vunpack.c.l.b16 %v4258
  %v4778 = vunpack.c.l.b16 %v4259
  %v4779 = vunpack.c.l.b16 %v4260
  %v4780 = vunpack.c.l.b16 %v4261
  %v4781 = vunpack.c.l.b16 %v4262
  %v4782 = vunpack.c.l.b16 %v4263
  %v4783 = vunpack.c.l.b16 %v4264
  %v4784 = vunpack.c.l.b16 %v4265
  %v4785 = vunpack.c.l.b16 %v4266
  %v4786 = vunpack.c.l.b16 %v4267
  %v4787 = vunpack.c.l.b16 %v4268
  %v4788 = vunpack.c.l.b16 %v4269
  %v4789 = vunpack.c.l.b16 %v4270
  %v4790 = vunpack.c.l.b16 %v4271
  %v4791 = vunpack.c.l.b16 %v4272
  %v4792 = vunpack.c.l.b16 %v4273
  %v4793 = vunpack.c.l.b16 %v4274
  %v4794 = vunpack.c.l.b16 %v4275
  %v4795 = vunpack.c.l.b16 %v4276
  %v4796 = vunpack.c.l.b16 %v4277
  %v4797 = vunpack.c.l.b16 %v4278
  %v4798 = vunpack.c.l.b16 %v4279
  %v4799 = vunpack.c.l.b16 %v4280
  %v4800 = vunpack.c.l.b16 %v4281
  %v4801 = vunpack.c.l.b16 %v4282
  %v4802 = vunpack.c.l.b16 %v4283
  %v4803 = vunpack.c.l.b16 %v4284
  %v4804 = vunpack.c.l.b16 %v4285
  %v4805 = vunpack.c.l.b16 %v4286
  %v4806 = vunpack.c.l.b16 %v4287
  %v4807 = vunpack.c.l.b16 %v4288
  %v4808 = vunpack.c.l.b16 %v4289
  %v4809 = vunpack.c.l.b16 %v4290
  %v4810 = vunpack.c.l.b16 %v4291
  %v4811 = vunpack.c.l.b16 %v4292
  %v4812 = vunpack.c.l.b16 %v4293
  %v4813 = vunpack.c.l.b16 %v4294
  %v4814 = vunpack.c.l.b16 %v4295
  %v4815 = vunpack.c.l.b16 %v4296
  %v4816 = vunpack.c.l.b16 %v4297
  %v4817 = vunpack.c.l.b16 %v4298
  %v4818 = vunpack.c.l.b16 %v4299
  %v4819 = vunpack.c.l.b16 %v4300
  %v4820 = vunpack.c.l.b16 %v4301
  %v4821 = vunpack.c.l.b16 %v4302
  %v4822 = vunpack.c.l.b16 %v4303
  %v4823 = vunpack.c.l.b16 %v4304
  %v4824 = vunpack.c.l.b16 %v4305
  %v4825 = vunpack.c.l.b16 %v4306
  %v4826 = vunpack.c.l.b16 %v4307
  %v4827 = vunpack.c.l.b16 %v4308
  %v4828 = vunpack.c.l.b16 %v4309
  %v4829 = vunpack.c.l.b16 %v4310
  %v4830 = vunpack.c.l.b16 %v4311
  %v4831 = vunpack.c.l.b16 %v4312
  %v4832 = vunpack.c.l.b16 %v4313
  %v4833 = vunpack.c.l.b16 %v4314
  %v4834 = vunpack.c.l.b16 %v4315
  %v4835 = vunpack.c.l.b16 %v4316
  %v4836 = vunpack.c.l.b16 %v4317
  %v4837 = vunpack.c.l.b16 %v4318
  %v4838 = vunpack.c.l.b16 %v4319
  %v4839 = vunpack.c.l.b16 %v4320
  %v4840 = vunpack.c.l.b16 %v4321
  %v4841 = vunpack.c.l.b16 %v4322
  %v4842 = vunpack.c.l.b16 %v4323
  %v4843 = vunpack.c.l.b16 %v4324
  %v4844 = vunpack.c.l.b16 %v4325
  %v4845 = vunpack.c.l.b16 %v4326
  %v4846 = vunpack.c.l.b16 %v4327
  %v4847 = vunpack.c.l.b16 %v4328
  %v4848 = vunpack.c.l.b16 %v4329
  %v4849 = vunpack.c.l.b16 %v4330
  %v4850 = vunpack.c.l.b16 %v4331
  %v4851 = vunpack.c.l.b16 %v4332
  %v4852 = vunpack.c.l.b16 %v4333
  %v4853 = vunpack.c.l.b16 %v4334
  %v4854 = vunpack.c.l.b16 %v4335
  %v4855 = vunpack.c.l.b16 %v4336
  %v4856 = vunpack.c.l.b16 %v4337
  %v4857 = vunpack.c.l.b16 %v4338
  %v4858 = vpack.c.b16 %v4603, %v4602
  %v4859 = vpack.c.b16 %v4605, %v4604
  %v4860 = vpack.c.b16 %v4607, %v4606
  %v4861 = vpack.c.b16 %v4609, %v4608
  %v4862 = vpack.c.b16 %v4611, %v4610
  %v4863 = vpack.c.b16 %v4613, %v4612
  %v4864 = vpack.c.b16 %v4615, %v4614
  %v4865 = vpack.c.b16 %v4617, %v4616
  %v4866 = vpack.c.b16 %v4619, %v4618
  %v4867 = vpack.c.b16 %v4621, %v4620
  %v4868 = vpack.c.b16 %v4623, %v4622
  %v4869 = vpack.c.b16 %v4625, %v4624
  %v4870 = vpack.c.b16 %v4627, %v4626
  %v4871 = vpack.c.b16 %v4629, %v4628
  %v4872 = vpack.c.b16 %v4631, %v4630
  %v4873 = vpack.c.b16 %v4633, %v4632
  %v4874 = vpack.c.b16 %v4635, %v4634
  %v4875 = vpack.c.b16 %v4637, %v4636
  %v4876 = vpack.c.b16 %v4639, %v4638
  %v4877 = vpack.c.b16 %v4641, %v4640
  %v4878 = vpack.c.b16 %v4643, %v4642
  %v4879 = vpack.c.b16 %v4645, %v4644
  %v4880 = vpack.c.b16 %v4647, %v4646
  %v4881 = vpack.c.b16 %v4649, %v4648
  %v4882 = vpack.c.b16 %v4651, %v4650
  %v4883 = vpack.c.b16 %v4653, %v4652
  %v4884 = vpack.c.b16 %v4655, %v4654
  %v4885 = vpack.c.b16 %v4657, %v4656
  %v4886 = vpack.c.b16 %v4659, %v4658
  %v4887 = vpack.c.b16 %v4661, %v4660
  %v4888 = vpack.c.b16 %v4663, %v4662
  %v4889 = vpack.c.b16 %v4665, %v4664
  %v4890 = vpack.c.b16 %v4667, %v4666
  %v4891 = vpack.c.b16 %v4669, %v4668
  %v4892 = vpack.c.b16 %v4671, %v4670
  %v4893 = vpack.c.b16 %v4673, %v4672
  %v4894 = vpack.c.b16 %v4675, %v4674
  %v4895 = vpack.c.b16 %v4677, %v4676
  %v4896 = vpack.c.b16 %v4679, %v4678
  %v4897 = vpack.c.b16 %v4681, %v4680
  %v4898 = vpack.c.b16 %v4683, %v4682
  %v4899 = vpack.c.b16 %v4685, %v4684
  %v4900 = vpack.c.b16 %v4687, %v4686
  %v4901 = vpack.c.b16 %v4689, %v4688
  %v4902 = vpack.c.b16 %v4691, %v4690
  %v4903 = vpack.c.b16 %v4693, %v4692
  %v4904 = vpack.c.b16 %v4695, %v4694
  %v4905 = vpack.c.b16 %v4697, %v4696
  %v4906 = vpack.c.b16 %v4699, %v4698
  %v4907 = vpack.c.b16 %v4701, %v4700
  %v4908 = vpack.c.b16 %v4703, %v4702
  %v4909 = vpack.c.b16 %v4705, %v4704
  %v4910 = vpack.c.b16 %v4707, %v4706
  %v4911 = vpack.c.b16 %v4709, %v4708
  %v4912 = vpack.c.b16 %v4711, %v4710
  %v4913 = vpack.c.b16 %v4713, %v4712
  %v4914 = vpack.c.b16 %v4715, %v4714
  %v4915 = vpack.c.b16 %v4717, %v4716
  %v4916 = vpack.c.b16 %v4719, %v4718
  %v4917 = vpack.c.b16 %v4721, %v4720
  %v4918 = vpack.c.b16 %v4723, %v4722
  %v4919 = vpack.c.b16 %v4725, %v4724
  %v4920 = vpack.c.b16 %v4727, %v4726
  %v4921 = vpack.c.b16 %v4729, %v4728
  %v4922 = vpack.c.b16 %v4731, %v4730
  %v4923 = vpack.c.b16 %v4733, %v4732
  %v4924 = vpack.c.b16 %v4735, %v4734
  %v4925 = vpack.c.b16 %v4737, %v4736
  %v4926 = vpack.c.b16 %v4739, %v4738
  %v4927 = vpack.c.b16 %v4741, %v4740
  %v4928 = vpack.c.b16 %v4743, %v4742
  %v4929 = vpack.c.b16 %v4745, %v4744
  %v4930 = vpack.c.b16 %v4747, %v4746
  %v4931 = vpack.c.b16 %v4749, %v4748
  %v4932 = vpack.c.b16 %v4751, %v4750
  %v4933 = vpack.c.b16 %v4753, %v4752
  %v4934 = vpack.c.b16 %v4755, %v4754
  %v4935 = vpack.c.b16 %v4757, %v4756
  %v4936 = vpack.c.b16 %v4759, %v4758
  %v4937 = vpack.c.b16 %v4761, %v4760
  %v4938 = vpack.c.b16 %v4763, %v4762
  %v4939 = vpack.c.b16 %v4765, %v4764
  %v4940 = vpack.c.b16 %v4767, %v4766
  %v4941 = vpack.c.b16 %v4769, %v4768
  %v4942 = vpack.c.b16 %v4771, %v4770
  %v4943 = vpack.c.b16 %v4773, %v4772
  %v4944 = vpack.c.b16 %v4775, %v4774
  %v4945 = vpack.c.b16 %v4777, %v4776
  %v4946 = vpack.c.b16 %v4779, %v4778
  %v4947 = vpack.c.b16 %v4781, %v4780
  %v4948 = vpack.c.b16 %v4783, %v4782
  %v4949 = vpack.c.b16 %v4785, %v4784
  %v4950 = vpack.c.b16 %v4787, %v4786
  %v4951 = vpack.c.b16 %v4789, %v4788
  %v4952 = vpack.c.b16 %v4791, %v4790
  %v4953 = vpack.c.b16 %v4793, %v4792
  %v4954 = vpack.c.b16 %v4795, %v4794
  %v4955 = vpack.c.b16 %v4797, %v4796
  %v4956 = vpack.c.b16 %v4799, %v4798
  %v4957 = vpack.c.b16 %v4801, %v4800
  %v4958 = vpack.c.b16 %v4803, %v4802
  %v4959 = vpack.c.b16 %v4805, %v4804
  %v4960 = vpack.c.b16 %v4807, %v4806
  %v4961 = vpack.c.b16 %v4809, %v4808
  %v4962 = vpack.c.b16 %v4811, %v4810
  %v4963 = vpack.c.b16 %v4813, %v4812
  %v4964 = vpack.c.b16 %v4815, %v4814
  %v4965 = vpack.c.b16 %v4817, %v4816
  %v4966 = vpack.c.b16 %v4819, %v4818
  %v4967 = vpack.c.b16 %v4821, %v4820
  %v4968 = vpack.c.b16 %v4823, %v4822
  %v4969 = vpack.c.b16 %v4825, %v4824
  %v4970 = vpack.c.b16 %v4827, %v4826
  %v4971 = vpack.c.b16 %v4829, %v4828
  %v4972 = vpack.c.b16 %v4831, %v4830
  %v4973 = vpack.c.b16 %v4833, %v4832
  %v4974 = vpack.c.b16 %v4835, %v4834
  %v4975 = vpack.c.b16 %v4837, %v4836
  %v4976 = vpack.c.b16 %v4839, %v4838
  %v4977 = vpack.c.b16 %v4841, %v4840
  %v4978 = vpack.c.b16 %v4843, %v4842
  %v4979 = vpack.c.b16 %v4845, %v4844
  %v4980 = vpack.c.b16 %v4847, %v4846
  %v4981 = vpack.c.b16 %v4849, %v4848
  %v4982 = vpack.c.b16 %v4851, %v4850
  %v4983 = vpack.c.b16 %v4853, %v4852
  %v4984 = vpack.c.b16 %v4855, %v4854
  %v4985 = vpack.c.b16 %v4857, %v4856
  %5114 = vmatprep.subr.bf16.mxu0 0
  %5115 = vmatpush1.bf16.msra.mxu0 %v4858
  %5116 = vmatprep.subr.bf16.mxu0 0
  %5117 = vmatpush1.bf16.msra.mxu0 %v4859
  %5118 = vmatprep.subr.bf16.mxu0 0
  %5119 = vmatpush1.bf16.msra.mxu0 %v4860
  %5120 = vmatprep.subr.bf16.mxu0 0
  %5121 = vmatpush1.bf16.msra.mxu0 %v4861
  %5122 = vmatprep.subr.bf16.mxu0 0
  %5123 = vmatpush1.bf16.msra.mxu0 %v4862
  %5124 = vmatprep.subr.bf16.mxu0 0
  %5125 = vmatpush1.bf16.msra.mxu0 %v4863
  %5126 = vmatprep.subr.bf16.mxu0 0
  %5127 = vmatpush1.bf16.msra.mxu0 %v4864
  %5128 = vmatprep.subr.bf16.mxu0 0
  %5129 = vmatpush1.bf16.msra.mxu0 %v4865
  %5130 = vmatprep.subr.bf16.mxu0 0
  %5131 = vmatpush1.bf16.msra.mxu0 %v4866
  %5132 = vmatprep.subr.bf16.mxu0 0
  %5133 = vmatpush1.bf16.msra.mxu0 %v4867
  %5134 = vmatprep.subr.bf16.mxu0 0
  %5135 = vmatpush1.bf16.msra.mxu0 %v4868
  %5136 = vmatprep.subr.bf16.mxu0 0
  %5137 = vmatpush1.bf16.msra.mxu0 %v4869
  %5138 = vmatprep.subr.bf16.mxu0 0
  %5139 = vmatpush1.bf16.msra.mxu0 %v4870
  %5140 = vmatprep.subr.bf16.mxu0 0
  %5141 = vmatpush1.bf16.msra.mxu0 %v4871
  %5142 = vmatprep.subr.bf16.mxu0 0
  %5143 = vmatpush1.bf16.msra.mxu0 %v4872
  %5144 = vmatprep.subr.bf16.mxu0 0
  %5145 = vmatpush1.bf16.msra.mxu0 %v4873
  %5146 = vmatprep.mubr.bf16.mxu0 %v4068
  %5147 = vmatmul.mubr.bf16.gmra.mrb[0].mxu0 %v4067
  %v5148 = vpop.f32.mrb[0].mxu0
  %v5149 = vadd.f32 %v4344, %v5148
  %v5150 = vpop.f32.mrb[0].mxu0
  %v5151 = vpop.f32.mrb[0].mxu0
  %v5152 = vpop.f32.mrb[0].mxu0
  %5153 = vdwg.mxu0
  %5154 = vmatprep.subr.bf16.mxu0 0
  %5155 = vmatpush1.bf16.msra.mxu0 %v4874
  %5156 = vmatprep.subr.bf16.mxu0 0
  %5157 = vmatpush1.bf16.msra.mxu0 %v4875
  %5158 = vmatprep.subr.bf16.mxu0 0
  %5159 = vmatpush1.bf16.msra.mxu0 %v4876
  %5160 = vmatprep.subr.bf16.mxu0 0
  %5161 = vmatpush1.bf16.msra.mxu0 %v4877
  %5162 = vmatprep.subr.bf16.mxu0 0
  %5163 = vmatpush1.bf16.msra.mxu0 %v4878
  %5164 = vmatprep.subr.bf16.mxu0 0
  %5165 = vmatpush1.bf16.msra.mxu0 %v4879
  %5166 = vmatprep.subr.bf16.mxu0 0
  %5167 = vmatpush1.bf16.msra.mxu0 %v4880
  %5168 = vmatprep.subr.bf16.mxu0 0
  %5169 = vmatpush1.bf16.msra.mxu0 %v4881
  %5170 = vmatprep.subr.bf16.mxu0 0
  %5171 = vmatpush1.bf16.msra.mxu0 %v4882
  %5172 = vmatprep.subr.bf16.mxu0 0
  %5173 = vmatpush1.bf16.msra.mxu0 %v4883
  %5174 = vmatprep.subr.bf16.mxu0 0
  %5175 = vmatpush1.bf16.msra.mxu0 %v4884
  %5176 = vmatprep.subr.bf16.mxu0 0
  %5177 = vmatpush1.bf16.msra.mxu0 %v4885
  %5178 = vmatprep.subr.bf16.mxu0 0
  %5179 = vmatpush1.bf16.msra.mxu0 %v4886
  %5180 = vmatprep.subr.bf16.mxu0 0
  %5181 = vmatpush1.bf16.msra.mxu0 %v4887
  %5182 = vmatprep.subr.bf16.mxu0 0
  %5183 = vmatpush1.bf16.msra.mxu0 %v4888
  %5184 = vmatprep.subr.bf16.mxu0 0
  %5185 = vmatpush1.bf16.msra.mxu0 %v4889
  %5186 = vmatprep.mubr.bf16.mxu0 %v4070
  %5187 = vmatmul.mubr.bf16.gmra.mrb[0].mxu0 %v4069
  %v5188 = vpop.f32.mrb[0].mxu0
  %v5189 = vadd.f32 %v5149, %v5188
  %v5190 = vpop.f32.mrb[0].mxu0
  %v5191 = vpop.f32.mrb[0].mxu0
  %v5192 = vpop.f32.mrb[0].mxu0
  %5193 = vdwg.mxu0
  %5194 = vmatprep.subr.bf16.mxu0 0
  %5195 = vmatpush1.bf16.msra.mxu0 %v4890
  %5196 = vmatprep.subr.bf16.mxu0 0
  %5197 = vmatpush1.bf16.msra.mxu0 %v4891
  %5198 = vmatprep.subr.bf16.mxu0 0
  %5199 = vmatpush1.bf16.msra.mxu0 %v4892
  %5200 = vmatprep.subr.bf16.mxu0 0
  %5201 = vmatpush1.bf16.msra.mxu0 %v4893
  %5202 = vmatprep.subr.bf16.mxu0 0
  %5203 = vmatpush1.bf16.msra.mxu0 %v4894
  %5204 = vmatprep.subr.bf16.mxu0 0
  %5205 = vmatpush1.bf16.msra.mxu0 %v4895
  %5206 = vmatprep.subr.bf16.mxu0 0
  %5207 = vmatpush1.bf16.msra.mxu0 %v4896
  %5208 = vmatprep.subr.bf16.mxu0 0
  %5209 = vmatpush1.bf16.msra.mxu0 %v4897
  %5210 = vmatprep.subr.bf16.mxu0 0
  %5211 = vmatpush1.bf16.msra.mxu0 %v4898
  %5212 = vmatprep.subr.bf16.mxu0 0
  %5213 = vmatpush1.bf16.msra.mxu0 %v4899
  %5214 = vmatprep.subr.bf16.mxu0 0
  %5215 = vmatpush1.bf16.msra.mxu0 %v4900
  %5216 = vmatprep.subr.bf16.mxu0 0
  %5217 = vmatpush1.bf16.msra.mxu0 %v4901
  %5218 = vmatprep.subr.bf16.mxu0 0
  %5219 = vmatpush1.bf16.msra.mxu0 %v4902
  %5220 = vmatprep.subr.bf16.mxu0 0
  %5221 = vmatpush1.bf16.msra.mxu0 %v4903
  %5222 = vmatprep.subr.bf16.mxu0 0
  %5223 = vmatpush1.bf16.msra.mxu0 %v4904
  %5224 = vmatprep.subr.bf16.mxu0 0
  %5225 = vmatpush1.bf16.msra.mxu0 %v4905
  %5226 = vmatprep.mubr.bf16.mxu0 %v4072
  %5227 = vmatmul.mubr.bf16.gmra.mrb[0].mxu0 %v4071
  %v5228 = vpop.f32.mrb[0].mxu0
  %v5229 = vadd.f32 %v5189, %v5228
  %v5230 = vpop.f32.mrb[0].mxu0
  %v5231 = vpop.f32.mrb[0].mxu0
  %v5232 = vpop.f32.mrb[0].mxu0
  %5233 = vdwg.mxu0
  %5234 = vmatprep.subr.bf16.mxu0 0
  %5235 = vmatpush1.bf16.msra.mxu0 %v4906
  %5236 = vmatprep.subr.bf16.mxu0 0
  %5237 = vmatpush1.bf16.msra.mxu0 %v4907
  %5238 = vmatprep.subr.bf16.mxu0 0
  %5239 = vmatpush1.bf16.msra.mxu0 %v4908
  %5240 = vmatprep.subr.bf16.mxu0 0
  %5241 = vmatpush1.bf16.msra.mxu0 %v4909
  %5242 = vmatprep.subr.bf16.mxu0 0
  %5243 = vmatpush1.bf16.msra.mxu0 %v4910
  %5244 = vmatprep.subr.bf16.mxu0 0
  %5245 = vmatpush1.bf16.msra.mxu0 %v4911
  %5246 = vmatprep.subr.bf16.mxu0 0
  %5247 = vmatpush1.bf16.msra.mxu0 %v4912
  %5248 = vmatprep.subr.bf16.mxu0 0
  %5249 = vmatpush1.bf16.msra.mxu0 %v4913
  %5250 = vmatprep.subr.bf16.mxu0 0
  %5251 = vmatpush1.bf16.msra.mxu0 %v4914
  %5252 = vmatprep.subr.bf16.mxu0 0
  %5253 = vmatpush1.bf16.msra.mxu0 %v4915
  %5254 = vmatprep.subr.bf16.mxu0 0
  %5255 = vmatpush1.bf16.msra.mxu0 %v4916
  %5256 = vmatprep.subr.bf16.mxu0 0
  %5257 = vmatpush1.bf16.msra.mxu0 %v4917
  %5258 = vmatprep.subr.bf16.mxu0 0
  %5259 = vmatpush1.bf16.msra.mxu0 %v4918
  %5260 = vmatprep.subr.bf16.mxu0 0
  %5261 = vmatpush1.bf16.msra.mxu0 %v4919
  %5262 = vmatprep.subr.bf16.mxu0 0
  %5263 = vmatpush1.bf16.msra.mxu0 %v4920
  %5264 = vmatprep.subr.bf16.mxu0 0
  %5265 = vmatpush1.bf16.msra.mxu0 %v4921
  %5266 = vmatprep.mubr.bf16.mxu0 %v4074
  %5267 = vmatmul.mubr.bf16.gmra.mrb[0].mxu0 %v4073
  %v5268 = vpop.f32.mrb[0].mxu0
  %v5269 = vadd.f32 %v5229, %v5268
  %v5270 = vpop.f32.mrb[0].mxu0
  %v5271 = vpop.f32.mrb[0].mxu0
  %v5272 = vpop.f32.mrb[0].mxu0
  %5273 = vdwg.mxu0
  %5274 = vmatprep.subr.bf16.mxu0 0
  %5275 = vmatpush1.bf16.msra.mxu0 %v4922
  %5276 = vmatprep.subr.bf16.mxu0 0
  %5277 = vmatpush1.bf16.msra.mxu0 %v4923
  %5278 = vmatprep.subr.bf16.mxu0 0
  %5279 = vmatpush1.bf16.msra.mxu0 %v4924
  %5280 = vmatprep.subr.bf16.mxu0 0
  %5281 = vmatpush1.bf16.msra.mxu0 %v4925
  %5282 = vmatprep.subr.bf16.mxu0 0
  %5283 = vmatpush1.bf16.msra.mxu0 %v4926
  %5284 = vmatprep.subr.bf16.mxu0 0
  %5285 = vmatpush1.bf16.msra.mxu0 %v4927
  %5286 = vmatprep.subr.bf16.mxu0 0
  %5287 = vmatpush1.bf16.msra.mxu0 %v4928
  %5288 = vmatprep.subr.bf16.mxu0 0
  %5289 = vmatpush1.bf16.msra.mxu0 %v4929
  %5290 = vmatprep.subr.bf16.mxu0 0
  %5291 = vmatpush1.bf16.msra.mxu0 %v4930
  %5292 = vmatprep.subr.bf16.mxu0 0
  %5293 = vmatpush1.bf16.msra.mxu0 %v4931
  %5294 = vmatprep.subr.bf16.mxu0 0
  %5295 = vmatpush1.bf16.msra.mxu0 %v4932
  %5296 = vmatprep.subr.bf16.mxu0 0
  %5297 = vmatpush1.bf16.msra.mxu0 %v4933
  %5298 = vmatprep.subr.bf16.mxu0 0
  %5299 = vmatpush1.bf16.msra.mxu0 %v4934
  %5300 = vmatprep.subr.bf16.mxu0 0
  %5301 = vmatpush1.bf16.msra.mxu0 %v4935
  %5302 = vmatprep.subr.bf16.mxu0 0
  %5303 = vmatpush1.bf16.msra.mxu0 %v4936
  %5304 = vmatprep.subr.bf16.mxu0 0
  %5305 = vmatpush1.bf16.msra.mxu0 %v4937
  %5306 = vmatprep.mubr.bf16.mxu0 %v4076
  %5307 = vmatmul.mubr.bf16.gmra.mrb[0].mxu0 %v4075
  %v5308 = vpop.f32.mrb[0].mxu0
  %v5309 = vadd.f32 %v5269, %v5308
  %v5310 = vpop.f32.mrb[0].mxu0
  %v5311 = vpop.f32.mrb[0].mxu0
  %v5312 = vpop.f32.mrb[0].mxu0
  %5313 = vdwg.mxu0
  %5314 = vmatprep.subr.bf16.mxu0 0
  %5315 = vmatpush1.bf16.msra.mxu0 %v4938
  %5316 = vmatprep.subr.bf16.mxu0 0
  %5317 = vmatpush1.bf16.msra.mxu0 %v4939
  %5318 = vmatprep.subr.bf16.mxu0 0
  %5319 = vmatpush1.bf16.msra.mxu0 %v4940
  %5320 = vmatprep.subr.bf16.mxu0 0
  %5321 = vmatpush1.bf16.msra.mxu0 %v4941
  %5322 = vmatprep.subr.bf16.mxu0 0
  %5323 = vmatpush1.bf16.msra.mxu0 %v4942
  %5324 = vmatprep.subr.bf16.mxu0 0
  %5325 = vmatpush1.bf16.msra.mxu0 %v4943
  %5326 = vmatprep.subr.bf16.mxu0 0
  %5327 = vmatpush1.bf16.msra.mxu0 %v4944
  %5328 = vmatprep.subr.bf16.mxu0 0
  %5329 = vmatpush1.bf16.msra.mxu0 %v4945
  %5330 = vmatprep.subr.bf16.mxu0 0
  %5331 = vmatpush1.bf16.msra.mxu0 %v4946
  %5332 = vmatprep.subr.bf16.mxu0 0
  %5333 = vmatpush1.bf16.msra.mxu0 %v4947
  %5334 = vmatprep.subr.bf16.mxu0 0
  %5335 = vmatpush1.bf16.msra.mxu0 %v4948
  %5336 = vmatprep.subr.bf16.mxu0 0
  %5337 = vmatpush1.bf16.msra.mxu0 %v4949
  %5338 = vmatprep.subr.bf16.mxu0 0
  %5339 = vmatpush1.bf16.msra.mxu0 %v4950
  %5340 = vmatprep.subr.bf16.mxu0 0
  %5341 = vmatpush1.bf16.msra.mxu0 %v4951
  %5342 = vmatprep.subr.bf16.mxu0 0
  %5343 = vmatpush1.bf16.msra.mxu0 %v4952
  %5344 = vmatprep.subr.bf16.mxu0 0
  %5345 = vmatpush1.bf16.msra.mxu0 %v4953
  %5346 = vmatprep.mubr.bf16.mxu0 %v4078
  %5347 = vmatmul.mubr.bf16.gmra.mrb[0].mxu0 %v4077
  %v5348 = vpop.f32.mrb[0].mxu0
  %v5349 = vadd.f32 %v5309, %v5348
  %v5350 = vpop.f32.mrb[0].mxu0
  %v5351 = vpop.f32.mrb[0].mxu0
  %v5352 = vpop.f32.mrb[0].mxu0
  %5353 = vdwg.mxu0
  %5354 = vmatprep.subr.bf16.mxu0 0
  %5355 = vmatpush1.bf16.msra.mxu0 %v4954
  %5356 = vmatprep.subr.bf16.mxu0 0
  %5357 = vmatpush1.bf16.msra.mxu0 %v4955
  %5358 = vmatprep.subr.bf16.mxu0 0
  %5359 = vmatpush1.bf16.msra.mxu0 %v4956
  %5360 = vmatprep.subr.bf16.mxu0 0
  %5361 = vmatpush1.bf16.msra.mxu0 %v4957
  %5362 = vmatprep.subr.bf16.mxu0 0
  %5363 = vmatpush1.bf16.msra.mxu0 %v4958
  %5364 = vmatprep.subr.bf16.mxu0 0
  %5365 = vmatpush1.bf16.msra.mxu0 %v4959
  %5366 = vmatprep.subr.bf16.mxu0 0
  %5367 = vmatpush1.bf16.msra.mxu0 %v4960
  %5368 = vmatprep.subr.bf16.mxu0 0
  %5369 = vmatpush1.bf16.msra.mxu0 %v4961
  %5370 = vmatprep.subr.bf16.mxu0 0
  %5371 = vmatpush1.bf16.msra.mxu0 %v4962
  %5372 = vmatprep.subr.bf16.mxu0 0
  %5373 = vmatpush1.bf16.msra.mxu0 %v4963
  %5374 = vmatprep.subr.bf16.mxu0 0
  %5375 = vmatpush1.bf16.msra.mxu0 %v4964
  %5376 = vmatprep.subr.bf16.mxu0 0
  %5377 = vmatpush1.bf16.msra.mxu0 %v4965
  %5378 = vmatprep.subr.bf16.mxu0 0
  %5379 = vmatpush1.bf16.msra.mxu0 %v4966
  %5380 = vmatprep.subr.bf16.mxu0 0
  %5381 = vmatpush1.bf16.msra.mxu0 %v4967
  %5382 = vmatprep.subr.bf16.mxu0 0
  %5383 = vmatpush1.bf16.msra.mxu0 %v4968
  %5384 = vmatprep.subr.bf16.mxu0 0
  %5385 = vmatpush1.bf16.msra.mxu0 %v4969
  %5386 = vmatprep.mubr.bf16.mxu0 %v4080
  %5387 = vmatmul.mubr.bf16.gmra.mrb[0].mxu0 %v4079
  %v5388 = vpop.f32.mrb[0].mxu0
  %v5389 = vadd.f32 %v5349, %v5388
  %v5390 = vpop.f32.mrb[0].mxu0
  %v5391 = vpop.f32.mrb[0].mxu0
  %v5392 = vpop.f32.mrb[0].mxu0
  %5393 = vdwg.mxu0
  %5394 = vmatprep.subr.bf16.mxu0 0
  %5395 = vmatpush1.bf16.msra.mxu0 %v4970
  %5396 = vmatprep.subr.bf16.mxu0 0
  %5397 = vmatpush1.bf16.msra.mxu0 %v4971
  %5398 = vmatprep.subr.bf16.mxu0 0
  %5399 = vmatpush1.bf16.msra.mxu0 %v4972
  %5400 = vmatprep.subr.bf16.mxu0 0
  %5401 = vmatpush1.bf16.msra.mxu0 %v4973
  %5402 = vmatprep.subr.bf16.mxu0 0
  %5403 = vmatpush1.bf16.msra.mxu0 %v4974
  %5404 = vmatprep.subr.bf16.mxu0 0
  %5405 = vmatpush1.bf16.msra.mxu0 %v4975
  %5406 = vmatprep.subr.bf16.mxu0 0
  %5407 = vmatpush1.bf16.msra.mxu0 %v4976
  %5408 = vmatprep.subr.bf16.mxu0 0
  %5409 = vmatpush1.bf16.msra.mxu0 %v4977
  %5410 = vmatprep.subr.bf16.mxu0 0
  %5411 = vmatpush1.bf16.msra.mxu0 %v4978
  %5412 = vmatprep.subr.bf16.mxu0 0
  %5413 = vmatpush1.bf16.msra.mxu0 %v4979
  %5414 = vmatprep.subr.bf16.mxu0 0
  %5415 = vmatpush1.bf16.msra.mxu0 %v4980
  %5416 = vmatprep.subr.bf16.mxu0 0
  %5417 = vmatpush1.bf16.msra.mxu0 %v4981
  %5418 = vmatprep.subr.bf16.mxu0 0
  %5419 = vmatpush1.bf16.msra.mxu0 %v4982
  %5420 = vmatprep.subr.bf16.mxu0 0
  %5421 = vmatpush1.bf16.msra.mxu0 %v4983
  %5422 = vmatprep.subr.bf16.mxu0 0
  %5423 = vmatpush1.bf16.msra.mxu0 %v4984
  %5424 = vmatprep.subr.bf16.mxu0 0
  %5425 = vmatpush1.bf16.msra.mxu0 %v4985
  %5426 = vmatprep.mubr.bf16.mxu0 %v4082
  %5427 = vmatmul.mubr.bf16.gmra.mrb[0].mxu0 %v4081
  %v5428 = vpop.f32.mrb[0].mxu0
  %v5429 = vadd.f32 %v5389, %v5428
  %v5430 = vpop.f32.mrb[0].mxu0
  %v5431 = vpop.f32.mrb[0].mxu0
  %v5432 = vpop.f32.mrb[0].mxu0
  %5433 = vdwg.mxu0
  %v5434 = vadd.f32 %v3442, %v5429
  %v5435 = vld [vmem:[%s11] sm:$0x1]
  %v5436 = vld [vmem:[%s12] sm:$0x1]
  %v5437 = vsel %vm3337, %v5434, 0.0
  %5438 = vadd.xlane.f32.xlu0 %v5437
  %v5439 = vpop.xlane.xlu0 %5438
  %v5440 = vmul.f32 %v5434, %v5434
  %v5441 = vsel %vm3337, %v5440, 0.0
  %5442 = vadd.xlane.f32.xlu0 %v5441
  %v5443 = vpop.xlane.xlu0 %5442
  %v5444 = vmul.f32 %v5439, 0.03125
  %v5445 = vmul.f32 %v5443, 0.03125
  %v5446 = vmul.f32 %v5444, %v5444
  %v5447 = vsub.f32 %v5445, %v5446
  %v5448 = vsub.f32 %v5434, %v5444
  %v5449 = vadd.f32 %v5447, 1e-05
  %v5450 = vrsqrt.pop %v5449
  %v5451 = vmul.f32 %v5448, %v5450
  %v5453 = vlaneseq
  %v5454 = vshrl.u32 %v5453, 7
  %v5455 = vsub.s32 0, %v5454
  %v5456 = vrot.slane %v5435, %v5455
  %v5458 = vmul.f32 %v5451, %v5456
  %v5460 = vlaneseq
  %v5461 = vshrl.u32 %v5460, 7
  %v5462 = vsub.s32 0, %v5461
  %v5463 = vrot.slane %v5436, %v5462
  %v5465 = vadd.f32 %v5458, %v5463
  %v5466 = vld [vmem:[%s13] sm:$0xff]
  %v5467 = vld [vmem:[%s13 + $0x8] sm:$0xff]
  %v5468 = vld [vmem:[%s13 + $0x10] sm:$0xff]
  %v5469 = vld [vmem:[%s13 + $0x18] sm:$0xff]
  %v5470 = vld [vmem:[%s14] sm:$0x1]
  %v5472 = vlaneseq
  %v5473 = vshrl.u32 %v5472, 7
  %v5474 = vsub.s32 0, %v5473
  %v5475 = vrot.slane %v5470, %v5474
  %v5478 = vsel %vm3337, %v5465, 0
  %5480 = vmatprep.subr.mxu0 0.0
  %5481 = vmatpush1.msra.mxu0 %v5466
  %5482 = vmatprep.subr.mxu0 0.0
  %5483 = vmatpush1.msra.mxu0 %v5467
  %5484 = vmatprep.subr.mxu0 0.0
  %5485 = vmatpush1.msra.mxu0 %v5468
  %5486 = vmatprep.subr.mxu0 0.0
  %5487 = vmatpush1.msra.mxu0 %v5469
  %5488 = vmatprep.subr.mxu0 0.0
  %5489 = vmatpush1.msra.mxu0 0.0
  %5490 = vmatprep.subr.mxu0 0.0
  %5491 = vmatpush1.msra.mxu0 0.0
  %5492 = vmatprep.subr.mxu0 0.0
  %5493 = vmatpush1.msra.mxu0 0.0
  %5494 = vmatprep.subr.mxu0 0.0
  %5495 = vmatpush1.msra.mxu0 0.0
  %5496 = vmatprep.subr.mxu0 0.0
  %5497 = vmatpush1.msra.mxu0 0.0
  %5498 = vmatprep.subr.mxu0 0.0
  %5499 = vmatpush1.msra.mxu0 0.0
  %5500 = vmatprep.subr.mxu0 0.0
  %5501 = vmatpush1.msra.mxu0 0.0
  %5502 = vmatprep.subr.mxu0 0.0
  %5503 = vmatpush1.msra.mxu0 0.0
  %5504 = vmatprep.subr.mxu0 0.0
  %5505 = vmatpush1.msra.mxu0 0.0
  %5506 = vmatprep.subr.mxu0 0.0
  %5507 = vmatpush1.msra.mxu0 0.0
  %5508 = vmatprep.subr.mxu0 0.0
  %5509 = vmatpush1.msra.mxu0 0.0
  %5510 = vmatprep.subr.mxu0 0.0
  %5511 = vmatpush1.msra.mxu0 0.0
  %5512 = vmatprep.subr.mxu0 0.0
  %5513 = vmatpush1.msra.mxu0 0.0
  %5514 = vmatprep.subr.mxu0 0.0
  %5515 = vmatpush1.msra.mxu0 0.0
  %5516 = vmatprep.subr.mxu0 0.0
  %5517 = vmatpush1.msra.mxu0 0.0
  %5518 = vmatprep.subr.mxu0 0.0
  %5519 = vmatpush1.msra.mxu0 0.0
  %5520 = vmatprep.subr.mxu0 0.0
  %5521 = vmatpush1.msra.mxu0 0.0
  %5522 = vmatprep.subr.mxu0 0.0
  %5523 = vmatpush1.msra.mxu0 0.0
  %5524 = vmatprep.subr.mxu0 0.0
  %5525 = vmatpush1.msra.mxu0 0.0
  %5526 = vmatprep.subr.mxu0 0.0
  %5527 = vmatpush1.msra.mxu0 0.0
  %5528 = vmatprep.subr.mxu0 0.0
  %5529 = vmatpush1.msra.mxu0 0.0
  %5530 = vmatprep.subr.mxu0 0.0
  %5531 = vmatpush1.msra.mxu0 0.0
  %5532 = vmatprep.subr.mxu0 0.0
  %5533 = vmatpush1.msra.mxu0 0.0
  %5534 = vmatprep.subr.mxu0 0.0
  %5535 = vmatpush1.msra.mxu0 0.0
  %5536 = vmatprep.subr.mxu0 0.0
  %5537 = vmatpush1.msra.mxu0 0.0
  %5538 = vmatprep.subr.mxu0 0.0
  %5539 = vmatpush1.msra.mxu0 0.0
  %5540 = vmatprep.subr.mxu0 0.0
  %5541 = vmatpush1.msra.mxu0 0.0
  %5542 = vmatprep.subr.mxu0 0.0
  %5543 = vmatpush1.msra.mxu0 0.0
  %5544 = vmatprep.mubr.f32.mxu0 0.0
  %5545 = vmatmul.mubr.f32.gmra.mrb[0].mxu0 %v5478
  %v5546 = vpop.f32.mrb[0].mxu0
  %v5547 = vadd.f32 %v5475, %v5546
  %v5548 = vpop.f32.mrb[0].mxu0
  %5549 = vdwg.mxu0
  %vm5550 = vcmask 31744
  %5551 = vst.msk [vmem:[%s15] sm:$0xff] %vm5550, %v5547
  // Predicated region
  $region62: #{ccmtl_forward.3} parent=0 // pred_check
    _
  $region63: #{ccmtl_forward.3} parent=0 // pred_check_branch
    %5553 = sbr.rel (0) target = $region65
  $region64: #{ccmtl_forward.3} parent=0 // pred_region
    _
  $region65: #{ccmtl_forward.3} parent=0 // pred_fallthru
    _
  // Predicated region
  $region66: #{ccmtl_forward.3} parent=0 // pred_check
    _
  $region67: #{ccmtl_forward.3} parent=0 // pred_check_branch
    %5555 = sbr.rel (0) target = $region69
  $region68: #{ccmtl_forward.3} parent=0 // pred_region
    _
  $region69: #{ccmtl_forward.3} parent=0 // pred_fallthru
    _

</llo_original>
